<compile_context>
chip_gen: v7x
topology: tpu7x:2x2x1
jax: 0.10.0
libtpu: 0.0.40
codegen_flags: <defaults>
</compile_context>

<pallas_src>
import jax
import jax.numpy as jnp
import numpy as np
from jax import lax
from jax.experimental import pallas as pl
from jax.experimental.pallas import tpu as pltpu

MINI_BATCH = 8  # small test batch; the wrapper pads any batch to a multiple of 8


# ----------------------------- Pallas kernel --------------------------------

def _full_spec(shape):
    # whole-array block, grid=(1,)
    return pl.BlockSpec(shape, lambda *_: (0,) * len(shape))


def _convnet2_ws_kernel(x_ref, w1t_ref, b1_ref, w2t_ref, b2_ref,
                        wfc1_ref, bfc1_ref, wfc2_ref, bfc2_ref,
                        o_ref, a1_ref):
    """Fused ConvNet2_ws forward, both weight-sharing branches at once.

    x_ref    : (14, N2, 128) bf16   input, [h, n, w] with n = branch*B + b,
                                    lane (w) zero-padded 14 -> 128
    w1t_ref  : (384, 384)   bf16    conv1 Toeplitz weight, rows kh*128+w_in,
                                    cols w*32+c
    b1_ref   : (2, 384)     f32     conv1 bias per branch, tiled over w
                                    (branch 1 = zeros: F.conv2d w/o bias)
    w2t_ref  : (1920, 256)  bf16    conv2 Toeplitz weight, rows kh*384+w_in*32+cin,
                                    cols ws*128+wq*32+cout (wo = 2*wq+ws)
    b2_ref   : (2, 256)     f32     conv2 bias per branch, tiled over wo
    wfc1_ref : (512, 100)   bf16    fc1 weights, rows ph*128+pw*32+c,
                                    cols 0:50 branch-0 / 50:100 branch-1
    a1_ref   : VMEM scratch (12, N2, 384) bf16  conv1 activations [h, n, w*32+c]
    """
    B = o_ref.shape[0]
    N2 = 2 * B

    # ---- conv1: 3 lane-aligned slab concats -> one (12*N2,384)@(384,384) ----
    p1 = jnp.concatenate([x_ref[kh:kh + 12] for kh in range(3)], axis=-1)
    a1 = jnp.dot(p1.reshape(12 * N2, 3 * 128), w1t_ref[...],
                 preferred_element_type=jnp.float32)            # (12*N2, 384)
    a1 = a1.reshape(12, 2, B, 384) + b1_ref[...][None, :, None, :]
    a1 = jnp.maximum(a1, 0.0)                                   # ReLU
    a1_ref[...] = a1.reshape(12, N2, 384).astype(jnp.bfloat16)  # VMEM resident

    # ---- conv2: 5 lane-aligned slab concats -> one (8*N2,1920)@(1920,256) ---
    p2 = jnp.concatenate([a1_ref[kh:kh + 8] for kh in range(5)], axis=-1)
    c2 = jnp.dot(p2.reshape(8 * N2, 5 * 384), w2t_ref[...],
                 preferred_element_type=jnp.float32)            # (8*N2, 256)
    c2 = c2.reshape(8, 2, B, 256) + b2_ref[...][None, :, None, :]
    c2 = jnp.maximum(c2, 0.0).reshape(8, N2, 256)               # ReLU

    # ---- 2x2 max-pool (stride 2): w-pairs are a 128-aligned lane split
    # (thanks to the (ws, wq, cout) weight column order), h-pairs are adjacent
    # leading-dim rows.
    pw = jnp.maximum(c2[:, :, 0:128], c2[:, :, 128:256])        # (8, N2, 128)
    pw = pw.reshape(4, 2, N2, 128)
    pooled = jnp.maximum(pw[:, 0], pw[:, 1])                    # (4, N2, 128)

    # ---- fc1: one (N2,512)@(512,100) matmul; branch-0 rows use cols 0:50,
    # branch-1 rows use cols 50:100, summed per sample (== torch.cat + Linear).
    feat = jnp.concatenate([pooled[ph] for ph in range(4)],
                           axis=-1).astype(jnp.bfloat16)        # (N2, 512)
    res = jnp.dot(feat, wfc1_ref[...], preferred_element_type=jnp.float32)
    h = res[0:B, 0:50] + res[B:N2, 50:100] + bfc1_ref[...]
    h = 1.0 / (1.0 + jnp.exp(-h))                               # exact sigmoid

    # ---- fc2 head (tiny, kept f32) ------------------------------------------
    out = jnp.dot(h, wfc2_ref[...], preferred_element_type=jnp.float32)
    o_ref[...] = out + bfc2_ref[...]


# ------------------------------- JAX glue ------------------------------------

def prepare_params(params):
    """One-time re-layout of the PyTorch OIHW / Linear parameters (host-side)."""
    w1 = np.asarray(params["conv1_w"], np.float32)   # (32, 1, 3, 3)
    w2 = np.asarray(params["conv2_w"], np.float32)   # (32, 32, 5, 5)
    b1 = np.asarray(params["conv1_b"], np.float32)   # (32,)
    b2 = np.asarray(params["conv2_b"], np.float32)   # (32,)
    f1w = np.asarray(params["fc1_w"], np.float32)    # (50, 1024)
    f1b = np.asarray(params["fc1_b"], np.float32)    # (50,)
    f2w = np.asarray(params["fc2_w"], np.float32)    # (2, 50)
    f2b = np.asarray(params["fc2_b"], np.float32)    # (2,)

    # conv1 Toeplitz: rows kh*128 + w_in (w lane-padded to 128), cols w*32 + c.
    w1t = np.zeros((3 * 128, 12 * 32), np.float32)
    for kh in range(3):
        for wo in range(12):
            for kw in range(3):
                w1t[kh * 128 + wo + kw, wo * 32:(wo + 1) * 32] = w1[:, 0, kh, kw]

    # conv2 Toeplitz: rows kh*384 + w_in*32 + cin, cols ws*128 + wq*32 + cout
    # with w_out = 2*wq + ws so the w-direction of the max-pool is a clean
    # 128-aligned lane split in the kernel.
    w2t = np.zeros((5 * 384, 8 * 32), np.float32)
    for kh in range(5):
        for wq in range(4):
            for ws in range(2):
                wo = 2 * wq + ws
                for kw in range(5):
                    w_in = wo + kw
                    w2t[kh * 384 + w_in * 32: kh * 384 + (w_in + 1) * 32,
                        ws * 128 + wq * 32: ws * 128 + (wq + 1) * 32] = \
                        w2[:, :, kh, kw].T            # (cin, cout)

    # Per-branch conv biases tiled over the lane-folded w dimension.
    # Branch 1 has no bias (F.conv2d(x2, weight) in the PyTorch module).
    b1_lane = np.stack([np.tile(b1, 12), np.zeros(12 * 32, np.float32)])
    b2_lane = np.stack([np.tile(b2, 8), np.zeros(8 * 32, np.float32)])

    # fc1: kernel features are ordered k = ph*128 + pw*32 + c per branch;
    # PyTorch flattens (C, H, W) channel-major, so permute accordingly.
    f1 = f1w.reshape(50, 2, 32, 4, 4)                            # (j, br, c, ph, pw)
    f1 = np.transpose(f1, (1, 3, 4, 2, 0)).reshape(2, 512, 50)   # (br, k, j)
    wfc1 = np.concatenate([f1[0], f1[1]], axis=1)                # (512, 100)

    bf16 = jnp.bfloat16
    return {
        "w1t": jnp.asarray(w1t, bf16),
        "b1": jnp.asarray(b1_lane),
        "w2t": jnp.asarray(w2t, bf16),
        "b2": jnp.asarray(b2_lane),
        "wfc1": jnp.asarray(wfc1, bf16),
        "bfc1": jnp.asarray(f1b.reshape(1, 50)),
        "wfc2": jnp.asarray(f2w.T.copy()),            # (50, 2) f32
        "bfc2": jnp.asarray(f2b.reshape(1, 2)),
    }


def convnet2_ws_forward(x, prep):
    """x: (B, 2, 14, 14) float32 NCHW (same as the PyTorch module)."""
    B0 = x.shape[0]
    B = max(8, ((B0 + 7) // 8) * 8)      # pad batch so B and N2=2B are 8-aligned
    if B != B0:
        x = jnp.pad(x, ((0, B - B0), (0, 0), (0, 0), (0, 0)))
    N2 = 2 * B

    # NCHW -> (h, n, w) with n = branch*B + b; zero-pad the w lane dim to 128
    # so all in-kernel sliding-window concats are 128-lane aligned.
    xk = jnp.transpose(x, (2, 1, 0, 3)).reshape(14, N2, 14)
    xk = jnp.pad(xk, ((0, 0), (0, 0), (0, 128 - 14))).astype(jnp.bfloat16)

    out = pl.pallas_call(
        _convnet2_ws_kernel,
        out_shape=jax.ShapeDtypeStruct((B, 2), jnp.float32),
        grid=(1,),
        in_specs=[_full_spec((14, N2, 128)),
                  _full_spec((3 * 128, 384)),
                  _full_spec((2, 384)),
                  _full_spec((5 * 384, 256)),
                  _full_spec((2, 256)),
                  _full_spec((512, 100)),
                  _full_spec((1, 50)),
                  _full_spec((50, 2)),
                  _full_spec((1, 2))],
        out_specs=_full_spec((B, 2)),
        scratch_shapes=[pltpu.VMEM((12, N2, 384), jnp.bfloat16)],
        compiler_params=pltpu.CompilerParams(
            dimension_semantics=("arbitrary",),
            vmem_limit_bytes=32 * 1024 * 1024),
    )(xk, prep["w1t"], prep["b1"], prep["w2t"], prep["b2"],
      prep["wfc1"], prep["bfc1"], prep["wfc2"], prep["bfc2"])
    return out[:B0]


# --------------------------- reference (pure JAX) ----------------------------

def reference_forward(x, params):
    hi = lax.Precision.HIGHEST

    def conv(inp, w, b=None):
        out = lax.conv_general_dilated(
            inp, w, (1, 1), "VALID",
            dimension_numbers=("NCHW", "OIHW", "NCHW"), precision=hi)
        if b is not None:
            out = out + b[None, :, None, None]
        return out

    def mp(t):  # 2x2 max pool, stride 2
        B, C, H, W = t.shape
        return t.reshape(B, C, H // 2, 2, W // 2, 2).max(axis=(3, 5))

    B = x.shape[0]
    x1, x2 = x[:, 0:1], x[:, 1:2]
    a1 = jax.nn.relu(conv(x1, params["conv1_w"], params["conv1_b"]))
    a2 = jax.nn.relu(conv(x2, params["conv1_w"]))
    c1 = jax.nn.relu(conv(a1, params["conv2_w"], params["conv2_b"]))
    c2 = jax.nn.relu(conv(a2, params["conv2_w"]))
    f = jnp.concatenate([mp(c1).reshape(B, -1), mp(c2).reshape(B, -1)], axis=1)
    h = jax.nn.sigmoid(jnp.dot(f, params["fc1_w"].T, precision=hi) + params["fc1_b"])
    return jnp.dot(h, params["fc2_w"].T, precision=hi) + params["fc2_b"]


# --------------------------------- params ------------------------------------

def init_params(key):
    ks = jax.random.split(key, 8)

    def init(k, shape, scale):
        return scale * jax.random.normal(k, shape, dtype=jnp.float32)

    return {
        "conv1_w": init(ks[0], (32, 1, 3, 3), 0.3),
        "conv1_b": init(ks[1], (32,), 0.1),
        "conv2_w": init(ks[2], (32, 32, 5, 5), 0.05),
        "conv2_b": init(ks[3], (32,), 0.1),
        "fc1_w": init(ks[4], (50, 32 * 32), 0.03),
        "fc1_b": init(ks[5], (50,), 0.1),
        "fc2_w": init(ks[6], (2, 50), 0.1),
        "fc2_b": init(ks[7], (2,), 0.1),
    }


if __name__ == "__main__":
    key = jax.random.PRNGKey(0)
    kx, kp = jax.random.split(key)
    x = jax.random.normal(kx, (MINI_BATCH, 2, 14, 14), dtype=jnp.float32)
    params = init_params(kp)
    prep = prepare_params(params)          # hoisted, one-time parameter prep

    fwd = jax.jit(convnet2_ws_forward)
    out = jax.block_until_ready(fwd(x, prep))
    ref = jax.block_until_ready(reference_forward(x, params))

    assert out.shape == (MINI_BATCH, 2), out.shape
    err = float(jnp.max(jnp.abs(out - ref)))
    assert jnp.allclose(out, ref, rtol=2e-2, atol=2e-2), err
    print("KERNEL_OK")
</pallas_src>

<mosaic_0001>
module attributes {stable_mosaic.version = 11 : i64} {
  func.func @_convnet2_ws_kernel(%arg0: i32, %arg1: memref<14x16x128xbf16, #tpu.memory_space<vmem>>, %arg2: memref<384x384xbf16, #tpu.memory_space<vmem>>, %arg3: memref<2x384xf32, #tpu.memory_space<vmem>>, %arg4: memref<1920x256xbf16, #tpu.memory_space<vmem>>, %arg5: memref<2x256xf32, #tpu.memory_space<vmem>>, %arg6: memref<512x100xbf16, #tpu.memory_space<vmem>>, %arg7: memref<1x50xf32, #tpu.memory_space<vmem>>, %arg8: memref<50x2xf32, #tpu.memory_space<vmem>>, %arg9: memref<1x2xf32, #tpu.memory_space<vmem>>, %arg10: memref<8x2xf32, #tpu.memory_space<vmem>>, %arg11: memref<12x16x384xbf16, #tpu.memory_space<vmem>>) attributes {dimension_semantics = [#tpu.dimension_semantics<arbitrary>], iteration_bounds = array<i64: 1>, scalar_prefetch = 0 : i64, scratch_operands = 1 : i64, tpu.core_type = #tpu.core_type<tc>, window_params = [{pipeline_mode = #tpu.pipeline_mode<synchronous>, transform_indices = @transform_0, window_bounds = array<i64: 14, 16, 128>}, {pipeline_mode = #tpu.pipeline_mode<synchronous>, transform_indices = @transform_1, window_bounds = array<i64: 384, 384>}, {pipeline_mode = #tpu.pipeline_mode<synchronous>, transform_indices = @transform_2, window_bounds = array<i64: 2, 384>}, {pipeline_mode = #tpu.pipeline_mode<synchronous>, transform_indices = @transform_3, window_bounds = array<i64: 1920, 256>}, {pipeline_mode = #tpu.pipeline_mode<synchronous>, transform_indices = @transform_4, window_bounds = array<i64: 2, 256>}, {pipeline_mode = #tpu.pipeline_mode<synchronous>, transform_indices = @transform_5, window_bounds = array<i64: 512, 100>}, {pipeline_mode = #tpu.pipeline_mode<synchronous>, transform_indices = @transform_6, window_bounds = array<i64: 1, 50>}, {pipeline_mode = #tpu.pipeline_mode<synchronous>, transform_indices = @transform_7, window_bounds = array<i64: 50, 2>}, {pipeline_mode = #tpu.pipeline_mode<synchronous>, transform_indices = @transform_8, window_bounds = array<i64: 1, 2>}, {pipeline_mode = #tpu.pipeline_mode<synchronous>, transform_indices = @transform_9, window_bounds = array<i64: 8, 2>}]} {
    %c0 = arith.constant 0 : index
    %c0_0 = arith.constant 0 : index
    %c0_1 = arith.constant 0 : index
    %0 = vector.load %arg1[%c0, %c0_0, %c0_1] : memref<14x16x128xbf16, #tpu.memory_space<vmem>>, vector<12x16x128xbf16>
    %c1 = arith.constant 1 : index
    %c0_2 = arith.constant 0 : index
    %c0_3 = arith.constant 0 : index
    %1 = vector.load %arg1[%c1, %c0_2, %c0_3] : memref<14x16x128xbf16, #tpu.memory_space<vmem>>, vector<12x16x128xbf16>
    %c2 = arith.constant 2 : index
    %c0_4 = arith.constant 0 : index
    %c0_5 = arith.constant 0 : index
    %2 = vector.load %arg1[%c2, %c0_4, %c0_5] : memref<14x16x128xbf16, #tpu.memory_space<vmem>>, vector<12x16x128xbf16>
    %3 = tpu.concatenate %0, %1, %2 in 2 : vector<12x16x128xbf16>, vector<12x16x128xbf16>, vector<12x16x128xbf16> -> vector<12x16x384xbf16>
    %4 = vector.shape_cast %3 : vector<12x16x384xbf16> to vector<192x384xbf16>
    %c0_6 = arith.constant 0 : index
    %c0_7 = arith.constant 0 : index
    %5 = vector.load %arg2[%c0_6, %c0_7] : memref<384x384xbf16, #tpu.memory_space<vmem>>, vector<384x384xbf16>
    %cst = arith.constant dense<0.000000e+00> : vector<192x384xf32>
    %6 = tpu.matmul %4, %5, %cst {dimension_numbers = #tpu.dot_dimension_numbers<[1], [0], [0], [1], [0, 0, 1, 1], [], []>} : vector<192x384xbf16>, vector<384x384xbf16>, vector<192x384xf32> -> vector<192x384xf32>
    %7 = vector.shape_cast %6 : vector<192x384xf32> to vector<12x2x8x384xf32>
    %c0_8 = arith.constant 0 : index
    %c0_9 = arith.constant 0 : index
    %8 = vector.load %arg3[%c0_8, %c0_9] : memref<2x384xf32, #tpu.memory_space<vmem>>, vector<2x384xf32>
    %9 = vector.shape_cast %8 : vector<2x384xf32> to vector<1x2x1x384xf32>
    %10 = vector.broadcast %9 : vector<1x2x1x384xf32> to vector<12x2x8x384xf32>
    %11 = arith.addf %7, %10 : vector<12x2x8x384xf32>
    %cst_10 = arith.constant 0.000000e+00 : f32
    %12 = vector.broadcast %cst_10 : f32 to vector<12x2x8x384xf32>
    %13 = arith.maximumf %11, %12 : vector<12x2x8x384xf32>
    %14 = vector.shape_cast %13 : vector<12x2x8x384xf32> to vector<12x16x384xf32>
    %15 = arith.truncf %14 : vector<12x16x384xf32> to vector<12x16x384xbf16>
    %c0_11 = arith.constant 0 : index
    %c0_12 = arith.constant 0 : index
    %c0_13 = arith.constant 0 : index
    %16 = vector.load %arg11[%c0_11, %c0_12, %c0_13] : memref<12x16x384xbf16, #tpu.memory_space<vmem>>, vector<12x16x384xbf16>
    tpu.vector_store %arg11[%c0_11, %c0_12, %c0_13], %15 {strides = array<i32>} : memref<12x16x384xbf16, #tpu.memory_space<vmem>>, vector<12x16x384xbf16>,
    %c0_14 = arith.constant 0 : index
    %c0_15 = arith.constant 0 : index
    %c0_16 = arith.constant 0 : index
    %17 = vector.load %arg11[%c0_14, %c0_15, %c0_16] : memref<12x16x384xbf16, #tpu.memory_space<vmem>>, vector<8x16x384xbf16>
    %c1_17 = arith.constant 1 : index
    %c0_18 = arith.constant 0 : index
    %c0_19 = arith.constant 0 : index
    %18 = vector.load %arg11[%c1_17, %c0_18, %c0_19] : memref<12x16x384xbf16, #tpu.memory_space<vmem>>, vector<8x16x384xbf16>
    %c2_20 = arith.constant 2 : index
    %c0_21 = arith.constant 0 : index
    %c0_22 = arith.constant 0 : index
    %19 = vector.load %arg11[%c2_20, %c0_21, %c0_22] : memref<12x16x384xbf16, #tpu.memory_space<vmem>>, vector<8x16x384xbf16>
    %c3 = arith.constant 3 : index
    %c0_23 = arith.constant 0 : index
    %c0_24 = arith.constant 0 : index
    %20 = vector.load %arg11[%c3, %c0_23, %c0_24] : memref<12x16x384xbf16, #tpu.memory_space<vmem>>, vector<8x16x384xbf16>
    %c4 = arith.constant 4 : index
    %c0_25 = arith.constant 0 : index
    %c0_26 = arith.constant 0 : index
    %21 = vector.load %arg11[%c4, %c0_25, %c0_26] : memref<12x16x384xbf16, #tpu.memory_space<vmem>>, vector<8x16x384xbf16>
    %22 = tpu.concatenate %17, %18, %19, %20, %21 in 2 : vector<8x16x384xbf16>, vector<8x16x384xbf16>, vector<8x16x384xbf16>, vector<8x16x384xbf16>, vector<8x16x384xbf16> -> vector<8x16x1920xbf16>
    %23 = vector.shape_cast %22 : vector<8x16x1920xbf16> to vector<128x1920xbf16>
    %c0_27 = arith.constant 0 : index
    %c0_28 = arith.constant 0 : index
    %24 = vector.load %arg4[%c0_27, %c0_28] : memref<1920x256xbf16, #tpu.memory_space<vmem>>, vector<1920x256xbf16>
    %cst_29 = arith.constant dense<0.000000e+00> : vector<128x256xf32>
    %25 = tpu.matmul %23, %24, %cst_29 {dimension_numbers = #tpu.dot_dimension_numbers<[1], [0], [0], [1], [0, 0, 1, 1], [], []>} : vector<128x1920xbf16>, vector<1920x256xbf16>, vector<128x256xf32> -> vector<128x256xf32>
    %26 = vector.shape_cast %25 : vector<128x256xf32> to vector<8x2x8x256xf32>
    %c0_30 = arith.constant 0 : index
    %c0_31 = arith.constant 0 : index
    %27 = vector.load %arg5[%c0_30, %c0_31] : memref<2x256xf32, #tpu.memory_space<vmem>>, vector<2x256xf32>
    %28 = vector.shape_cast %27 : vector<2x256xf32> to vector<1x2x1x256xf32>
    %29 = vector.broadcast %28 : vector<1x2x1x256xf32> to vector<8x2x8x256xf32>
    %30 = arith.addf %26, %29 : vector<8x2x8x256xf32>
    %cst_32 = arith.constant 0.000000e+00 : f32
    %31 = vector.broadcast %cst_32 : f32 to vector<8x2x8x256xf32>
    %32 = arith.maximumf %30, %31 : vector<8x2x8x256xf32>
    %33 = vector.shape_cast %32 : vector<8x2x8x256xf32> to vector<8x16x256xf32>
    %34 = vector.extract_strided_slice %33 {offsets = [0, 0, 0], sizes = [8, 16, 128], strides = [1, 1, 1]} : vector<8x16x256xf32> to vector<8x16x128xf32>
    %35 = vector.extract_strided_slice %33 {offsets = [0, 0, 128], sizes = [8, 16, 128], strides = [1, 1, 1]} : vector<8x16x256xf32> to vector<8x16x128xf32>
    %36 = arith.maximumf %34, %35 : vector<8x16x128xf32>
    %37 = vector.shape_cast %36 : vector<8x16x128xf32> to vector<4x2x16x128xf32>
    %38 = vector.extract_strided_slice %37 {offsets = [0, 0, 0, 0], sizes = [4, 1, 16, 128], strides = [1, 1, 1, 1]} : vector<4x2x16x128xf32> to vector<4x1x16x128xf32>
    %39 = vector.shape_cast %38 : vector<4x1x16x128xf32> to vector<4x16x128xf32>
    %40 = vector.extract_strided_slice %37 {offsets = [0, 1, 0, 0], sizes = [4, 1, 16, 128], strides = [1, 1, 1, 1]} : vector<4x2x16x128xf32> to vector<4x1x16x128xf32>
    %41 = vector.shape_cast %40 : vector<4x1x16x128xf32> to vector<4x16x128xf32>
    %42 = arith.maximumf %39, %41 : vector<4x16x128xf32>
    %43 = vector.extract_strided_slice %42 {offsets = [0, 0, 0], sizes = [1, 16, 128], strides = [1, 1, 1]} : vector<4x16x128xf32> to vector<1x16x128xf32>
    %44 = vector.shape_cast %43 : vector<1x16x128xf32> to vector<16x128xf32>
    %45 = vector.extract_strided_slice %42 {offsets = [1, 0, 0], sizes = [1, 16, 128], strides = [1, 1, 1]} : vector<4x16x128xf32> to vector<1x16x128xf32>
    %46 = vector.shape_cast %45 : vector<1x16x128xf32> to vector<16x128xf32>
    %47 = vector.extract_strided_slice %42 {offsets = [2, 0, 0], sizes = [1, 16, 128], strides = [1, 1, 1]} : vector<4x16x128xf32> to vector<1x16x128xf32>
    %48 = vector.shape_cast %47 : vector<1x16x128xf32> to vector<16x128xf32>
    %49 = vector.extract_strided_slice %42 {offsets = [3, 0, 0], sizes = [1, 16, 128], strides = [1, 1, 1]} : vector<4x16x128xf32> to vector<1x16x128xf32>
    %50 = vector.shape_cast %49 : vector<1x16x128xf32> to vector<16x128xf32>
    %51 = tpu.concatenate %44, %46, %48, %50 in 1 : vector<16x128xf32>, vector<16x128xf32>, vector<16x128xf32>, vector<16x128xf32> -> vector<16x512xf32>
    %52 = arith.truncf %51 : vector<16x512xf32> to vector<16x512xbf16>
    %c0_33 = arith.constant 0 : index
    %c0_34 = arith.constant 0 : index
    %53 = vector.load %arg6[%c0_33, %c0_34] : memref<512x100xbf16, #tpu.memory_space<vmem>>, vector<512x100xbf16>
    %cst_35 = arith.constant dense<0.000000e+00> : vector<16x100xf32>
    %54 = tpu.matmul %52, %53, %cst_35 {dimension_numbers = #tpu.dot_dimension_numbers<[1], [0], [0], [1], [0, 0, 1, 1], [], []>} : vector<16x512xbf16>, vector<512x100xbf16>, vector<16x100xf32> -> vector<16x100xf32>
    %55 = vector.extract_strided_slice %54 {offsets = [0, 0], sizes = [8, 50], strides = [1, 1]} : vector<16x100xf32> to vector<8x50xf32>
    %56 = vector.extract_strided_slice %54 {offsets = [8, 50], sizes = [8, 50], strides = [1, 1]} : vector<16x100xf32> to vector<8x50xf32>
    %57 = arith.addf %55, %56 : vector<8x50xf32>
    %c0_36 = arith.constant 0 : index
    %c0_37 = arith.constant 0 : index
    %58 = vector.load %arg7[%c0_36, %c0_37] : memref<1x50xf32, #tpu.memory_space<vmem>>, vector<1x50xf32>
    %59 = vector.broadcast %58 : vector<1x50xf32> to vector<8x50xf32>
    %60 = arith.addf %57, %59 : vector<8x50xf32>
    %cst_38 = arith.constant 0.000000e+00 : f32
    %61 = vector.broadcast %cst_38 : f32 to vector<8x50xf32>
    %62 = arith.subf %61, %60 : vector<8x50xf32>
    %63 = math.exp %62 : vector<8x50xf32>
    %cst_39 = arith.constant 1.000000e+00 : f32
    %64 = vector.broadcast %cst_39 : f32 to vector<8x50xf32>
    %65 = arith.addf %64, %63 : vector<8x50xf32>
    %cst_40 = arith.constant 1.000000e+00 : f32
    %66 = vector.broadcast %cst_40 : f32 to vector<8x50xf32>
    %67 = arith.divf %66, %65 : vector<8x50xf32>
    %c0_41 = arith.constant 0 : index
    %c0_42 = arith.constant 0 : index
    %68 = vector.load %arg8[%c0_41, %c0_42] : memref<50x2xf32, #tpu.memory_space<vmem>>, vector<50x2xf32>
    %cst_43 = arith.constant dense<0.000000e+00> : vector<8x2xf32>
    %69 = tpu.matmul %67, %68, %cst_43 {dimension_numbers = #tpu.dot_dimension_numbers<[1], [0], [0], [1], [0, 0, 1, 1], [], []>} : vector<8x50xf32>, vector<50x2xf32>, vector<8x2xf32> -> vector<8x2xf32>
    %c0_44 = arith.constant 0 : index
    %c0_45 = arith.constant 0 : index
    %70 = vector.load %arg9[%c0_44, %c0_45] : memref<1x2xf32, #tpu.memory_space<vmem>>, vector<1x2xf32>
    %71 = vector.broadcast %70 : vector<1x2xf32> to vector<8x2xf32>
    %72 = arith.addf %69, %71 : vector<8x2xf32>
    %c0_46 = arith.constant 0 : index
    %c0_47 = arith.constant 0 : index
    %73 = vector.load %arg10[%c0_46, %c0_47] : memref<8x2xf32, #tpu.memory_space<vmem>>, vector<8x2xf32>
    tpu.vector_store %arg10[%c0_46, %c0_47], %72 {strides = array<i32>} : memref<8x2xf32, #tpu.memory_space<vmem>>, vector<8x2xf32>,
    return
  }
  func.func @transform_0(%arg0: i32) -> (i32, i32, i32) {
    %c0_i32 = arith.constant 0 : i32
    %c0_i32_0 = arith.constant 0 : i32
    %c0_i32_1 = arith.constant 0 : i32
    %c0_i32_2 = arith.constant 0 : i32
    return %c0_i32, %c0_i32_0, %c0_i32_1 : i32, i32, i32
  }
  func.func @transform_1(%arg0: i32) -> (i32, i32) {
    %c0_i32 = arith.constant 0 : i32
    %c0_i32_0 = arith.constant 0 : i32
    %c0_i32_1 = arith.constant 0 : i32
    return %c0_i32, %c0_i32_0 : i32, i32
  }
  func.func @transform_2(%arg0: i32) -> (i32, i32) {
    %c0_i32 = arith.constant 0 : i32
    %c0_i32_0 = arith.constant 0 : i32
    %c0_i32_1 = arith.constant 0 : i32
    return %c0_i32, %c0_i32_0 : i32, i32
  }
  func.func @transform_3(%arg0: i32) -> (i32, i32) {
    %c0_i32 = arith.constant 0 : i32
    %c0_i32_0 = arith.constant 0 : i32
    %c0_i32_1 = arith.constant 0 : i32
    return %c0_i32, %c0_i32_0 : i32, i32
  }
  func.func @transform_4(%arg0: i32) -> (i32, i32) {
    %c0_i32 = arith.constant 0 : i32
    %c0_i32_0 = arith.constant 0 : i32
    %c0_i32_1 = arith.constant 0 : i32
    return %c0_i32, %c0_i32_0 : i32, i32
  }
  func.func @transform_5(%arg0: i32) -> (i32, i32) {
    %c0_i32 = arith.constant 0 : i32
    %c0_i32_0 = arith.constant 0 : i32
    %c0_i32_1 = arith.constant 0 : i32
    return %c0_i32, %c0_i32_0 : i32, i32
  }
  func.func @transform_6(%arg0: i32) -> (i32, i32) {
    %c0_i32 = arith.constant 0 : i32
    %c0_i32_0 = arith.constant 0 : i32
    %c0_i32_1 = arith.constant 0 : i32
    return %c0_i32, %c0_i32_0 : i32, i32
  }
  func.func @transform_7(%arg0: i32) -> (i32, i32) {
    %c0_i32 = arith.constant 0 : i32
    %c0_i32_0 = arith.constant 0 : i32
    %c0_i32_1 = arith.constant 0 : i32
    return %c0_i32, %c0_i32_0 : i32, i32
  }
  func.func @transform_8(%arg0: i32) -> (i32, i32) {
    %c0_i32 = arith.constant 0 : i32
    %c0_i32_0 = arith.constant 0 : i32
    %c0_i32_1 = arith.constant 0 : i32
    return %c0_i32, %c0_i32_0 : i32, i32
  }
  func.func @transform_9(%arg0: i32) -> (i32, i32) {
    %c0_i32 = arith.constant 0 : i32
    %c0_i32_0 = arith.constant 0 : i32
    %c0_i32_1 = arith.constant 0 : i32
    return %c0_i32, %c0_i32_0 : i32, i32
  }
}

</mosaic_0001>

<llo_original>
// kernel: convnet2_ws_forward.1
$region0: #{convnet2_ws_forward.1}
  #allocation0 [shape = 'u32[]', space=smem, size = 0x4, offset = 0x4, fixed_abs, tag = 'smem constant byte address 0x4 - core index']
  #allocation1 [shape = 'u32[144,128]{1,0:T(1,128)}', space=vmem, size = 0x12000, scoped, tag = 'internal scratch']
  #allocation2 [shape = 'bf16[12,16,384]{2,1,0:T(16,128)(2,1)}', space=vmem, size = 0x24000, scoped, tag = 'scratch operand']
  %s0 = inlined_call_operand.vmem [shape: bf16[14,16,128], index: 0, kind: input, shape index: {}]
  %s1 = inlined_call_operand.vmem [shape: bf16[384,384], index: 1, kind: input, shape index: {}]
  %s2 = inlined_call_operand.vmem [shape: f32[2,384], index: 2, kind: input, shape index: {}]
  %s3 = inlined_call_operand.hbm [shape: bf16[1920,256], index: 3, kind: input, shape index: {}]
  %s4 = inlined_call_operand.vmem [shape: f32[2,256], index: 4, kind: input, shape index: {}]
  %s5 = inlined_call_operand.vmem [shape: bf16[512,100], index: 5, kind: input, shape index: {}]
  %s6 = inlined_call_operand.vmem [shape: f32[1,50], index: 6, kind: input, shape index: {}]
  %s7 = inlined_call_operand.vmem [shape: f32[50,2], index: 7, kind: input, shape index: {}]
  %s8 = inlined_call_operand.vmem [shape: f32[1,2], index: 8, kind: input, shape index: {}]
  %s9 = inlined_call_operand.vmem [shape: f32[8,2], index: 9, kind: output, shape index: {}]
  %s10 = sld [smem:[#allocation0]]
  $region50: #{convnet2_ws_forward.1} parent=0
    _
  %s12 = ssub.s32 1, %s10
  %s13 = scalar_select 0, %s12, %s10
  $region1: #{convnet2_ws_forward.1} parent=0
    #allocation3 [shape = 'u8[983040]{0}', space=vmem, size = 0xf0000, scoped, tag = 'input window, operand 3, single buffered']
    #allocation4 [shape = 's32[1]{0}', space=sflag, size = 0x4, scoped, tag = 'scoped memory for convnet2_ws_forward.1']
    %14 = vsyncpa [#allocation4], 0
    // Predicated region
    $region2: #{convnet2_ws_forward.1} parent=1 // pred_check
      _
    $region3: #{convnet2_ws_forward.1} parent=1 // pred_check_branch
      %16 = sbr.rel (0) target = $region5
    $region4: #{convnet2_ws_forward.1} parent=1 // pred_region
      _
    $region5: #{convnet2_ws_forward.1} parent=1 // pred_fallthru
      _
    // Predicated region
    $region6: #{convnet2_ws_forward.1} parent=1 // pred_check
      _
    $region7: #{convnet2_ws_forward.1} parent=1 // pred_check_branch
      %18 = sbr.rel (0) target = $region9
    $region8: #{convnet2_ws_forward.1} parent=1 // pred_region
      _
    $region9: #{convnet2_ws_forward.1} parent=1 // pred_fallthru
      _
    // Predicated region
    $region10: #{convnet2_ws_forward.1} parent=1 // pred_check
      _
    $region11: #{convnet2_ws_forward.1} parent=1 // pred_check_branch
      %20 = sbr.rel (0) target = $region13
    $region12: #{convnet2_ws_forward.1} parent=1 // pred_region
      _
    $region13: #{convnet2_ws_forward.1} parent=1 // pred_fallthru
      _
    // Predicated region
    $region14: #{convnet2_ws_forward.1} parent=1 // pred_check
      _
    $region15: #{convnet2_ws_forward.1} parent=1 // pred_check_branch
      %22 = sbr.rel (0) target = $region17
    $region16: #{convnet2_ws_forward.1} parent=1 // pred_region
      %s24 = ssub.s32 30720, 30720
      %25 = vsyncadd [#allocation4], %s24
      %s26 = sshll.u32 [#allocation3], 4
      %s27 = int_to_ptr.vmem [resolvable:$true] %s26
      %32 = dma.hbm_to_vmem [thread:$0]  %s3, 30720, %s27, [#allocation4], 128, 128, 8
    $region17: #{convnet2_ws_forward.1} parent=1 // pred_fallthru
      _
    // Predicated region
    $region18: #{convnet2_ws_forward.1} parent=1 // pred_check
      _
    $region19: #{convnet2_ws_forward.1} parent=1 // pred_check_branch
      %34 = sbr.rel (0) target = $region21
    $region20: #{convnet2_ws_forward.1} parent=1 // pred_region
      _
    $region21: #{convnet2_ws_forward.1} parent=1 // pred_fallthru
      _
    // Predicated region
    $region22: #{convnet2_ws_forward.1} parent=1 // pred_check
      _
    $region23: #{convnet2_ws_forward.1} parent=1 // pred_check_branch
      %36 = sbr.rel (0) target = $region25
    $region24: #{convnet2_ws_forward.1} parent=1 // pred_region
      _
    $region25: #{convnet2_ws_forward.1} parent=1 // pred_fallthru
      _
    // Predicated region
    $region26: #{convnet2_ws_forward.1} parent=1 // pred_check
      _
    $region27: #{convnet2_ws_forward.1} parent=1 // pred_check_branch
      %38 = sbr.rel (0) target = $region29
    $region28: #{convnet2_ws_forward.1} parent=1 // pred_region
      _
    $region29: #{convnet2_ws_forward.1} parent=1 // pred_fallthru
      _
    // Predicated region
    $region30: #{convnet2_ws_forward.1} parent=1 // pred_check
      _
    $region31: #{convnet2_ws_forward.1} parent=1 // pred_check_branch
      %40 = sbr.rel (0) target = $region33
    $region32: #{convnet2_ws_forward.1} parent=1 // pred_region
      _
    $region33: #{convnet2_ws_forward.1} parent=1 // pred_fallthru
      _
    // Predicated region
    $region34: #{convnet2_ws_forward.1} parent=1 // pred_check
      _
    $region35: #{convnet2_ws_forward.1} parent=1 // pred_check_branch
      %42 = sbr.rel (0) target = $region37
    $region36: #{convnet2_ws_forward.1} parent=1 // pred_region
      _
    $region37: #{convnet2_ws_forward.1} parent=1 // pred_fallthru
      _
    // Predicated region
    $region38: #{convnet2_ws_forward.1} parent=1 // pred_check
      _
    $region39: #{convnet2_ws_forward.1} parent=1 // pred_check_branch
      %44 = sbr.rel (0) target = $region41
    $region40: #{convnet2_ws_forward.1} parent=1 // pred_region
      %45 = dma.done [#allocation4], 30720
    $region41: #{convnet2_ws_forward.1} parent=1 // pred_fallthru
      _
    %v47 = vld [vmem:[%s0] sm:$0xf]
    %v48 = vld [vmem:[%s0 + $0x4] sm:$0xf]
    %v49 = vld [vmem:[%s0 + $0x8] sm:$0xf]
    %v50 = vld [vmem:[%s0 + $0xc] sm:$0xf]
    %v51 = vld [vmem:[%s0 + $0x10] sm:$0xf]
    %v52 = vld [vmem:[%s0 + $0x14] sm:$0xf]
    %v53 = vld [vmem:[%s0 + $0x18] sm:$0xf]
    %v54 = vld [vmem:[%s0 + $0x1c] sm:$0xf]
    %v55 = vld [vmem:[%s0 + $0x20] sm:$0xf]
    %v56 = vld [vmem:[%s0 + $0x24] sm:$0xf]
    %v57 = vld [vmem:[%s0 + $0x28] sm:$0xf]
    %v58 = vld [vmem:[%s0 + $0x2c] sm:$0xf]
    %v59 = vld [vmem:[%s0 + $0x30] sm:$0xf]
    %v60 = vld [vmem:[%s0 + $0x34] sm:$0xf]
    %v61 = vld [vmem:[%s0 + $0x38] sm:$0xf]
    %v62 = vld [vmem:[%s0 + $0x3c] sm:$0xf]
    %v63 = vld [vmem:[%s0 + $0x40] sm:$0xf]
    %v64 = vld [vmem:[%s0 + $0x44] sm:$0xf]
    %v65 = vld [vmem:[%s0 + $0x48] sm:$0xf]
    %v66 = vld [vmem:[%s0 + $0x4c] sm:$0xf]
    %v67 = vld [vmem:[%s0 + $0x50] sm:$0xf]
    %v68 = vld [vmem:[%s0 + $0x54] sm:$0xf]
    %v69 = vld [vmem:[%s0 + $0x58] sm:$0xf]
    %v70 = vld [vmem:[%s0 + $0x5c] sm:$0xf]
    %s71 = scalar_lea.vmem %s0, 8
    %v72 = vld [vmem:[%s71] sm:$0xf]
    %v73 = vld [vmem:[%s71 + $0x4] sm:$0xf]
    %v74 = vld [vmem:[%s71 + $0x8] sm:$0xf]
    %v75 = vld [vmem:[%s71 + $0xc] sm:$0xf]
    %v76 = vld [vmem:[%s71 + $0x10] sm:$0xf]
    %v77 = vld [vmem:[%s71 + $0x14] sm:$0xf]
    %v78 = vld [vmem:[%s71 + $0x18] sm:$0xf]
    %v79 = vld [vmem:[%s71 + $0x1c] sm:$0xf]
    %v80 = vld [vmem:[%s71 + $0x20] sm:$0xf]
    %v81 = vld [vmem:[%s71 + $0x24] sm:$0xf]
    %v82 = vld [vmem:[%s71 + $0x28] sm:$0xf]
    %v83 = vld [vmem:[%s71 + $0x2c] sm:$0xf]
    %v84 = vld [vmem:[%s71 + $0x30] sm:$0xf]
    %v85 = vld [vmem:[%s71 + $0x34] sm:$0xf]
    %v86 = vld [vmem:[%s71 + $0x38] sm:$0xf]
    %v87 = vld [vmem:[%s71 + $0x3c] sm:$0xf]
    %v88 = vld [vmem:[%s71 + $0x40] sm:$0xf]
    %v89 = vld [vmem:[%s71 + $0x44] sm:$0xf]
    %v90 = vld [vmem:[%s71 + $0x48] sm:$0xf]
    %v91 = vld [vmem:[%s71 + $0x4c] sm:$0xf]
    %v92 = vld [vmem:[%s71 + $0x50] sm:$0xf]
    %v93 = vld [vmem:[%s71 + $0x54] sm:$0xf]
    %v94 = vld [vmem:[%s71 + $0x58] sm:$0xf]
    %v95 = vld [vmem:[%s71 + $0x5c] sm:$0xf]
    %s96 = scalar_lea.vmem %s0, 16
    %v97 = vld [vmem:[%s96] sm:$0xf]
    %v98 = vld [vmem:[%s96 + $0x4] sm:$0xf]
    %v99 = vld [vmem:[%s96 + $0x8] sm:$0xf]
    %v100 = vld [vmem:[%s96 + $0xc] sm:$0xf]
    %v101 = vld [vmem:[%s96 + $0x10] sm:$0xf]
    %v102 = vld [vmem:[%s96 + $0x14] sm:$0xf]
    %v103 = vld [vmem:[%s96 + $0x18] sm:$0xf]
    %v104 = vld [vmem:[%s96 + $0x1c] sm:$0xf]
    %v105 = vld [vmem:[%s96 + $0x20] sm:$0xf]
    %v106 = vld [vmem:[%s96 + $0x24] sm:$0xf]
    %v107 = vld [vmem:[%s96 + $0x28] sm:$0xf]
    %v108 = vld [vmem:[%s96 + $0x2c] sm:$0xf]
    %v109 = vld [vmem:[%s96 + $0x30] sm:$0xf]
    %v110 = vld [vmem:[%s96 + $0x34] sm:$0xf]
    %v111 = vld [vmem:[%s96 + $0x38] sm:$0xf]
    %v112 = vld [vmem:[%s96 + $0x3c] sm:$0xf]
    %v113 = vld [vmem:[%s96 + $0x40] sm:$0xf]
    %v114 = vld [vmem:[%s96 + $0x44] sm:$0xf]
    %v115 = vld [vmem:[%s96 + $0x48] sm:$0xf]
    %v116 = vld [vmem:[%s96 + $0x4c] sm:$0xf]
    %v117 = vld [vmem:[%s96 + $0x50] sm:$0xf]
    %v118 = vld [vmem:[%s96 + $0x54] sm:$0xf]
    %v119 = vld [vmem:[%s96 + $0x58] sm:$0xf]
    %v120 = vld [vmem:[%s96 + $0x5c] sm:$0xf]
    %v145 = vunpack.c.l.b16 %v47
    %v146 = vunpack.c.l.b16 %v48
    %v147 = vunpack.c.l.b16 %v49
    %v148 = vunpack.c.l.b16 %v50
    %v149 = vunpack.c.l.b16 %v51
    %v150 = vunpack.c.l.b16 %v52
    %v151 = vunpack.c.l.b16 %v53
    %v152 = vunpack.c.l.b16 %v54
    %v153 = vunpack.c.l.b16 %v55
    %v154 = vunpack.c.l.b16 %v56
    %v155 = vunpack.c.l.b16 %v57
    %v156 = vunpack.c.l.b16 %v58
    %v157 = vunpack.c.l.b16 %v59
    %v158 = vunpack.c.l.b16 %v60
    %v159 = vunpack.c.l.b16 %v61
    %v160 = vunpack.c.l.b16 %v62
    %v161 = vunpack.c.l.b16 %v63
    %v162 = vunpack.c.l.b16 %v64
    %v163 = vunpack.c.l.b16 %v65
    %v164 = vunpack.c.l.b16 %v66
    %v165 = vunpack.c.l.b16 %v67
    %v166 = vunpack.c.l.b16 %v68
    %v167 = vunpack.c.l.b16 %v69
    %v168 = vunpack.c.l.b16 %v70
    %v169 = vpack.c.b16 %v146, %v145
    %v170 = vpack.c.b16 %v148, %v147
    %v171 = vpack.c.b16 %v150, %v149
    %v172 = vpack.c.b16 %v152, %v151
    %v173 = vpack.c.b16 %v154, %v153
    %v174 = vpack.c.b16 %v156, %v155
    %v175 = vpack.c.b16 %v158, %v157
    %v176 = vpack.c.b16 %v160, %v159
    %v177 = vpack.c.b16 %v162, %v161
    %v178 = vpack.c.b16 %v164, %v163
    %v179 = vpack.c.b16 %v166, %v165
    %v180 = vpack.c.b16 %v168, %v167
    %v217 = vunpack.c.l.b16 %v72
    %v218 = vunpack.c.l.b16 %v73
    %v219 = vunpack.c.l.b16 %v74
    %v220 = vunpack.c.l.b16 %v75
    %v221 = vunpack.c.l.b16 %v76
    %v222 = vunpack.c.l.b16 %v77
    %v223 = vunpack.c.l.b16 %v78
    %v224 = vunpack.c.l.b16 %v79
    %v225 = vunpack.c.l.b16 %v80
    %v226 = vunpack.c.l.b16 %v81
    %v227 = vunpack.c.l.b16 %v82
    %v228 = vunpack.c.l.b16 %v83
    %v229 = vunpack.c.l.b16 %v84
    %v230 = vunpack.c.l.b16 %v85
    %v231 = vunpack.c.l.b16 %v86
    %v232 = vunpack.c.l.b16 %v87
    %v233 = vunpack.c.l.b16 %v88
    %v234 = vunpack.c.l.b16 %v89
    %v235 = vunpack.c.l.b16 %v90
    %v236 = vunpack.c.l.b16 %v91
    %v237 = vunpack.c.l.b16 %v92
    %v238 = vunpack.c.l.b16 %v93
    %v239 = vunpack.c.l.b16 %v94
    %v240 = vunpack.c.l.b16 %v95
    %v241 = vpack.c.b16 %v218, %v217
    %v242 = vpack.c.b16 %v220, %v219
    %v243 = vpack.c.b16 %v222, %v221
    %v244 = vpack.c.b16 %v224, %v223
    %v245 = vpack.c.b16 %v226, %v225
    %v246 = vpack.c.b16 %v228, %v227
    %v247 = vpack.c.b16 %v230, %v229
    %v248 = vpack.c.b16 %v232, %v231
    %v249 = vpack.c.b16 %v234, %v233
    %v250 = vpack.c.b16 %v236, %v235
    %v251 = vpack.c.b16 %v238, %v237
    %v252 = vpack.c.b16 %v240, %v239
    %v289 = vunpack.c.l.b16 %v97
    %v290 = vunpack.c.l.b16 %v98
    %v291 = vunpack.c.l.b16 %v99
    %v292 = vunpack.c.l.b16 %v100
    %v293 = vunpack.c.l.b16 %v101
    %v294 = vunpack.c.l.b16 %v102
    %v295 = vunpack.c.l.b16 %v103
    %v296 = vunpack.c.l.b16 %v104
    %v297 = vunpack.c.l.b16 %v105
    %v298 = vunpack.c.l.b16 %v106
    %v299 = vunpack.c.l.b16 %v107
    %v300 = vunpack.c.l.b16 %v108
    %v301 = vunpack.c.l.b16 %v109
    %v302 = vunpack.c.l.b16 %v110
    %v303 = vunpack.c.l.b16 %v111
    %v304 = vunpack.c.l.b16 %v112
    %v305 = vunpack.c.l.b16 %v113
    %v306 = vunpack.c.l.b16 %v114
    %v307 = vunpack.c.l.b16 %v115
    %v308 = vunpack.c.l.b16 %v116
    %v309 = vunpack.c.l.b16 %v117
    %v310 = vunpack.c.l.b16 %v118
    %v311 = vunpack.c.l.b16 %v119
    %v312 = vunpack.c.l.b16 %v120
    %v313 = vpack.c.b16 %v290, %v289
    %v314 = vpack.c.b16 %v292, %v291
    %v315 = vpack.c.b16 %v294, %v293
    %v316 = vpack.c.b16 %v296, %v295
    %v317 = vpack.c.b16 %v298, %v297
    %v318 = vpack.c.b16 %v300, %v299
    %v319 = vpack.c.b16 %v302, %v301
    %v320 = vpack.c.b16 %v304, %v303
    %v321 = vpack.c.b16 %v306, %v305
    %v322 = vpack.c.b16 %v308, %v307
    %v323 = vpack.c.b16 %v310, %v309
    %v324 = vpack.c.b16 %v312, %v311
    %v337 = vld [vmem:[%s1] sm:$0xff]
    %v338 = vld [vmem:[%s1 + $0x8] sm:$0xf]
    %v339 = vld [vmem:[%s1 + $0xc] sm:$0xff]
    %v340 = vld [vmem:[%s1 + $0x14] sm:$0xf]
    %v341 = vld [vmem:[%s1 + $0x18] sm:$0xff]
    %v342 = vld [vmem:[%s1 + $0x20] sm:$0xf]
    %v343 = vld [vmem:[%s1 + $0x24] sm:$0xff]
    %v344 = vld [vmem:[%s1 + $0x2c] sm:$0xf]
    %v345 = vld [vmem:[%s1 + $0x30] sm:$0xff]
    %v346 = vld [vmem:[%s1 + $0x38] sm:$0xf]
    %v347 = vld [vmem:[%s1 + $0x3c] sm:$0xff]
    %v348 = vld [vmem:[%s1 + $0x44] sm:$0xf]
    %v349 = vld [vmem:[%s1 + $0x48] sm:$0xff]
    %v350 = vld [vmem:[%s1 + $0x50] sm:$0xf]
    %v351 = vld [vmem:[%s1 + $0x54] sm:$0xff]
    %v352 = vld [vmem:[%s1 + $0x5c] sm:$0xf]
    %v353 = vld [vmem:[%s1 + $0x60] sm:$0xff]
    %v354 = vld [vmem:[%s1 + $0x68] sm:$0xf]
    %v355 = vld [vmem:[%s1 + $0x6c] sm:$0xff]
    %v356 = vld [vmem:[%s1 + $0x74] sm:$0xf]
    %v357 = vld [vmem:[%s1 + $0x78] sm:$0xff]
    %v358 = vld [vmem:[%s1 + $0x80] sm:$0xf]
    %v359 = vld [vmem:[%s1 + $0x84] sm:$0xff]
    %v360 = vld [vmem:[%s1 + $0x8c] sm:$0xf]
    %v361 = vld [vmem:[%s1 + $0x90] sm:$0xff]
    %v362 = vld [vmem:[%s1 + $0x98] sm:$0xf]
    %v363 = vld [vmem:[%s1 + $0x9c] sm:$0xff]
    %v364 = vld [vmem:[%s1 + $0xa4] sm:$0xf]
    %v365 = vld [vmem:[%s1 + $0xa8] sm:$0xff]
    %v366 = vld [vmem:[%s1 + $0xb0] sm:$0xf]
    %v367 = vld [vmem:[%s1 + $0xb4] sm:$0xff]
    %v368 = vld [vmem:[%s1 + $0xbc] sm:$0xf]
    %v369 = vld [vmem:[%s1 + $0xc0] sm:$0xff]
    %v370 = vld [vmem:[%s1 + $0xc8] sm:$0xf]
    %v371 = vld [vmem:[%s1 + $0xcc] sm:$0xff]
    %v372 = vld [vmem:[%s1 + $0xd4] sm:$0xf]
    %v373 = vld [vmem:[%s1 + $0xd8] sm:$0xff]
    %v374 = vld [vmem:[%s1 + $0xe0] sm:$0xf]
    %v375 = vld [vmem:[%s1 + $0xe4] sm:$0xff]
    %v376 = vld [vmem:[%s1 + $0xec] sm:$0xf]
    %v377 = vld [vmem:[%s1 + $0xf0] sm:$0xff]
    %v378 = vld [vmem:[%s1 + $0xf8] sm:$0xf]
    %v379 = vld [vmem:[%s1 + $0xfc] sm:$0xff]
    %v380 = vld [vmem:[%s1 + $0x104] sm:$0xf]
    %v381 = vld [vmem:[%s1 + $0x108] sm:$0xff]
    %v382 = vld [vmem:[%s1 + $0x110] sm:$0xf]
    %v383 = vld [vmem:[%s1 + $0x114] sm:$0xff]
    %v384 = vld [vmem:[%s1 + $0x11c] sm:$0xf]
    %v385 = vld [vmem:[%s1 + $0x120] sm:$0xff]
    %v386 = vld [vmem:[%s1 + $0x128] sm:$0xf]
    %v387 = vld [vmem:[%s1 + $0x12c] sm:$0xff]
    %v388 = vld [vmem:[%s1 + $0x134] sm:$0xf]
    %v389 = vld [vmem:[%s1 + $0x138] sm:$0xff]
    %v390 = vld [vmem:[%s1 + $0x140] sm:$0xf]
    %v391 = vld [vmem:[%s1 + $0x144] sm:$0xff]
    %v392 = vld [vmem:[%s1 + $0x14c] sm:$0xf]
    %v393 = vld [vmem:[%s1 + $0x150] sm:$0xff]
    %v394 = vld [vmem:[%s1 + $0x158] sm:$0xf]
    %v395 = vld [vmem:[%s1 + $0x15c] sm:$0xff]
    %v396 = vld [vmem:[%s1 + $0x164] sm:$0xf]
    %v397 = vld [vmem:[%s1 + $0x168] sm:$0xff]
    %v398 = vld [vmem:[%s1 + $0x170] sm:$0xf]
    %v399 = vld [vmem:[%s1 + $0x174] sm:$0xff]
    %v400 = vld [vmem:[%s1 + $0x17c] sm:$0xf]
    %v401 = vld [vmem:[%s1 + $0x180] sm:$0xff]
    %v402 = vld [vmem:[%s1 + $0x188] sm:$0xf]
    %v403 = vld [vmem:[%s1 + $0x18c] sm:$0xff]
    %v404 = vld [vmem:[%s1 + $0x194] sm:$0xf]
    %v405 = vld [vmem:[%s1 + $0x198] sm:$0xff]
    %v406 = vld [vmem:[%s1 + $0x1a0] sm:$0xf]
    %v407 = vld [vmem:[%s1 + $0x1a4] sm:$0xff]
    %v408 = vld [vmem:[%s1 + $0x1ac] sm:$0xf]
    %v409 = vld [vmem:[%s1 + $0x1b0] sm:$0xff]
    %v410 = vld [vmem:[%s1 + $0x1b8] sm:$0xf]
    %v411 = vld [vmem:[%s1 + $0x1bc] sm:$0xff]
    %v412 = vld [vmem:[%s1 + $0x1c4] sm:$0xf]
    %v413 = vld [vmem:[%s1 + $0x1c8] sm:$0xff]
    %v414 = vld [vmem:[%s1 + $0x1d0] sm:$0xf]
    %v415 = vld [vmem:[%s1 + $0x1d4] sm:$0xff]
    %v416 = vld [vmem:[%s1 + $0x1dc] sm:$0xf]
    %v417 = vld [vmem:[%s1 + $0x1e0] sm:$0xff]
    %v418 = vld [vmem:[%s1 + $0x1e8] sm:$0xf]
    %v419 = vld [vmem:[%s1 + $0x1ec] sm:$0xff]
    %v420 = vld [vmem:[%s1 + $0x1f4] sm:$0xf]
    %v421 = vld [vmem:[%s1 + $0x1f8] sm:$0xff]
    %v422 = vld [vmem:[%s1 + $0x200] sm:$0xf]
    %v423 = vld [vmem:[%s1 + $0x204] sm:$0xff]
    %v424 = vld [vmem:[%s1 + $0x20c] sm:$0xf]
    %v425 = vld [vmem:[%s1 + $0x210] sm:$0xff]
    %v426 = vld [vmem:[%s1 + $0x218] sm:$0xf]
    %v427 = vld [vmem:[%s1 + $0x21c] sm:$0xff]
    %v428 = vld [vmem:[%s1 + $0x224] sm:$0xf]
    %v429 = vld [vmem:[%s1 + $0x228] sm:$0xff]
    %v430 = vld [vmem:[%s1 + $0x230] sm:$0xf]
    %v431 = vld [vmem:[%s1 + $0x234] sm:$0xff]
    %v432 = vld [vmem:[%s1 + $0x23c] sm:$0xf]
    %v529 = vunpack.c.l.b16 %v337
    %v530 = vunpack.c.h.b16 %v337
    %v531 = vunpack.c.l.b16 %v338
    %v532 = vunpack.c.l.b16 %v339
    %v533 = vunpack.c.h.b16 %v339
    %v534 = vunpack.c.l.b16 %v340
    %v535 = vunpack.c.l.b16 %v341
    %v536 = vunpack.c.h.b16 %v341
    %v537 = vunpack.c.l.b16 %v342
    %v538 = vunpack.c.l.b16 %v343
    %v539 = vunpack.c.h.b16 %v343
    %v540 = vunpack.c.l.b16 %v344
    %v541 = vunpack.c.l.b16 %v345
    %v542 = vunpack.c.h.b16 %v345
    %v543 = vunpack.c.l.b16 %v346
    %v544 = vunpack.c.l.b16 %v347
    %v545 = vunpack.c.h.b16 %v347
    %v546 = vunpack.c.l.b16 %v348
    %v547 = vunpack.c.l.b16 %v349
    %v548 = vunpack.c.h.b16 %v349
    %v549 = vunpack.c.l.b16 %v350
    %v550 = vunpack.c.l.b16 %v351
    %v551 = vunpack.c.h.b16 %v351
    %v552 = vunpack.c.l.b16 %v352
    %v553 = vunpack.c.l.b16 %v353
    %v554 = vunpack.c.h.b16 %v353
    %v555 = vunpack.c.l.b16 %v354
    %v556 = vunpack.c.l.b16 %v355
    %v557 = vunpack.c.h.b16 %v355
    %v558 = vunpack.c.l.b16 %v356
    %v559 = vunpack.c.l.b16 %v357
    %v560 = vunpack.c.h.b16 %v357
    %v561 = vunpack.c.l.b16 %v358
    %v562 = vunpack.c.l.b16 %v359
    %v563 = vunpack.c.h.b16 %v359
    %v564 = vunpack.c.l.b16 %v360
    %v565 = vunpack.c.l.b16 %v361
    %v566 = vunpack.c.h.b16 %v361
    %v567 = vunpack.c.l.b16 %v362
    %v568 = vunpack.c.l.b16 %v363
    %v569 = vunpack.c.h.b16 %v363
    %v570 = vunpack.c.l.b16 %v364
    %v571 = vunpack.c.l.b16 %v365
    %v572 = vunpack.c.h.b16 %v365
    %v573 = vunpack.c.l.b16 %v366
    %v574 = vunpack.c.l.b16 %v367
    %v575 = vunpack.c.h.b16 %v367
    %v576 = vunpack.c.l.b16 %v368
    %v577 = vunpack.c.l.b16 %v369
    %v578 = vunpack.c.h.b16 %v369
    %v579 = vunpack.c.l.b16 %v370
    %v580 = vunpack.c.l.b16 %v371
    %v581 = vunpack.c.h.b16 %v371
    %v582 = vunpack.c.l.b16 %v372
    %v583 = vunpack.c.l.b16 %v373
    %v584 = vunpack.c.h.b16 %v373
    %v585 = vunpack.c.l.b16 %v374
    %v586 = vunpack.c.l.b16 %v375
    %v587 = vunpack.c.h.b16 %v375
    %v588 = vunpack.c.l.b16 %v376
    %v589 = vunpack.c.l.b16 %v377
    %v590 = vunpack.c.h.b16 %v377
    %v591 = vunpack.c.l.b16 %v378
    %v592 = vunpack.c.l.b16 %v379
    %v593 = vunpack.c.h.b16 %v379
    %v594 = vunpack.c.l.b16 %v380
    %v595 = vunpack.c.l.b16 %v381
    %v596 = vunpack.c.h.b16 %v381
    %v597 = vunpack.c.l.b16 %v382
    %v598 = vunpack.c.l.b16 %v383
    %v599 = vunpack.c.h.b16 %v383
    %v600 = vunpack.c.l.b16 %v384
    %v601 = vunpack.c.l.b16 %v385
    %v602 = vunpack.c.h.b16 %v385
    %v603 = vunpack.c.l.b16 %v386
    %v604 = vunpack.c.l.b16 %v387
    %v605 = vunpack.c.h.b16 %v387
    %v606 = vunpack.c.l.b16 %v388
    %v607 = vunpack.c.l.b16 %v389
    %v608 = vunpack.c.h.b16 %v389
    %v609 = vunpack.c.l.b16 %v390
    %v610 = vunpack.c.l.b16 %v391
    %v611 = vunpack.c.h.b16 %v391
    %v612 = vunpack.c.l.b16 %v392
    %v613 = vunpack.c.l.b16 %v393
    %v614 = vunpack.c.h.b16 %v393
    %v615 = vunpack.c.l.b16 %v394
    %v616 = vunpack.c.l.b16 %v395
    %v617 = vunpack.c.h.b16 %v395
    %v618 = vunpack.c.l.b16 %v396
    %v619 = vunpack.c.l.b16 %v397
    %v620 = vunpack.c.h.b16 %v397
    %v621 = vunpack.c.l.b16 %v398
    %v622 = vunpack.c.l.b16 %v399
    %v623 = vunpack.c.h.b16 %v399
    %v624 = vunpack.c.l.b16 %v400
    %v625 = vunpack.c.l.b16 %v401
    %v626 = vunpack.c.h.b16 %v401
    %v627 = vunpack.c.l.b16 %v402
    %v628 = vunpack.c.l.b16 %v403
    %v629 = vunpack.c.h.b16 %v403
    %v630 = vunpack.c.l.b16 %v404
    %v631 = vunpack.c.l.b16 %v405
    %v632 = vunpack.c.h.b16 %v405
    %v633 = vunpack.c.l.b16 %v406
    %v634 = vunpack.c.l.b16 %v407
    %v635 = vunpack.c.h.b16 %v407
    %v636 = vunpack.c.l.b16 %v408
    %v637 = vunpack.c.l.b16 %v409
    %v638 = vunpack.c.h.b16 %v409
    %v639 = vunpack.c.l.b16 %v410
    %v640 = vunpack.c.l.b16 %v411
    %v641 = vunpack.c.h.b16 %v411
    %v642 = vunpack.c.l.b16 %v412
    %v643 = vunpack.c.l.b16 %v413
    %v644 = vunpack.c.h.b16 %v413
    %v645 = vunpack.c.l.b16 %v414
    %v646 = vunpack.c.l.b16 %v415
    %v647 = vunpack.c.h.b16 %v415
    %v648 = vunpack.c.l.b16 %v416
    %v649 = vunpack.c.l.b16 %v417
    %v650 = vunpack.c.h.b16 %v417
    %v651 = vunpack.c.l.b16 %v418
    %v652 = vunpack.c.l.b16 %v419
    %v653 = vunpack.c.h.b16 %v419
    %v654 = vunpack.c.l.b16 %v420
    %v655 = vunpack.c.l.b16 %v421
    %v656 = vunpack.c.h.b16 %v421
    %v657 = vunpack.c.l.b16 %v422
    %v658 = vunpack.c.l.b16 %v423
    %v659 = vunpack.c.h.b16 %v423
    %v660 = vunpack.c.l.b16 %v424
    %v661 = vunpack.c.l.b16 %v425
    %v662 = vunpack.c.h.b16 %v425
    %v663 = vunpack.c.l.b16 %v426
    %v664 = vunpack.c.l.b16 %v427
    %v665 = vunpack.c.h.b16 %v427
    %v666 = vunpack.c.l.b16 %v428
    %v667 = vunpack.c.l.b16 %v429
    %v668 = vunpack.c.h.b16 %v429
    %v669 = vunpack.c.l.b16 %v430
    %v670 = vunpack.c.l.b16 %v431
    %v671 = vunpack.c.h.b16 %v431
    %v672 = vunpack.c.l.b16 %v432
    %v673 = vpack.c.b16 %v532, %v529
    %v674 = vpack.c.b16 %v533, %v530
    %v675 = vpack.c.b16 %v534, %v531
    %v676 = vpack.c.b16 %v538, %v535
    %v677 = vpack.c.b16 %v539, %v536
    %v678 = vpack.c.b16 %v540, %v537
    %v679 = vpack.c.b16 %v544, %v541
    %v680 = vpack.c.b16 %v545, %v542
    %v681 = vpack.c.b16 %v546, %v543
    %v682 = vpack.c.b16 %v550, %v547
    %v683 = vpack.c.b16 %v551, %v548
    %v684 = vpack.c.b16 %v552, %v549
    %v685 = vpack.c.b16 %v556, %v553
    %v686 = vpack.c.b16 %v557, %v554
    %v687 = vpack.c.b16 %v558, %v555
    %v688 = vpack.c.b16 %v562, %v559
    %v689 = vpack.c.b16 %v563, %v560
    %v690 = vpack.c.b16 %v564, %v561
    %v691 = vpack.c.b16 %v568, %v565
    %v692 = vpack.c.b16 %v569, %v566
    %v693 = vpack.c.b16 %v570, %v567
    %v694 = vpack.c.b16 %v574, %v571
    %v695 = vpack.c.b16 %v575, %v572
    %v696 = vpack.c.b16 %v576, %v573
    %v697 = vpack.c.b16 %v580, %v577
    %v698 = vpack.c.b16 %v581, %v578
    %v699 = vpack.c.b16 %v582, %v579
    %v700 = vpack.c.b16 %v586, %v583
    %v701 = vpack.c.b16 %v587, %v584
    %v702 = vpack.c.b16 %v588, %v585
    %v703 = vpack.c.b16 %v592, %v589
    %v704 = vpack.c.b16 %v593, %v590
    %v705 = vpack.c.b16 %v594, %v591
    %v706 = vpack.c.b16 %v598, %v595
    %v707 = vpack.c.b16 %v599, %v596
    %v708 = vpack.c.b16 %v600, %v597
    %v709 = vpack.c.b16 %v604, %v601
    %v710 = vpack.c.b16 %v605, %v602
    %v711 = vpack.c.b16 %v606, %v603
    %v712 = vpack.c.b16 %v610, %v607
    %v713 = vpack.c.b16 %v611, %v608
    %v714 = vpack.c.b16 %v612, %v609
    %v715 = vpack.c.b16 %v616, %v613
    %v716 = vpack.c.b16 %v617, %v614
    %v717 = vpack.c.b16 %v618, %v615
    %v718 = vpack.c.b16 %v622, %v619
    %v719 = vpack.c.b16 %v623, %v620
    %v720 = vpack.c.b16 %v624, %v621
    %v721 = vpack.c.b16 %v628, %v625
    %v722 = vpack.c.b16 %v629, %v626
    %v723 = vpack.c.b16 %v630, %v627
    %v724 = vpack.c.b16 %v634, %v631
    %v725 = vpack.c.b16 %v635, %v632
    %v726 = vpack.c.b16 %v636, %v633
    %v727 = vpack.c.b16 %v640, %v637
    %v728 = vpack.c.b16 %v641, %v638
    %v729 = vpack.c.b16 %v642, %v639
    %v730 = vpack.c.b16 %v646, %v643
    %v731 = vpack.c.b16 %v647, %v644
    %v732 = vpack.c.b16 %v648, %v645
    %v733 = vpack.c.b16 %v652, %v649
    %v734 = vpack.c.b16 %v653, %v650
    %v735 = vpack.c.b16 %v654, %v651
    %v736 = vpack.c.b16 %v658, %v655
    %v737 = vpack.c.b16 %v659, %v656
    %v738 = vpack.c.b16 %v660, %v657
    %v739 = vpack.c.b16 %v664, %v661
    %v740 = vpack.c.b16 %v665, %v662
    %v741 = vpack.c.b16 %v666, %v663
    %v742 = vpack.c.b16 %v670, %v667
    %v743 = vpack.c.b16 %v671, %v668
    %v744 = vpack.c.b16 %v672, %v669
    %817 = vmatprep.subr.bf16.mxu0 %v674
    %818 = vmatpush1.bf16.msra.mxu0 %v673
    %819 = vmatprep.subr.bf16.mxu0 %v677
    %820 = vmatpush1.bf16.msra.mxu0 %v676
    %821 = vmatprep.subr.bf16.mxu0 %v680
    %822 = vmatpush1.bf16.msra.mxu0 %v679
    %823 = vmatprep.subr.bf16.mxu0 %v683
    %824 = vmatpush1.bf16.msra.mxu0 %v682
    %825 = vmatprep.subr.bf16.mxu0 %v686
    %826 = vmatpush1.bf16.msra.mxu0 %v685
    %827 = vmatprep.subr.bf16.mxu0 %v689
    %828 = vmatpush1.bf16.msra.mxu0 %v688
    %829 = vmatprep.subr.bf16.mxu0 %v692
    %830 = vmatpush1.bf16.msra.mxu0 %v691
    %831 = vmatprep.subr.bf16.mxu0 %v695
    %832 = vmatpush1.bf16.msra.mxu0 %v694
    %833 = vmatprep.subr.bf16.mxu0 %v698
    %834 = vmatpush1.bf16.msra.mxu0 %v697
    %835 = vmatprep.subr.bf16.mxu0 %v701
    %836 = vmatpush1.bf16.msra.mxu0 %v700
    %837 = vmatprep.subr.bf16.mxu0 %v704
    %838 = vmatpush1.bf16.msra.mxu0 %v703
    %839 = vmatprep.subr.bf16.mxu0 %v707
    %840 = vmatpush1.bf16.msra.mxu0 %v706
    %841 = vmatprep.subr.bf16.mxu0 %v710
    %842 = vmatpush1.bf16.msra.mxu0 %v709
    %843 = vmatprep.subr.bf16.mxu0 %v713
    %844 = vmatpush1.bf16.msra.mxu0 %v712
    %845 = vmatprep.subr.bf16.mxu0 %v716
    %846 = vmatpush1.bf16.msra.mxu0 %v715
    %847 = vmatprep.subr.bf16.mxu0 %v719
    %848 = vmatpush1.bf16.msra.mxu0 %v718
    %849 = vmatprep.mubr.bf16.mxu0 %v241
    %850 = vmatmul.mubr.bf16.gmra.mrb[0].mxu0 %v169
    %v851 = vpop.f32.mrb[0].mxu0
    %v852 = vadd.f32 0.0, %v851
    %v853 = vpop.f32.mrb[0].mxu0
    %v854 = vadd.f32 0.0, %v853
    %v855 = vpop.f32.mrb[0].mxu0
    %v856 = vadd.f32 0.0, %v855
    %v857 = vpop.f32.mrb[0].mxu0
    %v858 = vadd.f32 0.0, %v857
    %859 = vmatprep.mubr.bf16.mxu0 %v242
    %860 = vmatmul.mubr.bf16.gmra.mrb[0].mxu0 %v170
    %v861 = vpop.f32.mrb[0].mxu0
    %v862 = vadd.f32 0.0, %v861
    %v863 = vpop.f32.mrb[0].mxu0
    %v864 = vadd.f32 0.0, %v863
    %v865 = vpop.f32.mrb[0].mxu0
    %v866 = vadd.f32 0.0, %v865
    %v867 = vpop.f32.mrb[0].mxu0
    %v868 = vadd.f32 0.0, %v867
    %869 = vmatprep.mubr.bf16.mxu0 %v243
    %870 = vmatmul.mubr.bf16.gmra.mrb[0].mxu0 %v171
    %v871 = vpop.f32.mrb[0].mxu0
    %v872 = vadd.f32 0.0, %v871
    %v873 = vpop.f32.mrb[0].mxu0
    %v874 = vadd.f32 0.0, %v873
    %v875 = vpop.f32.mrb[0].mxu0
    %v876 = vadd.f32 0.0, %v875
    %v877 = vpop.f32.mrb[0].mxu0
    %v878 = vadd.f32 0.0, %v877
    %879 = vmatprep.mubr.bf16.mxu0 %v244
    %880 = vmatmul.mubr.bf16.gmra.mrb[0].mxu0 %v172
    %v881 = vpop.f32.mrb[0].mxu0
    %v882 = vadd.f32 0.0, %v881
    %v883 = vpop.f32.mrb[0].mxu0
    %v884 = vadd.f32 0.0, %v883
    %v885 = vpop.f32.mrb[0].mxu0
    %v886 = vadd.f32 0.0, %v885
    %v887 = vpop.f32.mrb[0].mxu0
    %v888 = vadd.f32 0.0, %v887
    %889 = vmatprep.mubr.bf16.mxu0 %v245
    %890 = vmatmul.mubr.bf16.gmra.mrb[0].mxu0 %v173
    %v891 = vpop.f32.mrb[0].mxu0
    %v892 = vadd.f32 0.0, %v891
    %v893 = vpop.f32.mrb[0].mxu0
    %v894 = vadd.f32 0.0, %v893
    %v895 = vpop.f32.mrb[0].mxu0
    %v896 = vadd.f32 0.0, %v895
    %v897 = vpop.f32.mrb[0].mxu0
    %v898 = vadd.f32 0.0, %v897
    %899 = vmatprep.mubr.bf16.mxu0 %v246
    %900 = vmatmul.mubr.bf16.gmra.mrb[0].mxu0 %v174
    %v901 = vpop.f32.mrb[0].mxu0
    %v902 = vadd.f32 0.0, %v901
    %v903 = vpop.f32.mrb[0].mxu0
    %v904 = vadd.f32 0.0, %v903
    %v905 = vpop.f32.mrb[0].mxu0
    %v906 = vadd.f32 0.0, %v905
    %v907 = vpop.f32.mrb[0].mxu0
    %v908 = vadd.f32 0.0, %v907
    %909 = vmatprep.mubr.bf16.mxu0 %v247
    %910 = vmatmul.mubr.bf16.gmra.mrb[0].mxu0 %v175
    %v911 = vpop.f32.mrb[0].mxu0
    %v912 = vadd.f32 0.0, %v911
    %v913 = vpop.f32.mrb[0].mxu0
    %v914 = vadd.f32 0.0, %v913
    %v915 = vpop.f32.mrb[0].mxu0
    %v916 = vadd.f32 0.0, %v915
    %v917 = vpop.f32.mrb[0].mxu0
    %v918 = vadd.f32 0.0, %v917
    %919 = vmatprep.mubr.bf16.mxu0 %v248
    %920 = vmatmul.mubr.bf16.gmra.mrb[0].mxu0 %v176
    %v921 = vpop.f32.mrb[0].mxu0
    %v922 = vadd.f32 0.0, %v921
    %v923 = vpop.f32.mrb[0].mxu0
    %v924 = vadd.f32 0.0, %v923
    %v925 = vpop.f32.mrb[0].mxu0
    %v926 = vadd.f32 0.0, %v925
    %v927 = vpop.f32.mrb[0].mxu0
    %v928 = vadd.f32 0.0, %v927
    %929 = vmatprep.mubr.bf16.mxu0 %v249
    %930 = vmatmul.mubr.bf16.gmra.mrb[0].mxu0 %v177
    %v931 = vpop.f32.mrb[0].mxu0
    %v932 = vadd.f32 0.0, %v931
    %v933 = vpop.f32.mrb[0].mxu0
    %v934 = vadd.f32 0.0, %v933
    %v935 = vpop.f32.mrb[0].mxu0
    %v936 = vadd.f32 0.0, %v935
    %v937 = vpop.f32.mrb[0].mxu0
    %v938 = vadd.f32 0.0, %v937
    %939 = vmatprep.mubr.bf16.mxu0 %v250
    %940 = vmatmul.mubr.bf16.gmra.mrb[0].mxu0 %v178
    %v941 = vpop.f32.mrb[0].mxu0
    %v942 = vadd.f32 0.0, %v941
    %v943 = vpop.f32.mrb[0].mxu0
    %v944 = vadd.f32 0.0, %v943
    %v945 = vpop.f32.mrb[0].mxu0
    %v946 = vadd.f32 0.0, %v945
    %v947 = vpop.f32.mrb[0].mxu0
    %v948 = vadd.f32 0.0, %v947
    %949 = vmatprep.mubr.bf16.mxu0 %v251
    %950 = vmatmul.mubr.bf16.gmra.mrb[0].mxu0 %v179
    %v951 = vpop.f32.mrb[0].mxu0
    %v952 = vadd.f32 0.0, %v951
    %v953 = vpop.f32.mrb[0].mxu0
    %v954 = vadd.f32 0.0, %v953
    %v955 = vpop.f32.mrb[0].mxu0
    %v956 = vadd.f32 0.0, %v955
    %v957 = vpop.f32.mrb[0].mxu0
    %v958 = vadd.f32 0.0, %v957
    %959 = vmatprep.mubr.bf16.mxu0 %v252
    %960 = vmatmul.mubr.bf16.gmra.mrb[0].mxu0 %v180
    %v961 = vpop.f32.mrb[0].mxu0
    %v962 = vadd.f32 0.0, %v961
    %v963 = vpop.f32.mrb[0].mxu0
    %v964 = vadd.f32 0.0, %v963
    %v965 = vpop.f32.mrb[0].mxu0
    %v966 = vadd.f32 0.0, %v965
    %v967 = vpop.f32.mrb[0].mxu0
    %v968 = vadd.f32 0.0, %v967
    %969 = vdwg.mxu0
    %970 = vmatprep.subr.bf16.mxu0 %v722
    %971 = vmatpush1.bf16.msra.mxu0 %v721
    %972 = vmatprep.subr.bf16.mxu0 %v725
    %973 = vmatpush1.bf16.msra.mxu0 %v724
    %974 = vmatprep.subr.bf16.mxu0 %v728
    %975 = vmatpush1.bf16.msra.mxu0 %v727
    %976 = vmatprep.subr.bf16.mxu0 %v731
    %977 = vmatpush1.bf16.msra.mxu0 %v730
    %978 = vmatprep.subr.bf16.mxu0 %v734
    %979 = vmatpush1.bf16.msra.mxu0 %v733
    %980 = vmatprep.subr.bf16.mxu0 %v737
    %981 = vmatpush1.bf16.msra.mxu0 %v736
    %982 = vmatprep.subr.bf16.mxu0 %v740
    %983 = vmatpush1.bf16.msra.mxu0 %v739
    %984 = vmatprep.subr.bf16.mxu0 %v743
    %985 = vmatpush1.bf16.msra.mxu0 %v742
    %986 = vmatprep.subr.bf16.mxu0 0
    %987 = vmatpush1.bf16.msra.mxu0 0
    %988 = vmatprep.subr.bf16.mxu0 0
    %989 = vmatpush1.bf16.msra.mxu0 0
    %990 = vmatprep.subr.bf16.mxu0 0
    %991 = vmatpush1.bf16.msra.mxu0 0
    %992 = vmatprep.subr.bf16.mxu0 0
    %993 = vmatpush1.bf16.msra.mxu0 0
    %994 = vmatprep.subr.bf16.mxu0 0
    %995 = vmatpush1.bf16.msra.mxu0 0
    %996 = vmatprep.subr.bf16.mxu0 0
    %997 = vmatpush1.bf16.msra.mxu0 0
    %998 = vmatprep.subr.bf16.mxu0 0
    %999 = vmatpush1.bf16.msra.mxu0 0
    %1000 = vmatprep.subr.bf16.mxu0 0
    %1001 = vmatpush1.bf16.msra.mxu0 0
    %1002 = vmatprep.mubr.bf16.mxu0 0
    %1003 = vmatmul.mubr.bf16.gmra.mrb[0].mxu0 %v313
    %v1004 = vpop.f32.mrb[0].mxu0
    %v1005 = vadd.f32 %v852, %v1004
    %v1006 = vpop.f32.mrb[0].mxu0
    %v1007 = vadd.f32 %v854, %v1006
    %v1008 = vpop.f32.mrb[0].mxu0
    %v1009 = vadd.f32 %v856, %v1008
    %v1010 = vpop.f32.mrb[0].mxu0
    %v1011 = vadd.f32 %v858, %v1010
    %1012 = vmatprep.mubr.bf16.mxu0 0
    %1013 = vmatmul.mubr.bf16.gmra.mrb[0].mxu0 %v314
    %v1014 = vpop.f32.mrb[0].mxu0
    %v1015 = vadd.f32 %v862, %v1014
    %v1016 = vpop.f32.mrb[0].mxu0
    %v1017 = vadd.f32 %v864, %v1016
    %v1018 = vpop.f32.mrb[0].mxu0
    %v1019 = vadd.f32 %v866, %v1018
    %v1020 = vpop.f32.mrb[0].mxu0
    %v1021 = vadd.f32 %v868, %v1020
    %1022 = vmatprep.mubr.bf16.mxu0 0
    %1023 = vmatmul.mubr.bf16.gmra.mrb[0].mxu0 %v315
    %v1024 = vpop.f32.mrb[0].mxu0
    %v1025 = vadd.f32 %v872, %v1024
    %v1026 = vpop.f32.mrb[0].mxu0
    %v1027 = vadd.f32 %v874, %v1026
    %v1028 = vpop.f32.mrb[0].mxu0
    %v1029 = vadd.f32 %v876, %v1028
    %v1030 = vpop.f32.mrb[0].mxu0
    %v1031 = vadd.f32 %v878, %v1030
    %1032 = vmatprep.mubr.bf16.mxu0 0
    %1033 = vmatmul.mubr.bf16.gmra.mrb[0].mxu0 %v316
    %v1034 = vpop.f32.mrb[0].mxu0
    %v1035 = vadd.f32 %v882, %v1034
    %v1036 = vpop.f32.mrb[0].mxu0
    %v1037 = vadd.f32 %v884, %v1036
    %v1038 = vpop.f32.mrb[0].mxu0
    %v1039 = vadd.f32 %v886, %v1038
    %v1040 = vpop.f32.mrb[0].mxu0
    %v1041 = vadd.f32 %v888, %v1040
    %1042 = vmatprep.mubr.bf16.mxu0 0
    %1043 = vmatmul.mubr.bf16.gmra.mrb[0].mxu0 %v317
    %v1044 = vpop.f32.mrb[0].mxu0
    %v1045 = vadd.f32 %v892, %v1044
    %v1046 = vpop.f32.mrb[0].mxu0
    %v1047 = vadd.f32 %v894, %v1046
    %v1048 = vpop.f32.mrb[0].mxu0
    %v1049 = vadd.f32 %v896, %v1048
    %v1050 = vpop.f32.mrb[0].mxu0
    %v1051 = vadd.f32 %v898, %v1050
    %1052 = vmatprep.mubr.bf16.mxu0 0
    %1053 = vmatmul.mubr.bf16.gmra.mrb[0].mxu0 %v318
    %v1054 = vpop.f32.mrb[0].mxu0
    %v1055 = vadd.f32 %v902, %v1054
    %v1056 = vpop.f32.mrb[0].mxu0
    %v1057 = vadd.f32 %v904, %v1056
    %v1058 = vpop.f32.mrb[0].mxu0
    %v1059 = vadd.f32 %v906, %v1058
    %v1060 = vpop.f32.mrb[0].mxu0
    %v1061 = vadd.f32 %v908, %v1060
    %1062 = vmatprep.mubr.bf16.mxu0 0
    %1063 = vmatmul.mubr.bf16.gmra.mrb[0].mxu0 %v319
    %v1064 = vpop.f32.mrb[0].mxu0
    %v1065 = vadd.f32 %v912, %v1064
    %v1066 = vpop.f32.mrb[0].mxu0
    %v1067 = vadd.f32 %v914, %v1066
    %v1068 = vpop.f32.mrb[0].mxu0
    %v1069 = vadd.f32 %v916, %v1068
    %v1070 = vpop.f32.mrb[0].mxu0
    %v1071 = vadd.f32 %v918, %v1070
    %1072 = vmatprep.mubr.bf16.mxu0 0
    %1073 = vmatmul.mubr.bf16.gmra.mrb[0].mxu0 %v320
    %v1074 = vpop.f32.mrb[0].mxu0
    %v1075 = vadd.f32 %v922, %v1074
    %v1076 = vpop.f32.mrb[0].mxu0
    %v1077 = vadd.f32 %v924, %v1076
    %v1078 = vpop.f32.mrb[0].mxu0
    %v1079 = vadd.f32 %v926, %v1078
    %v1080 = vpop.f32.mrb[0].mxu0
    %v1081 = vadd.f32 %v928, %v1080
    %1082 = vmatprep.mubr.bf16.mxu0 0
    %1083 = vmatmul.mubr.bf16.gmra.mrb[0].mxu0 %v321
    %v1084 = vpop.f32.mrb[0].mxu0
    %v1085 = vadd.f32 %v932, %v1084
    %v1086 = vpop.f32.mrb[0].mxu0
    %v1087 = vadd.f32 %v934, %v1086
    %v1088 = vpop.f32.mrb[0].mxu0
    %v1089 = vadd.f32 %v936, %v1088
    %v1090 = vpop.f32.mrb[0].mxu0
    %v1091 = vadd.f32 %v938, %v1090
    %1092 = vmatprep.mubr.bf16.mxu0 0
    %1093 = vmatmul.mubr.bf16.gmra.mrb[0].mxu0 %v322
    %v1094 = vpop.f32.mrb[0].mxu0
    %v1095 = vadd.f32 %v942, %v1094
    %v1096 = vpop.f32.mrb[0].mxu0
    %v1097 = vadd.f32 %v944, %v1096
    %v1098 = vpop.f32.mrb[0].mxu0
    %v1099 = vadd.f32 %v946, %v1098
    %v1100 = vpop.f32.mrb[0].mxu0
    %v1101 = vadd.f32 %v948, %v1100
    %1102 = vmatprep.mubr.bf16.mxu0 0
    %1103 = vmatmul.mubr.bf16.gmra.mrb[0].mxu0 %v323
    %v1104 = vpop.f32.mrb[0].mxu0
    %v1105 = vadd.f32 %v952, %v1104
    %v1106 = vpop.f32.mrb[0].mxu0
    %v1107 = vadd.f32 %v954, %v1106
    %v1108 = vpop.f32.mrb[0].mxu0
    %v1109 = vadd.f32 %v956, %v1108
    %v1110 = vpop.f32.mrb[0].mxu0
    %v1111 = vadd.f32 %v958, %v1110
    %1112 = vmatprep.mubr.bf16.mxu0 0
    %1113 = vmatmul.mubr.bf16.gmra.mrb[0].mxu0 %v324
    %v1114 = vpop.f32.mrb[0].mxu0
    %v1115 = vadd.f32 %v962, %v1114
    %v1116 = vpop.f32.mrb[0].mxu0
    %v1117 = vadd.f32 %v964, %v1116
    %v1118 = vpop.f32.mrb[0].mxu0
    %v1119 = vadd.f32 %v966, %v1118
    %v1120 = vpop.f32.mrb[0].mxu0
    %v1121 = vadd.f32 %v968, %v1120
    %1122 = vdwg.mxu0
    %1123 = vmatprep.subr.bf16.mxu0 0
    %1124 = vmatpush1.bf16.msra.mxu0 %v675
    %1125 = vmatprep.subr.bf16.mxu0 0
    %1126 = vmatpush1.bf16.msra.mxu0 %v678
    %1127 = vmatprep.subr.bf16.mxu0 0
    %1128 = vmatpush1.bf16.msra.mxu0 %v681
    %1129 = vmatprep.subr.bf16.mxu0 0
    %1130 = vmatpush1.bf16.msra.mxu0 %v684
    %1131 = vmatprep.subr.bf16.mxu0 0
    %1132 = vmatpush1.bf16.msra.mxu0 %v687
    %1133 = vmatprep.subr.bf16.mxu0 0
    %1134 = vmatpush1.bf16.msra.mxu0 %v690
    %1135 = vmatprep.subr.bf16.mxu0 0
    %1136 = vmatpush1.bf16.msra.mxu0 %v693
    %1137 = vmatprep.subr.bf16.mxu0 0
    %1138 = vmatpush1.bf16.msra.mxu0 %v696
    %1139 = vmatprep.subr.bf16.mxu0 0
    %1140 = vmatpush1.bf16.msra.mxu0 %v699
    %1141 = vmatprep.subr.bf16.mxu0 0
    %1142 = vmatpush1.bf16.msra.mxu0 %v702
    %1143 = vmatprep.subr.bf16.mxu0 0
    %1144 = vmatpush1.bf16.msra.mxu0 %v705
    %1145 = vmatprep.subr.bf16.mxu0 0
    %1146 = vmatpush1.bf16.msra.mxu0 %v708
    %1147 = vmatprep.subr.bf16.mxu0 0
    %1148 = vmatpush1.bf16.msra.mxu0 %v711
    %1149 = vmatprep.subr.bf16.mxu0 0
    %1150 = vmatpush1.bf16.msra.mxu0 %v714
    %1151 = vmatprep.subr.bf16.mxu0 0
    %1152 = vmatpush1.bf16.msra.mxu0 %v717
    %1153 = vmatprep.subr.bf16.mxu0 0
    %1154 = vmatpush1.bf16.msra.mxu0 %v720
    %1155 = vmatprep.mubr.bf16.mxu0 %v241
    %1156 = vmatmul.mubr.bf16.gmra.mrb[0].mxu0 %v169
    %v1157 = vpop.f32.mrb[0].mxu0
    %v1158 = vadd.f32 0.0, %v1157
    %v1159 = vpop.f32.mrb[0].mxu0
    %v1160 = vpop.f32.mrb[0].mxu0
    %v1161 = vadd.f32 0.0, %v1160
    %v1162 = vpop.f32.mrb[0].mxu0
    %1163 = vmatprep.mubr.bf16.mxu0 %v242
    %1164 = vmatmul.mubr.bf16.gmra.mrb[0].mxu0 %v170
    %v1165 = vpop.f32.mrb[0].mxu0
    %v1166 = vadd.f32 0.0, %v1165
    %v1167 = vpop.f32.mrb[0].mxu0
    %v1168 = vpop.f32.mrb[0].mxu0
    %v1169 = vadd.f32 0.0, %v1168
    %v1170 = vpop.f32.mrb[0].mxu0
    %1171 = vmatprep.mubr.bf16.mxu0 %v243
    %1172 = vmatmul.mubr.bf16.gmra.mrb[0].mxu0 %v171
    %v1173 = vpop.f32.mrb[0].mxu0
    %v1174 = vadd.f32 0.0, %v1173
    %v1175 = vpop.f32.mrb[0].mxu0
    %v1176 = vpop.f32.mrb[0].mxu0
    %v1177 = vadd.f32 0.0, %v1176
    %v1178 = vpop.f32.mrb[0].mxu0
    %1179 = vmatprep.mubr.bf16.mxu0 %v244
    %1180 = vmatmul.mubr.bf16.gmra.mrb[0].mxu0 %v172
    %v1181 = vpop.f32.mrb[0].mxu0
    %v1182 = vadd.f32 0.0, %v1181
    %v1183 = vpop.f32.mrb[0].mxu0
    %v1184 = vpop.f32.mrb[0].mxu0
    %v1185 = vadd.f32 0.0, %v1184
    %v1186 = vpop.f32.mrb[0].mxu0
    %1187 = vmatprep.mubr.bf16.mxu0 %v245
    %1188 = vmatmul.mubr.bf16.gmra.mrb[0].mxu0 %v173
    %v1189 = vpop.f32.mrb[0].mxu0
    %v1190 = vadd.f32 0.0, %v1189
    %v1191 = vpop.f32.mrb[0].mxu0
    %v1192 = vpop.f32.mrb[0].mxu0
    %v1193 = vadd.f32 0.0, %v1192
    %v1194 = vpop.f32.mrb[0].mxu0
    %1195 = vmatprep.mubr.bf16.mxu0 %v246
    %1196 = vmatmul.mubr.bf16.gmra.mrb[0].mxu0 %v174
    %v1197 = vpop.f32.mrb[0].mxu0
    %v1198 = vadd.f32 0.0, %v1197
    %v1199 = vpop.f32.mrb[0].mxu0
    %v1200 = vpop.f32.mrb[0].mxu0
    %v1201 = vadd.f32 0.0, %v1200
    %v1202 = vpop.f32.mrb[0].mxu0
    %1203 = vmatprep.mubr.bf16.mxu0 %v247
    %1204 = vmatmul.mubr.bf16.gmra.mrb[0].mxu0 %v175
    %v1205 = vpop.f32.mrb[0].mxu0
    %v1206 = vadd.f32 0.0, %v1205
    %v1207 = vpop.f32.mrb[0].mxu0
    %v1208 = vpop.f32.mrb[0].mxu0
    %v1209 = vadd.f32 0.0, %v1208
    %v1210 = vpop.f32.mrb[0].mxu0
    %1211 = vmatprep.mubr.bf16.mxu0 %v248
    %1212 = vmatmul.mubr.bf16.gmra.mrb[0].mxu0 %v176
    %v1213 = vpop.f32.mrb[0].mxu0
    %v1214 = vadd.f32 0.0, %v1213
    %v1215 = vpop.f32.mrb[0].mxu0
    %v1216 = vpop.f32.mrb[0].mxu0
    %v1217 = vadd.f32 0.0, %v1216
    %v1218 = vpop.f32.mrb[0].mxu0
    %1219 = vmatprep.mubr.bf16.mxu0 %v249
    %1220 = vmatmul.mubr.bf16.gmra.mrb[0].mxu0 %v177
    %v1221 = vpop.f32.mrb[0].mxu0
    %v1222 = vadd.f32 0.0, %v1221
    %v1223 = vpop.f32.mrb[0].mxu0
    %v1224 = vpop.f32.mrb[0].mxu0
    %v1225 = vadd.f32 0.0, %v1224
    %v1226 = vpop.f32.mrb[0].mxu0
    %1227 = vmatprep.mubr.bf16.mxu0 %v250
    %1228 = vmatmul.mubr.bf16.gmra.mrb[0].mxu0 %v178
    %v1229 = vpop.f32.mrb[0].mxu0
    %v1230 = vadd.f32 0.0, %v1229
    %v1231 = vpop.f32.mrb[0].mxu0
    %v1232 = vpop.f32.mrb[0].mxu0
    %v1233 = vadd.f32 0.0, %v1232
    %v1234 = vpop.f32.mrb[0].mxu0
    %1235 = vmatprep.mubr.bf16.mxu0 %v251
    %1236 = vmatmul.mubr.bf16.gmra.mrb[0].mxu0 %v179
    %v1237 = vpop.f32.mrb[0].mxu0
    %v1238 = vadd.f32 0.0, %v1237
    %v1239 = vpop.f32.mrb[0].mxu0
    %v1240 = vpop.f32.mrb[0].mxu0
    %v1241 = vadd.f32 0.0, %v1240
    %v1242 = vpop.f32.mrb[0].mxu0
    %1243 = vmatprep.mubr.bf16.mxu0 %v252
    %1244 = vmatmul.mubr.bf16.gmra.mrb[0].mxu0 %v180
    %v1245 = vpop.f32.mrb[0].mxu0
    %v1246 = vadd.f32 0.0, %v1245
    %v1247 = vpop.f32.mrb[0].mxu0
    %v1248 = vpop.f32.mrb[0].mxu0
    %v1249 = vadd.f32 0.0, %v1248
    %v1250 = vpop.f32.mrb[0].mxu0
    %1251 = vdwg.mxu0
    %1252 = vmatprep.subr.bf16.mxu0 0
    %1253 = vmatpush1.bf16.msra.mxu0 %v723
    %1254 = vmatprep.subr.bf16.mxu0 0
    %1255 = vmatpush1.bf16.msra.mxu0 %v726
    %1256 = vmatprep.subr.bf16.mxu0 0
    %1257 = vmatpush1.bf16.msra.mxu0 %v729
    %1258 = vmatprep.subr.bf16.mxu0 0
    %1259 = vmatpush1.bf16.msra.mxu0 %v732
    %1260 = vmatprep.subr.bf16.mxu0 0
    %1261 = vmatpush1.bf16.msra.mxu0 %v735
    %1262 = vmatprep.subr.bf16.mxu0 0
    %1263 = vmatpush1.bf16.msra.mxu0 %v738
    %1264 = vmatprep.subr.bf16.mxu0 0
    %1265 = vmatpush1.bf16.msra.mxu0 %v741
    %1266 = vmatprep.subr.bf16.mxu0 0
    %1267 = vmatpush1.bf16.msra.mxu0 %v744
    %1268 = vmatprep.subr.bf16.mxu0 0
    %1269 = vmatpush1.bf16.msra.mxu0 0
    %1270 = vmatprep.subr.bf16.mxu0 0
    %1271 = vmatpush1.bf16.msra.mxu0 0
    %1272 = vmatprep.subr.bf16.mxu0 0
    %1273 = vmatpush1.bf16.msra.mxu0 0
    %1274 = vmatprep.subr.bf16.mxu0 0
    %1275 = vmatpush1.bf16.msra.mxu0 0
    %1276 = vmatprep.subr.bf16.mxu0 0
    %1277 = vmatpush1.bf16.msra.mxu0 0
    %1278 = vmatprep.subr.bf16.mxu0 0
    %1279 = vmatpush1.bf16.msra.mxu0 0
    %1280 = vmatprep.subr.bf16.mxu0 0
    %1281 = vmatpush1.bf16.msra.mxu0 0
    %1282 = vmatprep.subr.bf16.mxu0 0
    %1283 = vmatpush1.bf16.msra.mxu0 0
    %1284 = vmatprep.mubr.bf16.mxu0 0
    %1285 = vmatmul.mubr.bf16.gmra.mrb[0].mxu0 %v313
    %v1286 = vpop.f32.mrb[0].mxu0
    %v1287 = vadd.f32 %v1158, %v1286
    %v1288 = vpop.f32.mrb[0].mxu0
    %v1289 = vpop.f32.mrb[0].mxu0
    %v1290 = vadd.f32 %v1161, %v1289
    %v1291 = vpop.f32.mrb[0].mxu0
    %1292 = vmatprep.mubr.bf16.mxu0 0
    %1293 = vmatmul.mubr.bf16.gmra.mrb[0].mxu0 %v314
    %v1294 = vpop.f32.mrb[0].mxu0
    %v1295 = vadd.f32 %v1166, %v1294
    %v1296 = vpop.f32.mrb[0].mxu0
    %v1297 = vpop.f32.mrb[0].mxu0
    %v1298 = vadd.f32 %v1169, %v1297
    %v1299 = vpop.f32.mrb[0].mxu0
    %1300 = vmatprep.mubr.bf16.mxu0 0
    %1301 = vmatmul.mubr.bf16.gmra.mrb[0].mxu0 %v315
    %v1302 = vpop.f32.mrb[0].mxu0
    %v1303 = vadd.f32 %v1174, %v1302
    %v1304 = vpop.f32.mrb[0].mxu0
    %v1305 = vpop.f32.mrb[0].mxu0
    %v1306 = vadd.f32 %v1177, %v1305
    %v1307 = vpop.f32.mrb[0].mxu0
    %1308 = vmatprep.mubr.bf16.mxu0 0
    %1309 = vmatmul.mubr.bf16.gmra.mrb[0].mxu0 %v316
    %v1310 = vpop.f32.mrb[0].mxu0
    %v1311 = vadd.f32 %v1182, %v1310
    %v1312 = vpop.f32.mrb[0].mxu0
    %v1313 = vpop.f32.mrb[0].mxu0
    %v1314 = vadd.f32 %v1185, %v1313
    %v1315 = vpop.f32.mrb[0].mxu0
    %1316 = vmatprep.mubr.bf16.mxu0 0
    %1317 = vmatmul.mubr.bf16.gmra.mrb[0].mxu0 %v317
    %v1318 = vpop.f32.mrb[0].mxu0
    %v1319 = vadd.f32 %v1190, %v1318
    %v1320 = vpop.f32.mrb[0].mxu0
    %v1321 = vpop.f32.mrb[0].mxu0
    %v1322 = vadd.f32 %v1193, %v1321
    %v1323 = vpop.f32.mrb[0].mxu0
    %1324 = vmatprep.mubr.bf16.mxu0 0
    %1325 = vmatmul.mubr.bf16.gmra.mrb[0].mxu0 %v318
    %v1326 = vpop.f32.mrb[0].mxu0
    %v1327 = vadd.f32 %v1198, %v1326
    %v1328 = vpop.f32.mrb[0].mxu0
    %v1329 = vpop.f32.mrb[0].mxu0
    %v1330 = vadd.f32 %v1201, %v1329
    %v1331 = vpop.f32.mrb[0].mxu0
    %1332 = vmatprep.mubr.bf16.mxu0 0
    %1333 = vmatmul.mubr.bf16.gmra.mrb[0].mxu0 %v319
    %v1334 = vpop.f32.mrb[0].mxu0
    %v1335 = vadd.f32 %v1206, %v1334
    %v1336 = vpop.f32.mrb[0].mxu0
    %v1337 = vpop.f32.mrb[0].mxu0
    %v1338 = vadd.f32 %v1209, %v1337
    %v1339 = vpop.f32.mrb[0].mxu0
    %1340 = vmatprep.mubr.bf16.mxu0 0
    %1341 = vmatmul.mubr.bf16.gmra.mrb[0].mxu0 %v320
    %v1342 = vpop.f32.mrb[0].mxu0
    %v1343 = vadd.f32 %v1214, %v1342
    %v1344 = vpop.f32.mrb[0].mxu0
    %v1345 = vpop.f32.mrb[0].mxu0
    %v1346 = vadd.f32 %v1217, %v1345
    %v1347 = vpop.f32.mrb[0].mxu0
    %1348 = vmatprep.mubr.bf16.mxu0 0
    %1349 = vmatmul.mubr.bf16.gmra.mrb[0].mxu0 %v321
    %v1350 = vpop.f32.mrb[0].mxu0
    %v1351 = vadd.f32 %v1222, %v1350
    %v1352 = vpop.f32.mrb[0].mxu0
    %v1353 = vpop.f32.mrb[0].mxu0
    %v1354 = vadd.f32 %v1225, %v1353
    %v1355 = vpop.f32.mrb[0].mxu0
    %1356 = vmatprep.mubr.bf16.mxu0 0
    %1357 = vmatmul.mubr.bf16.gmra.mrb[0].mxu0 %v322
    %v1358 = vpop.f32.mrb[0].mxu0
    %v1359 = vadd.f32 %v1230, %v1358
    %v1360 = vpop.f32.mrb[0].mxu0
    %v1361 = vpop.f32.mrb[0].mxu0
    %v1362 = vadd.f32 %v1233, %v1361
    %v1363 = vpop.f32.mrb[0].mxu0
    %1364 = vmatprep.mubr.bf16.mxu0 0
    %1365 = vmatmul.mubr.bf16.gmra.mrb[0].mxu0 %v323
    %v1366 = vpop.f32.mrb[0].mxu0
    %v1367 = vadd.f32 %v1238, %v1366
    %v1368 = vpop.f32.mrb[0].mxu0
    %v1369 = vpop.f32.mrb[0].mxu0
    %v1370 = vadd.f32 %v1241, %v1369
    %v1371 = vpop.f32.mrb[0].mxu0
    %1372 = vmatprep.mubr.bf16.mxu0 0
    %1373 = vmatmul.mubr.bf16.gmra.mrb[0].mxu0 %v324
    %v1374 = vpop.f32.mrb[0].mxu0
    %v1375 = vadd.f32 %v1246, %v1374
    %v1376 = vpop.f32.mrb[0].mxu0
    %v1377 = vpop.f32.mrb[0].mxu0
    %v1378 = vadd.f32 %v1249, %v1377
    %v1379 = vpop.f32.mrb[0].mxu0
    %1380 = vdwg.mxu0
    %v1381 = vld [vmem:[%s2] sm:$0x3f]
    %v1384 = vunpack.c.l.s4 1966171168
    %v1385 = vunpack.c.0.s8 %v1384
    %v1386 = vlaneseq
    %v1387 = vshrl.u32 %v1386, 7
    %v1388 = vsub.s32 %v1385, %v1387
    %v1389 = vrot.slane %v1381, %v1388
    %v1390 = vcombine.high %v1389, %v1389
    %v1391 = vlaneseq
    %v1392 = vshrl.u32 %v1391, 7
    %v1393 = vsub.s32 0, %v1392
    %v1394 = vrot.slane %v1389, %v1393
    %v1395 = vlaneseq
    %v1396 = vshrl.u32 %v1395, 7
    %v1397 = vsub.s32 1, %v1396
    %v1398 = vrot.slane %v1389, %v1397
    %v1399 = vlaneseq
    %v1400 = vshrl.u32 %v1399, 7
    %v1401 = vsub.s32 2, %v1400
    %v1402 = vrot.slane %v1389, %v1401
    %v1403 = vlaneseq
    %v1404 = vshrl.u32 %v1403, 7
    %v1405 = vsub.s32 0, %v1404
    %v1406 = vrot.slane %v1390, %v1405
    %v1407 = vlaneseq
    %v1408 = vshrl.u32 %v1407, 7
    %v1409 = vsub.s32 1, %v1408
    %v1410 = vrot.slane %v1390, %v1409
    %v1411 = vlaneseq
    %v1412 = vshrl.u32 %v1411, 7
    %v1413 = vsub.s32 2, %v1412
    %v1414 = vrot.slane %v1390, %v1413
    %v1421 = vadd.f32 %v1005, %v1394
    %v1422 = vadd.f32 %v1007, %v1398
    %v1423 = vadd.f32 %v1287, %v1402
    %v1424 = vadd.f32 %v1009, %v1406
    %v1425 = vadd.f32 %v1011, %v1410
    %v1426 = vadd.f32 %v1290, %v1414
    %v1427 = vadd.f32 %v1015, %v1394
    %v1428 = vadd.f32 %v1017, %v1398
    %v1429 = vadd.f32 %v1295, %v1402
    %v1430 = vadd.f32 %v1019, %v1406
    %v1431 = vadd.f32 %v1021, %v1410
    %v1432 = vadd.f32 %v1298, %v1414
    %v1433 = vadd.f32 %v1025, %v1394
    %v1434 = vadd.f32 %v1027, %v1398
    %v1435 = vadd.f32 %v1303, %v1402
    %v1436 = vadd.f32 %v1029, %v1406
    %v1437 = vadd.f32 %v1031, %v1410
    %v1438 = vadd.f32 %v1306, %v1414
    %v1439 = vadd.f32 %v1035, %v1394
    %v1440 = vadd.f32 %v1037, %v1398
    %v1441 = vadd.f32 %v1311, %v1402
    %v1442 = vadd.f32 %v1039, %v1406
    %v1443 = vadd.f32 %v1041, %v1410
    %v1444 = vadd.f32 %v1314, %v1414
    %v1445 = vadd.f32 %v1045, %v1394
    %v1446 = vadd.f32 %v1047, %v1398
    %v1447 = vadd.f32 %v1319, %v1402
    %v1448 = vadd.f32 %v1049, %v1406
    %v1449 = vadd.f32 %v1051, %v1410
    %v1450 = vadd.f32 %v1322, %v1414
    %v1451 = vadd.f32 %v1055, %v1394
    %v1452 = vadd.f32 %v1057, %v1398
    %v1453 = vadd.f32 %v1327, %v1402
    %v1454 = vadd.f32 %v1059, %v1406
    %v1455 = vadd.f32 %v1061, %v1410
    %v1456 = vadd.f32 %v1330, %v1414
    %v1457 = vadd.f32 %v1065, %v1394
    %v1458 = vadd.f32 %v1067, %v1398
    %v1459 = vadd.f32 %v1335, %v1402
    %v1460 = vadd.f32 %v1069, %v1406
    %v1461 = vadd.f32 %v1071, %v1410
    %v1462 = vadd.f32 %v1338, %v1414
    %v1463 = vadd.f32 %v1075, %v1394
    %v1464 = vadd.f32 %v1077, %v1398
    %v1465 = vadd.f32 %v1343, %v1402
    %v1466 = vadd.f32 %v1079, %v1406
    %v1467 = vadd.f32 %v1081, %v1410
    %v1468 = vadd.f32 %v1346, %v1414
    %v1469 = vadd.f32 %v1085, %v1394
    %v1470 = vadd.f32 %v1087, %v1398
    %v1471 = vadd.f32 %v1351, %v1402
    %v1472 = vadd.f32 %v1089, %v1406
    %v1473 = vadd.f32 %v1091, %v1410
    %v1474 = vadd.f32 %v1354, %v1414
    %v1475 = vadd.f32 %v1095, %v1394
    %v1476 = vadd.f32 %v1097, %v1398
    %v1477 = vadd.f32 %v1359, %v1402
    %v1478 = vadd.f32 %v1099, %v1406
    %v1479 = vadd.f32 %v1101, %v1410
    %v1480 = vadd.f32 %v1362, %v1414
    %v1481 = vadd.f32 %v1105, %v1394
    %v1482 = vadd.f32 %v1107, %v1398
    %v1483 = vadd.f32 %v1367, %v1402
    %v1484 = vadd.f32 %v1109, %v1406
    %v1485 = vadd.f32 %v1111, %v1410
    %v1486 = vadd.f32 %v1370, %v1414
    %v1487 = vadd.f32 %v1115, %v1394
    %v1488 = vadd.f32 %v1117, %v1398
    %v1489 = vadd.f32 %v1375, %v1402
    %v1490 = vadd.f32 %v1119, %v1406
    %v1491 = vadd.f32 %v1121, %v1410
    %v1492 = vadd.f32 %v1378, %v1414
    %v1493 = vmax.f32 %v1421, 0.0
    %v1494 = vmax.f32 %v1422, 0.0
    %v1495 = vmax.f32 %v1423, 0.0
    %v1496 = vmax.f32 %v1424, 0.0
    %v1497 = vmax.f32 %v1425, 0.0
    %v1498 = vmax.f32 %v1426, 0.0
    %v1499 = vmax.f32 %v1427, 0.0
    %v1500 = vmax.f32 %v1428, 0.0
    %v1501 = vmax.f32 %v1429, 0.0
    %v1502 = vmax.f32 %v1430, 0.0
    %v1503 = vmax.f32 %v1431, 0.0
    %v1504 = vmax.f32 %v1432, 0.0
    %v1505 = vmax.f32 %v1433, 0.0
    %v1506 = vmax.f32 %v1434, 0.0
    %v1507 = vmax.f32 %v1435, 0.0
    %v1508 = vmax.f32 %v1436, 0.0
    %v1509 = vmax.f32 %v1437, 0.0
    %v1510 = vmax.f32 %v1438, 0.0
    %v1511 = vmax.f32 %v1439, 0.0
    %v1512 = vmax.f32 %v1440, 0.0
    %v1513 = vmax.f32 %v1441, 0.0
    %v1514 = vmax.f32 %v1442, 0.0
    %v1515 = vmax.f32 %v1443, 0.0
    %v1516 = vmax.f32 %v1444, 0.0
    %v1517 = vmax.f32 %v1445, 0.0
    %v1518 = vmax.f32 %v1446, 0.0
    %v1519 = vmax.f32 %v1447, 0.0
    %v1520 = vmax.f32 %v1448, 0.0
    %v1521 = vmax.f32 %v1449, 0.0
    %v1522 = vmax.f32 %v1450, 0.0
    %v1523 = vmax.f32 %v1451, 0.0
    %v1524 = vmax.f32 %v1452, 0.0
    %v1525 = vmax.f32 %v1453, 0.0
    %v1526 = vmax.f32 %v1454, 0.0
    %v1527 = vmax.f32 %v1455, 0.0
    %v1528 = vmax.f32 %v1456, 0.0
    %v1529 = vmax.f32 %v1457, 0.0
    %v1530 = vmax.f32 %v1458, 0.0
    %v1531 = vmax.f32 %v1459, 0.0
    %v1532 = vmax.f32 %v1460, 0.0
    %v1533 = vmax.f32 %v1461, 0.0
    %v1534 = vmax.f32 %v1462, 0.0
    %v1535 = vmax.f32 %v1463, 0.0
    %v1536 = vmax.f32 %v1464, 0.0
    %v1537 = vmax.f32 %v1465, 0.0
    %v1538 = vmax.f32 %v1466, 0.0
    %v1539 = vmax.f32 %v1467, 0.0
    %v1540 = vmax.f32 %v1468, 0.0
    %v1541 = vmax.f32 %v1469, 0.0
    %v1542 = vmax.f32 %v1470, 0.0
    %v1543 = vmax.f32 %v1471, 0.0
    %v1544 = vmax.f32 %v1472, 0.0
    %v1545 = vmax.f32 %v1473, 0.0
    %v1546 = vmax.f32 %v1474, 0.0
    %v1547 = vmax.f32 %v1475, 0.0
    %v1548 = vmax.f32 %v1476, 0.0
    %v1549 = vmax.f32 %v1477, 0.0
    %v1550 = vmax.f32 %v1478, 0.0
    %v1551 = vmax.f32 %v1479, 0.0
    %v1552 = vmax.f32 %v1480, 0.0
    %v1553 = vmax.f32 %v1481, 0.0
    %v1554 = vmax.f32 %v1482, 0.0
    %v1555 = vmax.f32 %v1483, 0.0
    %v1556 = vmax.f32 %v1484, 0.0
    %v1557 = vmax.f32 %v1485, 0.0
    %v1558 = vmax.f32 %v1486, 0.0
    %v1559 = vmax.f32 %v1487, 0.0
    %v1560 = vmax.f32 %v1488, 0.0
    %v1561 = vmax.f32 %v1489, 0.0
    %v1562 = vmax.f32 %v1490, 0.0
    %v1563 = vmax.f32 %v1491, 0.0
    %v1564 = vmax.f32 %v1492, 0.0
    %v1565 = vpack.c.bf16 %v1496, %v1493
    %v1566 = vpack.c.bf16 %v1497, %v1494
    %v1567 = vpack.c.bf16 %v1498, %v1495
    %v1568 = vpack.c.bf16 %v1502, %v1499
    %v1569 = vpack.c.bf16 %v1503, %v1500
    %v1570 = vpack.c.bf16 %v1504, %v1501
    %v1571 = vpack.c.bf16 %v1508, %v1505
    %v1572 = vpack.c.bf16 %v1509, %v1506
    %v1573 = vpack.c.bf16 %v1510, %v1507
    %v1574 = vpack.c.bf16 %v1514, %v1511
    %v1575 = vpack.c.bf16 %v1515, %v1512
    %v1576 = vpack.c.bf16 %v1516, %v1513
    %v1577 = vpack.c.bf16 %v1520, %v1517
    %v1578 = vpack.c.bf16 %v1521, %v1518
    %v1579 = vpack.c.bf16 %v1522, %v1519
    %v1580 = vpack.c.bf16 %v1526, %v1523
    %v1581 = vpack.c.bf16 %v1527, %v1524
    %v1582 = vpack.c.bf16 %v1528, %v1525
    %v1583 = vpack.c.bf16 %v1532, %v1529
    %v1584 = vpack.c.bf16 %v1533, %v1530
    %v1585 = vpack.c.bf16 %v1534, %v1531
    %v1586 = vpack.c.bf16 %v1538, %v1535
    %v1587 = vpack.c.bf16 %v1539, %v1536
    %v1588 = vpack.c.bf16 %v1540, %v1537
    %v1589 = vpack.c.bf16 %v1544, %v1541
    %v1590 = vpack.c.bf16 %v1545, %v1542
    %v1591 = vpack.c.bf16 %v1546, %v1543
    %v1592 = vpack.c.bf16 %v1550, %v1547
    %v1593 = vpack.c.bf16 %v1551, %v1548
    %v1594 = vpack.c.bf16 %v1552, %v1549
    %v1595 = vpack.c.bf16 %v1556, %v1553
    %v1596 = vpack.c.bf16 %v1557, %v1554
    %v1597 = vpack.c.bf16 %v1558, %v1555
    %v1598 = vpack.c.bf16 %v1562, %v1559
    %v1599 = vpack.c.bf16 %v1563, %v1560
    %v1600 = vpack.c.bf16 %v1564, %v1561
    %1601 = vst [vmem:[#allocation2] sm:$0xff] %v1565
    %1602 = vst [vmem:[#allocation2 + $0x8] sm:$0xff] %v1566
    %1603 = vst [vmem:[#allocation2 + $0x10] sm:$0xff] %v1567
    %1604 = vst [vmem:[#allocation2 + $0x18] sm:$0xff] %v1568
    %1605 = vst [vmem:[#allocation2 + $0x20] sm:$0xff] %v1569
    %1606 = vst [vmem:[#allocation2 + $0x28] sm:$0xff] %v1570
    %1607 = vst [vmem:[#allocation2 + $0x30] sm:$0xff] %v1571
    %1608 = vst [vmem:[#allocation2 + $0x38] sm:$0xff] %v1572
    %1609 = vst [vmem:[#allocation2 + $0x40] sm:$0xff] %v1573
    %1610 = vst [vmem:[#allocation2 + $0x48] sm:$0xff] %v1574
    %1611 = vst [vmem:[#allocation2 + $0x50] sm:$0xff] %v1575
    %1612 = vst [vmem:[#allocation2 + $0x58] sm:$0xff] %v1576
    %1613 = vst [vmem:[#allocation2 + $0x60] sm:$0xff] %v1577
    %1614 = vst [vmem:[#allocation2 + $0x68] sm:$0xff] %v1578
    %1615 = vst [vmem:[#allocation2 + $0x70] sm:$0xff] %v1579
    %1616 = vst [vmem:[#allocation2 + $0x78] sm:$0xff] %v1580
    %1617 = vst [vmem:[#allocation2 + $0x80] sm:$0xff] %v1581
    %1618 = vst [vmem:[#allocation2 + $0x88] sm:$0xff] %v1582
    %1619 = vst [vmem:[#allocation2 + $0x90] sm:$0xff] %v1583
    %1620 = vst [vmem:[#allocation2 + $0x98] sm:$0xff] %v1584
    %1621 = vst [vmem:[#allocation2 + $0xa0] sm:$0xff] %v1585
    %1622 = vst [vmem:[#allocation2 + $0xa8] sm:$0xff] %v1586
    %1623 = vst [vmem:[#allocation2 + $0xb0] sm:$0xff] %v1587
    %1624 = vst [vmem:[#allocation2 + $0xb8] sm:$0xff] %v1588
    %1625 = vst [vmem:[#allocation2 + $0xc0] sm:$0xff] %v1589
    %1626 = vst [vmem:[#allocation2 + $0xc8] sm:$0xff] %v1590
    %1627 = vst [vmem:[#allocation2 + $0xd0] sm:$0xff] %v1591
    %1628 = vst [vmem:[#allocation2 + $0xd8] sm:$0xff] %v1592
    %1629 = vst [vmem:[#allocation2 + $0xe0] sm:$0xff] %v1593
    %1630 = vst [vmem:[#allocation2 + $0xe8] sm:$0xff] %v1594
    %1631 = vst [vmem:[#allocation2 + $0xf0] sm:$0xff] %v1595
    %1632 = vst [vmem:[#allocation2 + $0xf8] sm:$0xff] %v1596
    %1633 = vst [vmem:[#allocation2 + $0x100] sm:$0xff] %v1597
    %1634 = vst [vmem:[#allocation2 + $0x108] sm:$0xff] %v1598
    %1635 = vst [vmem:[#allocation2 + $0x110] sm:$0xff] %v1599
    %1636 = vst [vmem:[#allocation2 + $0x118] sm:$0xff] %v1600
    %v1637 = vld [vmem:[#allocation2] sm:$0xff]
    %v1638 = vld [vmem:[#allocation2 + $0x8] sm:$0xff]
    %v1639 = vld [vmem:[#allocation2 + $0x10] sm:$0xff]
    %v1640 = vld [vmem:[#allocation2 + $0x18] sm:$0xff]
    %v1641 = vld [vmem:[#allocation2 + $0x20] sm:$0xff]
    %v1642 = vld [vmem:[#allocation2 + $0x28] sm:$0xff]
    %v1643 = vld [vmem:[#allocation2 + $0x30] sm:$0xff]
    %v1644 = vld [vmem:[#allocation2 + $0x38] sm:$0xff]
    %v1645 = vld [vmem:[#allocation2 + $0x40] sm:$0xff]
    %v1646 = vld [vmem:[#allocation2 + $0x48] sm:$0xff]
    %v1647 = vld [vmem:[#allocation2 + $0x50] sm:$0xff]
    %v1648 = vld [vmem:[#allocation2 + $0x58] sm:$0xff]
    %v1649 = vld [vmem:[#allocation2 + $0x60] sm:$0xff]
    %v1650 = vld [vmem:[#allocation2 + $0x68] sm:$0xff]
    %v1651 = vld [vmem:[#allocation2 + $0x70] sm:$0xff]
    %v1652 = vld [vmem:[#allocation2 + $0x78] sm:$0xff]
    %v1653 = vld [vmem:[#allocation2 + $0x80] sm:$0xff]
    %v1654 = vld [vmem:[#allocation2 + $0x88] sm:$0xff]
    %v1655 = vld [vmem:[#allocation2 + $0x90] sm:$0xff]
    %v1656 = vld [vmem:[#allocation2 + $0x98] sm:$0xff]
    %v1657 = vld [vmem:[#allocation2 + $0xa0] sm:$0xff]
    %v1658 = vld [vmem:[#allocation2 + $0xa8] sm:$0xff]
    %v1659 = vld [vmem:[#allocation2 + $0xb0] sm:$0xff]
    %v1660 = vld [vmem:[#allocation2 + $0xb8] sm:$0xff]
    %s1661 = scalar_lea.vmem [#allocation2], 24
    %v1662 = vld [vmem:[%s1661] sm:$0xff]
    %v1663 = vld [vmem:[%s1661 + $0x8] sm:$0xff]
    %v1664 = vld [vmem:[%s1661 + $0x10] sm:$0xff]
    %v1665 = vld [vmem:[%s1661 + $0x18] sm:$0xff]
    %v1666 = vld [vmem:[%s1661 + $0x20] sm:$0xff]
    %v1667 = vld [vmem:[%s1661 + $0x28] sm:$0xff]
    %v1668 = vld [vmem:[%s1661 + $0x30] sm:$0xff]
    %v1669 = vld [vmem:[%s1661 + $0x38] sm:$0xff]
    %v1670 = vld [vmem:[%s1661 + $0x40] sm:$0xff]
    %v1671 = vld [vmem:[%s1661 + $0x48] sm:$0xff]
    %v1672 = vld [vmem:[%s1661 + $0x50] sm:$0xff]
    %v1673 = vld [vmem:[%s1661 + $0x58] sm:$0xff]
    %v1674 = vld [vmem:[%s1661 + $0x60] sm:$0xff]
    %v1675 = vld [vmem:[%s1661 + $0x68] sm:$0xff]
    %v1676 = vld [vmem:[%s1661 + $0x70] sm:$0xff]
    %v1677 = vld [vmem:[%s1661 + $0x78] sm:$0xff]
    %v1678 = vld [vmem:[%s1661 + $0x80] sm:$0xff]
    %v1679 = vld [vmem:[%s1661 + $0x88] sm:$0xff]
    %v1680 = vld [vmem:[%s1661 + $0x90] sm:$0xff]
    %v1681 = vld [vmem:[%s1661 + $0x98] sm:$0xff]
    %v1682 = vld [vmem:[%s1661 + $0xa0] sm:$0xff]
    %v1683 = vld [vmem:[%s1661 + $0xa8] sm:$0xff]
    %v1684 = vld [vmem:[%s1661 + $0xb0] sm:$0xff]
    %v1685 = vld [vmem:[%s1661 + $0xb8] sm:$0xff]
    %s1686 = scalar_lea.vmem [#allocation2], 48
    %v1687 = vld [vmem:[%s1686] sm:$0xff]
    %v1688 = vld [vmem:[%s1686 + $0x8] sm:$0xff]
    %v1689 = vld [vmem:[%s1686 + $0x10] sm:$0xff]
    %v1690 = vld [vmem:[%s1686 + $0x18] sm:$0xff]
    %v1691 = vld [vmem:[%s1686 + $0x20] sm:$0xff]
    %v1692 = vld [vmem:[%s1686 + $0x28] sm:$0xff]
    %v1693 = vld [vmem:[%s1686 + $0x30] sm:$0xff]
    %v1694 = vld [vmem:[%s1686 + $0x38] sm:$0xff]
    %v1695 = vld [vmem:[%s1686 + $0x40] sm:$0xff]
    %v1696 = vld [vmem:[%s1686 + $0x48] sm:$0xff]
    %v1697 = vld [vmem:[%s1686 + $0x50] sm:$0xff]
    %v1698 = vld [vmem:[%s1686 + $0x58] sm:$0xff]
    %v1699 = vld [vmem:[%s1686 + $0x60] sm:$0xff]
    %v1700 = vld [vmem:[%s1686 + $0x68] sm:$0xff]
    %v1701 = vld [vmem:[%s1686 + $0x70] sm:$0xff]
    %v1702 = vld [vmem:[%s1686 + $0x78] sm:$0xff]
    %v1703 = vld [vmem:[%s1686 + $0x80] sm:$0xff]
    %v1704 = vld [vmem:[%s1686 + $0x88] sm:$0xff]
    %v1705 = vld [vmem:[%s1686 + $0x90] sm:$0xff]
    %v1706 = vld [vmem:[%s1686 + $0x98] sm:$0xff]
    %v1707 = vld [vmem:[%s1686 + $0xa0] sm:$0xff]
    %v1708 = vld [vmem:[%s1686 + $0xa8] sm:$0xff]
    %v1709 = vld [vmem:[%s1686 + $0xb0] sm:$0xff]
    %v1710 = vld [vmem:[%s1686 + $0xb8] sm:$0xff]
    %s1711 = scalar_lea.vmem [#allocation2], 72
    %v1712 = vld [vmem:[%s1711] sm:$0xff]
    %v1713 = vld [vmem:[%s1711 + $0x8] sm:$0xff]
    %v1714 = vld [vmem:[%s1711 + $0x10] sm:$0xff]
    %v1715 = vld [vmem:[%s1711 + $0x18] sm:$0xff]
    %v1716 = vld [vmem:[%s1711 + $0x20] sm:$0xff]
    %v1717 = vld [vmem:[%s1711 + $0x28] sm:$0xff]
    %v1718 = vld [vmem:[%s1711 + $0x30] sm:$0xff]
    %v1719 = vld [vmem:[%s1711 + $0x38] sm:$0xff]
    %v1720 = vld [vmem:[%s1711 + $0x40] sm:$0xff]
    %v1721 = vld [vmem:[%s1711 + $0x48] sm:$0xff]
    %v1722 = vld [vmem:[%s1711 + $0x50] sm:$0xff]
    %v1723 = vld [vmem:[%s1711 + $0x58] sm:$0xff]
    %v1724 = vld [vmem:[%s1711 + $0x60] sm:$0xff]
    %v1725 = vld [vmem:[%s1711 + $0x68] sm:$0xff]
    %v1726 = vld [vmem:[%s1711 + $0x70] sm:$0xff]
    %v1727 = vld [vmem:[%s1711 + $0x78] sm:$0xff]
    %v1728 = vld [vmem:[%s1711 + $0x80] sm:$0xff]
    %v1729 = vld [vmem:[%s1711 + $0x88] sm:$0xff]
    %v1730 = vld [vmem:[%s1711 + $0x90] sm:$0xff]
    %v1731 = vld [vmem:[%s1711 + $0x98] sm:$0xff]
    %v1732 = vld [vmem:[%s1711 + $0xa0] sm:$0xff]
    %v1733 = vld [vmem:[%s1711 + $0xa8] sm:$0xff]
    %v1734 = vld [vmem:[%s1711 + $0xb0] sm:$0xff]
    %v1735 = vld [vmem:[%s1711 + $0xb8] sm:$0xff]
    %s1736 = scalar_lea.vmem [#allocation2], 96
    %v1737 = vld [vmem:[%s1736] sm:$0xff]
    %v1738 = vld [vmem:[%s1736 + $0x8] sm:$0xff]
    %v1739 = vld [vmem:[%s1736 + $0x10] sm:$0xff]
    %v1740 = vld [vmem:[%s1736 + $0x18] sm:$0xff]
    %v1741 = vld [vmem:[%s1736 + $0x20] sm:$0xff]
    %v1742 = vld [vmem:[%s1736 + $0x28] sm:$0xff]
    %v1743 = vld [vmem:[%s1736 + $0x30] sm:$0xff]
    %v1744 = vld [vmem:[%s1736 + $0x38] sm:$0xff]
    %v1745 = vld [vmem:[%s1736 + $0x40] sm:$0xff]
    %v1746 = vld [vmem:[%s1736 + $0x48] sm:$0xff]
    %v1747 = vld [vmem:[%s1736 + $0x50] sm:$0xff]
    %v1748 = vld [vmem:[%s1736 + $0x58] sm:$0xff]
    %v1749 = vld [vmem:[%s1736 + $0x60] sm:$0xff]
    %v1750 = vld [vmem:[%s1736 + $0x68] sm:$0xff]
    %v1751 = vld [vmem:[%s1736 + $0x70] sm:$0xff]
    %v1752 = vld [vmem:[%s1736 + $0x78] sm:$0xff]
    %v1753 = vld [vmem:[%s1736 + $0x80] sm:$0xff]
    %v1754 = vld [vmem:[%s1736 + $0x88] sm:$0xff]
    %v1755 = vld [vmem:[%s1736 + $0x90] sm:$0xff]
    %v1756 = vld [vmem:[%s1736 + $0x98] sm:$0xff]
    %v1757 = vld [vmem:[%s1736 + $0xa0] sm:$0xff]
    %v1758 = vld [vmem:[%s1736 + $0xa8] sm:$0xff]
    %v1759 = vld [vmem:[%s1736 + $0xb0] sm:$0xff]
    %v1760 = vld [vmem:[%s1736 + $0xb8] sm:$0xff]
    %v1761 = vld [vmem:[#allocation3] sm:$0xff]
    %v1762 = vld [vmem:[#allocation3 + $0x8] sm:$0xff]
    %v1763 = vld [vmem:[#allocation3 + $0x10] sm:$0xff]
    %v1764 = vld [vmem:[#allocation3 + $0x18] sm:$0xff]
    %v1765 = vld [vmem:[#allocation3 + $0x20] sm:$0xff]
    %v1766 = vld [vmem:[#allocation3 + $0x28] sm:$0xff]
    %v1767 = vld [vmem:[#allocation3 + $0x30] sm:$0xff]
    %v1768 = vld [vmem:[#allocation3 + $0x38] sm:$0xff]
    %v1769 = vld [vmem:[#allocation3 + $0x40] sm:$0xff]
    %v1770 = vld [vmem:[#allocation3 + $0x48] sm:$0xff]
    %v1771 = vld [vmem:[#allocation3 + $0x50] sm:$0xff]
    %v1772 = vld [vmem:[#allocation3 + $0x58] sm:$0xff]
    %v1773 = vld [vmem:[#allocation3 + $0x60] sm:$0xff]
    %v1774 = vld [vmem:[#allocation3 + $0x68] sm:$0xff]
    %v1775 = vld [vmem:[#allocation3 + $0x70] sm:$0xff]
    %v1776 = vld [vmem:[#allocation3 + $0x78] sm:$0xff]
    %v1777 = vld [vmem:[#allocation3 + $0x80] sm:$0xff]
    %v1778 = vld [vmem:[#allocation3 + $0x88] sm:$0xff]
    %v1779 = vld [vmem:[#allocation3 + $0x90] sm:$0xff]
    %v1780 = vld [vmem:[#allocation3 + $0x98] sm:$0xff]
    %v1781 = vld [vmem:[#allocation3 + $0xa0] sm:$0xff]
    %v1782 = vld [vmem:[#allocation3 + $0xa8] sm:$0xff]
    %v1783 = vld [vmem:[#allocation3 + $0xb0] sm:$0xff]
    %v1784 = vld [vmem:[#allocation3 + $0xb8] sm:$0xff]
    %v1785 = vld [vmem:[#allocation3 + $0xc0] sm:$0xff]
    %v1786 = vld [vmem:[#allocation3 + $0xc8] sm:$0xff]
    %v1787 = vld [vmem:[#allocation3 + $0xd0] sm:$0xff]
    %v1788 = vld [vmem:[#allocation3 + $0xd8] sm:$0xff]
    %v1789 = vld [vmem:[#allocation3 + $0xe0] sm:$0xff]
    %v1790 = vld [vmem:[#allocation3 + $0xe8] sm:$0xff]
    %v1791 = vld [vmem:[#allocation3 + $0xf0] sm:$0xff]
    %v1792 = vld [vmem:[#allocation3 + $0xf8] sm:$0xff]
    %v1793 = vld [vmem:[#allocation3 + $0x100] sm:$0xff]
    %v1794 = vld [vmem:[#allocation3 + $0x108] sm:$0xff]
    %v1795 = vld [vmem:[#allocation3 + $0x110] sm:$0xff]
    %v1796 = vld [vmem:[#allocation3 + $0x118] sm:$0xff]
    %v1797 = vld [vmem:[#allocation3 + $0x120] sm:$0xff]
    %v1798 = vld [vmem:[#allocation3 + $0x128] sm:$0xff]
    %v1799 = vld [vmem:[#allocation3 + $0x130] sm:$0xff]
    %v1800 = vld [vmem:[#allocation3 + $0x138] sm:$0xff]
    %v1801 = vld [vmem:[#allocation3 + $0x140] sm:$0xff]
    %v1802 = vld [vmem:[#allocation3 + $0x148] sm:$0xff]
    %v1803 = vld [vmem:[#allocation3 + $0x150] sm:$0xff]
    %v1804 = vld [vmem:[#allocation3 + $0x158] sm:$0xff]
    %v1805 = vld [vmem:[#allocation3 + $0x160] sm:$0xff]
    %v1806 = vld [vmem:[#allocation3 + $0x168] sm:$0xff]
    %v1807 = vld [vmem:[#allocation3 + $0x170] sm:$0xff]
    %v1808 = vld [vmem:[#allocation3 + $0x178] sm:$0xff]
    %v1809 = vld [vmem:[#allocation3 + $0x180] sm:$0xff]
    %v1810 = vld [vmem:[#allocation3 + $0x188] sm:$0xff]
    %v1811 = vld [vmem:[#allocation3 + $0x190] sm:$0xff]
    %v1812 = vld [vmem:[#allocation3 + $0x198] sm:$0xff]
    %v1813 = vld [vmem:[#allocation3 + $0x1a0] sm:$0xff]
    %v1814 = vld [vmem:[#allocation3 + $0x1a8] sm:$0xff]
    %v1815 = vld [vmem:[#allocation3 + $0x1b0] sm:$0xff]
    %v1816 = vld [vmem:[#allocation3 + $0x1b8] sm:$0xff]
    %v1817 = vld [vmem:[#allocation3 + $0x1c0] sm:$0xff]
    %v1818 = vld [vmem:[#allocation3 + $0x1c8] sm:$0xff]
    %v1819 = vld [vmem:[#allocation3 + $0x1d0] sm:$0xff]
    %v1820 = vld [vmem:[#allocation3 + $0x1d8] sm:$0xff]
    %v1821 = vld [vmem:[#allocation3 + $0x1e0] sm:$0xff]
    %v1822 = vld [vmem:[#allocation3 + $0x1e8] sm:$0xff]
    %v1823 = vld [vmem:[#allocation3 + $0x1f0] sm:$0xff]
    %v1824 = vld [vmem:[#allocation3 + $0x1f8] sm:$0xff]
    %v1825 = vld [vmem:[#allocation3 + $0x200] sm:$0xff]
    %v1826 = vld [vmem:[#allocation3 + $0x208] sm:$0xff]
    %v1827 = vld [vmem:[#allocation3 + $0x210] sm:$0xff]
    %v1828 = vld [vmem:[#allocation3 + $0x218] sm:$0xff]
    %v1829 = vld [vmem:[#allocation3 + $0x220] sm:$0xff]
    %v1830 = vld [vmem:[#allocation3 + $0x228] sm:$0xff]
    %v1831 = vld [vmem:[#allocation3 + $0x230] sm:$0xff]
    %v1832 = vld [vmem:[#allocation3 + $0x238] sm:$0xff]
    %v1833 = vld [vmem:[#allocation3 + $0x240] sm:$0xff]
    %v1834 = vld [vmem:[#allocation3 + $0x248] sm:$0xff]
    %v1835 = vld [vmem:[#allocation3 + $0x250] sm:$0xff]
    %v1836 = vld [vmem:[#allocation3 + $0x258] sm:$0xff]
    %v1837 = vld [vmem:[#allocation3 + $0x260] sm:$0xff]
    %v1838 = vld [vmem:[#allocation3 + $0x268] sm:$0xff]
    %v1839 = vld [vmem:[#allocation3 + $0x270] sm:$0xff]
    %v1840 = vld [vmem:[#allocation3 + $0x278] sm:$0xff]
    %v1841 = vld [vmem:[#allocation3 + $0x280] sm:$0xff]
    %v1842 = vld [vmem:[#allocation3 + $0x288] sm:$0xff]
    %v1843 = vld [vmem:[#allocation3 + $0x290] sm:$0xff]
    %v1844 = vld [vmem:[#allocation3 + $0x298] sm:$0xff]
    %v1845 = vld [vmem:[#allocation3 + $0x2a0] sm:$0xff]
    %v1846 = vld [vmem:[#allocation3 + $0x2a8] sm:$0xff]
    %v1847 = vld [vmem:[#allocation3 + $0x2b0] sm:$0xff]
    %v1848 = vld [vmem:[#allocation3 + $0x2b8] sm:$0xff]
    %v1849 = vld [vmem:[#allocation3 + $0x2c0] sm:$0xff]
    %v1850 = vld [vmem:[#allocation3 + $0x2c8] sm:$0xff]
    %v1851 = vld [vmem:[#allocation3 + $0x2d0] sm:$0xff]
    %v1852 = vld [vmem:[#allocation3 + $0x2d8] sm:$0xff]
    %v1853 = vld [vmem:[#allocation3 + $0x2e0] sm:$0xff]
    %v1854 = vld [vmem:[#allocation3 + $0x2e8] sm:$0xff]
    %v1855 = vld [vmem:[#allocation3 + $0x2f0] sm:$0xff]
    %v1856 = vld [vmem:[#allocation3 + $0x2f8] sm:$0xff]
    %v1857 = vld [vmem:[#allocation3 + $0x300] sm:$0xff]
    %v1858 = vld [vmem:[#allocation3 + $0x308] sm:$0xff]
    %v1859 = vld [vmem:[#allocation3 + $0x310] sm:$0xff]
    %v1860 = vld [vmem:[#allocation3 + $0x318] sm:$0xff]
    %v1861 = vld [vmem:[#allocation3 + $0x320] sm:$0xff]
    %v1862 = vld [vmem:[#allocation3 + $0x328] sm:$0xff]
    %v1863 = vld [vmem:[#allocation3 + $0x330] sm:$0xff]
    %v1864 = vld [vmem:[#allocation3 + $0x338] sm:$0xff]
    %v1865 = vld [vmem:[#allocation3 + $0x340] sm:$0xff]
    %v1866 = vld [vmem:[#allocation3 + $0x348] sm:$0xff]
    %v1867 = vld [vmem:[#allocation3 + $0x350] sm:$0xff]
    %v1868 = vld [vmem:[#allocation3 + $0x358] sm:$0xff]
    %v1869 = vld [vmem:[#allocation3 + $0x360] sm:$0xff]
    %v1870 = vld [vmem:[#allocation3 + $0x368] sm:$0xff]
    %v1871 = vld [vmem:[#allocation3 + $0x370] sm:$0xff]
    %v1872 = vld [vmem:[#allocation3 + $0x378] sm:$0xff]
    %v1873 = vld [vmem:[#allocation3 + $0x380] sm:$0xff]
    %v1874 = vld [vmem:[#allocation3 + $0x388] sm:$0xff]
    %v1875 = vld [vmem:[#allocation3 + $0x390] sm:$0xff]
    %v1876 = vld [vmem:[#allocation3 + $0x398] sm:$0xff]
    %v1877 = vld [vmem:[#allocation3 + $0x3a0] sm:$0xff]
    %v1878 = vld [vmem:[#allocation3 + $0x3a8] sm:$0xff]
    %v1879 = vld [vmem:[#allocation3 + $0x3b0] sm:$0xff]
    %v1880 = vld [vmem:[#allocation3 + $0x3b8] sm:$0xff]
    %v1881 = vld [vmem:[#allocation3 + $0x3c0] sm:$0xff]
    %v1882 = vld [vmem:[#allocation3 + $0x3c8] sm:$0xff]
    %v1883 = vld [vmem:[#allocation3 + $0x3d0] sm:$0xff]
    %v1884 = vld [vmem:[#allocation3 + $0x3d8] sm:$0xff]
    %v1885 = vld [vmem:[#allocation3 + $0x3e0] sm:$0xff]
    %v1886 = vld [vmem:[#allocation3 + $0x3e8] sm:$0xff]
    %v1887 = vld [vmem:[#allocation3 + $0x3f0] sm:$0xff]
    %v1888 = vld [vmem:[#allocation3 + $0x3f8] sm:$0xff]
    %v1889 = vld [vmem:[#allocation3 + $0x400] sm:$0xff]
    %v1890 = vld [vmem:[#allocation3 + $0x408] sm:$0xff]
    %v1891 = vld [vmem:[#allocation3 + $0x410] sm:$0xff]
    %v1892 = vld [vmem:[#allocation3 + $0x418] sm:$0xff]
    %v1893 = vld [vmem:[#allocation3 + $0x420] sm:$0xff]
    %v1894 = vld [vmem:[#allocation3 + $0x428] sm:$0xff]
    %v1895 = vld [vmem:[#allocation3 + $0x430] sm:$0xff]
    %v1896 = vld [vmem:[#allocation3 + $0x438] sm:$0xff]
    %v1897 = vld [vmem:[#allocation3 + $0x440] sm:$0xff]
    %v1898 = vld [vmem:[#allocation3 + $0x448] sm:$0xff]
    %v1899 = vld [vmem:[#allocation3 + $0x450] sm:$0xff]
    %v1900 = vld [vmem:[#allocation3 + $0x458] sm:$0xff]
    %v1901 = vld [vmem:[#allocation3 + $0x460] sm:$0xff]
    %v1902 = vld [vmem:[#allocation3 + $0x468] sm:$0xff]
    %v1903 = vld [vmem:[#allocation3 + $0x470] sm:$0xff]
    %v1904 = vld [vmem:[#allocation3 + $0x478] sm:$0xff]
    %v1905 = vld [vmem:[#allocation3 + $0x480] sm:$0xff]
    %v1906 = vld [vmem:[#allocation3 + $0x488] sm:$0xff]
    %v1907 = vld [vmem:[#allocation3 + $0x490] sm:$0xff]
    %v1908 = vld [vmem:[#allocation3 + $0x498] sm:$0xff]
    %v1909 = vld [vmem:[#allocation3 + $0x4a0] sm:$0xff]
    %v1910 = vld [vmem:[#allocation3 + $0x4a8] sm:$0xff]
    %v1911 = vld [vmem:[#allocation3 + $0x4b0] sm:$0xff]
    %v1912 = vld [vmem:[#allocation3 + $0x4b8] sm:$0xff]
    %v1913 = vld [vmem:[#allocation3 + $0x4c0] sm:$0xff]
    %v1914 = vld [vmem:[#allocation3 + $0x4c8] sm:$0xff]
    %v1915 = vld [vmem:[#allocation3 + $0x4d0] sm:$0xff]
    %v1916 = vld [vmem:[#allocation3 + $0x4d8] sm:$0xff]
    %v1917 = vld [vmem:[#allocation3 + $0x4e0] sm:$0xff]
    %v1918 = vld [vmem:[#allocation3 + $0x4e8] sm:$0xff]
    %v1919 = vld [vmem:[#allocation3 + $0x4f0] sm:$0xff]
    %v1920 = vld [vmem:[#allocation3 + $0x4f8] sm:$0xff]
    %v1921 = vld [vmem:[#allocation3 + $0x500] sm:$0xff]
    %v1922 = vld [vmem:[#allocation3 + $0x508] sm:$0xff]
    %v1923 = vld [vmem:[#allocation3 + $0x510] sm:$0xff]
    %v1924 = vld [vmem:[#allocation3 + $0x518] sm:$0xff]
    %v1925 = vld [vmem:[#allocation3 + $0x520] sm:$0xff]
    %v1926 = vld [vmem:[#allocation3 + $0x528] sm:$0xff]
    %v1927 = vld [vmem:[#allocation3 + $0x530] sm:$0xff]
    %v1928 = vld [vmem:[#allocation3 + $0x538] sm:$0xff]
    %v1929 = vld [vmem:[#allocation3 + $0x540] sm:$0xff]
    %v1930 = vld [vmem:[#allocation3 + $0x548] sm:$0xff]
    %v1931 = vld [vmem:[#allocation3 + $0x550] sm:$0xff]
    %v1932 = vld [vmem:[#allocation3 + $0x558] sm:$0xff]
    %v1933 = vld [vmem:[#allocation3 + $0x560] sm:$0xff]
    %v1934 = vld [vmem:[#allocation3 + $0x568] sm:$0xff]
    %v1935 = vld [vmem:[#allocation3 + $0x570] sm:$0xff]
    %v1936 = vld [vmem:[#allocation3 + $0x578] sm:$0xff]
    %v1937 = vld [vmem:[#allocation3 + $0x580] sm:$0xff]
    %v1938 = vld [vmem:[#allocation3 + $0x588] sm:$0xff]
    %v1939 = vld [vmem:[#allocation3 + $0x590] sm:$0xff]
    %v1940 = vld [vmem:[#allocation3 + $0x598] sm:$0xff]
    %v1941 = vld [vmem:[#allocation3 + $0x5a0] sm:$0xff]
    %v1942 = vld [vmem:[#allocation3 + $0x5a8] sm:$0xff]
    %v1943 = vld [vmem:[#allocation3 + $0x5b0] sm:$0xff]
    %v1944 = vld [vmem:[#allocation3 + $0x5b8] sm:$0xff]
    %v1945 = vld [vmem:[#allocation3 + $0x5c0] sm:$0xff]
    %v1946 = vld [vmem:[#allocation3 + $0x5c8] sm:$0xff]
    %v1947 = vld [vmem:[#allocation3 + $0x5d0] sm:$0xff]
    %v1948 = vld [vmem:[#allocation3 + $0x5d8] sm:$0xff]
    %v1949 = vld [vmem:[#allocation3 + $0x5e0] sm:$0xff]
    %v1950 = vld [vmem:[#allocation3 + $0x5e8] sm:$0xff]
    %v1951 = vld [vmem:[#allocation3 + $0x5f0] sm:$0xff]
    %v1952 = vld [vmem:[#allocation3 + $0x5f8] sm:$0xff]
    %v1953 = vld [vmem:[#allocation3 + $0x600] sm:$0xff]
    %v1954 = vld [vmem:[#allocation3 + $0x608] sm:$0xff]
    %v1955 = vld [vmem:[#allocation3 + $0x610] sm:$0xff]
    %v1956 = vld [vmem:[#allocation3 + $0x618] sm:$0xff]
    %v1957 = vld [vmem:[#allocation3 + $0x620] sm:$0xff]
    %v1958 = vld [vmem:[#allocation3 + $0x628] sm:$0xff]
    %v1959 = vld [vmem:[#allocation3 + $0x630] sm:$0xff]
    %v1960 = vld [vmem:[#allocation3 + $0x638] sm:$0xff]
    %v1961 = vld [vmem:[#allocation3 + $0x640] sm:$0xff]
    %v1962 = vld [vmem:[#allocation3 + $0x648] sm:$0xff]
    %v1963 = vld [vmem:[#allocation3 + $0x650] sm:$0xff]
    %v1964 = vld [vmem:[#allocation3 + $0x658] sm:$0xff]
    %v1965 = vld [vmem:[#allocation3 + $0x660] sm:$0xff]
    %v1966 = vld [vmem:[#allocation3 + $0x668] sm:$0xff]
    %v1967 = vld [vmem:[#allocation3 + $0x670] sm:$0xff]
    %v1968 = vld [vmem:[#allocation3 + $0x678] sm:$0xff]
    %v1969 = vld [vmem:[#allocation3 + $0x680] sm:$0xff]
    %v1970 = vld [vmem:[#allocation3 + $0x688] sm:$0xff]
    %v1971 = vld [vmem:[#allocation3 + $0x690] sm:$0xff]
    %v1972 = vld [vmem:[#allocation3 + $0x698] sm:$0xff]
    %v1973 = vld [vmem:[#allocation3 + $0x6a0] sm:$0xff]
    %v1974 = vld [vmem:[#allocation3 + $0x6a8] sm:$0xff]
    %v1975 = vld [vmem:[#allocation3 + $0x6b0] sm:$0xff]
    %v1976 = vld [vmem:[#allocation3 + $0x6b8] sm:$0xff]
    %v1977 = vld [vmem:[#allocation3 + $0x6c0] sm:$0xff]
    %v1978 = vld [vmem:[#allocation3 + $0x6c8] sm:$0xff]
    %v1979 = vld [vmem:[#allocation3 + $0x6d0] sm:$0xff]
    %v1980 = vld [vmem:[#allocation3 + $0x6d8] sm:$0xff]
    %v1981 = vld [vmem:[#allocation3 + $0x6e0] sm:$0xff]
    %v1982 = vld [vmem:[#allocation3 + $0x6e8] sm:$0xff]
    %v1983 = vld [vmem:[#allocation3 + $0x6f0] sm:$0xff]
    %v1984 = vld [vmem:[#allocation3 + $0x6f8] sm:$0xff]
    %v1985 = vld [vmem:[#allocation3 + $0x700] sm:$0xff]
    %v1986 = vld [vmem:[#allocation3 + $0x708] sm:$0xff]
    %v1987 = vld [vmem:[#allocation3 + $0x710] sm:$0xff]
    %v1988 = vld [vmem:[#allocation3 + $0x718] sm:$0xff]
    %v1989 = vld [vmem:[#allocation3 + $0x720] sm:$0xff]
    %v1990 = vld [vmem:[#allocation3 + $0x728] sm:$0xff]
    %v1991 = vld [vmem:[#allocation3 + $0x730] sm:$0xff]
    %v1992 = vld [vmem:[#allocation3 + $0x738] sm:$0xff]
    %v1993 = vld [vmem:[#allocation3 + $0x740] sm:$0xff]
    %v1994 = vld [vmem:[#allocation3 + $0x748] sm:$0xff]
    %v1995 = vld [vmem:[#allocation3 + $0x750] sm:$0xff]
    %v1996 = vld [vmem:[#allocation3 + $0x758] sm:$0xff]
    %v1997 = vld [vmem:[#allocation3 + $0x760] sm:$0xff]
    %v1998 = vld [vmem:[#allocation3 + $0x768] sm:$0xff]
    %v1999 = vld [vmem:[#allocation3 + $0x770] sm:$0xff]
    %v2000 = vld [vmem:[#allocation3 + $0x778] sm:$0xff]
    %v2241 = vunpack.c.l.b16 %v1761
    %v2242 = vunpack.c.h.b16 %v1761
    %v2243 = vunpack.c.l.b16 %v1762
    %v2244 = vunpack.c.h.b16 %v1762
    %v2245 = vunpack.c.l.b16 %v1763
    %v2246 = vunpack.c.h.b16 %v1763
    %v2247 = vunpack.c.l.b16 %v1764
    %v2248 = vunpack.c.h.b16 %v1764
    %v2249 = vunpack.c.l.b16 %v1765
    %v2250 = vunpack.c.h.b16 %v1765
    %v2251 = vunpack.c.l.b16 %v1766
    %v2252 = vunpack.c.h.b16 %v1766
    %v2253 = vunpack.c.l.b16 %v1767
    %v2254 = vunpack.c.h.b16 %v1767
    %v2255 = vunpack.c.l.b16 %v1768
    %v2256 = vunpack.c.h.b16 %v1768
    %v2257 = vunpack.c.l.b16 %v1769
    %v2258 = vunpack.c.h.b16 %v1769
    %v2259 = vunpack.c.l.b16 %v1770
    %v2260 = vunpack.c.h.b16 %v1770
    %v2261 = vunpack.c.l.b16 %v1771
    %v2262 = vunpack.c.h.b16 %v1771
    %v2263 = vunpack.c.l.b16 %v1772
    %v2264 = vunpack.c.h.b16 %v1772
    %v2265 = vunpack.c.l.b16 %v1773
    %v2266 = vunpack.c.h.b16 %v1773
    %v2267 = vunpack.c.l.b16 %v1774
    %v2268 = vunpack.c.h.b16 %v1774
    %v2269 = vunpack.c.l.b16 %v1775
    %v2270 = vunpack.c.h.b16 %v1775
    %v2271 = vunpack.c.l.b16 %v1776
    %v2272 = vunpack.c.h.b16 %v1776
    %v2273 = vunpack.c.l.b16 %v1777
    %v2274 = vunpack.c.h.b16 %v1777
    %v2275 = vunpack.c.l.b16 %v1778
    %v2276 = vunpack.c.h.b16 %v1778
    %v2277 = vunpack.c.l.b16 %v1779
    %v2278 = vunpack.c.h.b16 %v1779
    %v2279 = vunpack.c.l.b16 %v1780
    %v2280 = vunpack.c.h.b16 %v1780
    %v2281 = vunpack.c.l.b16 %v1781
    %v2282 = vunpack.c.h.b16 %v1781
    %v2283 = vunpack.c.l.b16 %v1782
    %v2284 = vunpack.c.h.b16 %v1782
    %v2285 = vunpack.c.l.b16 %v1783
    %v2286 = vunpack.c.h.b16 %v1783
    %v2287 = vunpack.c.l.b16 %v1784
    %v2288 = vunpack.c.h.b16 %v1784
    %v2289 = vunpack.c.l.b16 %v1785
    %v2290 = vunpack.c.h.b16 %v1785
    %v2291 = vunpack.c.l.b16 %v1786
    %v2292 = vunpack.c.h.b16 %v1786
    %v2293 = vunpack.c.l.b16 %v1787
    %v2294 = vunpack.c.h.b16 %v1787
    %v2295 = vunpack.c.l.b16 %v1788
    %v2296 = vunpack.c.h.b16 %v1788
    %v2297 = vunpack.c.l.b16 %v1789
    %v2298 = vunpack.c.h.b16 %v1789
    %v2299 = vunpack.c.l.b16 %v1790
    %v2300 = vunpack.c.h.b16 %v1790
    %v2301 = vunpack.c.l.b16 %v1791
    %v2302 = vunpack.c.h.b16 %v1791
    %v2303 = vunpack.c.l.b16 %v1792
    %v2304 = vunpack.c.h.b16 %v1792
    %v2305 = vunpack.c.l.b16 %v1793
    %v2306 = vunpack.c.h.b16 %v1793
    %v2307 = vunpack.c.l.b16 %v1794
    %v2308 = vunpack.c.h.b16 %v1794
    %v2309 = vunpack.c.l.b16 %v1795
    %v2310 = vunpack.c.h.b16 %v1795
    %v2311 = vunpack.c.l.b16 %v1796
    %v2312 = vunpack.c.h.b16 %v1796
    %v2313 = vunpack.c.l.b16 %v1797
    %v2314 = vunpack.c.h.b16 %v1797
    %v2315 = vunpack.c.l.b16 %v1798
    %v2316 = vunpack.c.h.b16 %v1798
    %v2317 = vunpack.c.l.b16 %v1799
    %v2318 = vunpack.c.h.b16 %v1799
    %v2319 = vunpack.c.l.b16 %v1800
    %v2320 = vunpack.c.h.b16 %v1800
    %v2321 = vunpack.c.l.b16 %v1801
    %v2322 = vunpack.c.h.b16 %v1801
    %v2323 = vunpack.c.l.b16 %v1802
    %v2324 = vunpack.c.h.b16 %v1802
    %v2325 = vunpack.c.l.b16 %v1803
    %v2326 = vunpack.c.h.b16 %v1803
    %v2327 = vunpack.c.l.b16 %v1804
    %v2328 = vunpack.c.h.b16 %v1804
    %v2329 = vunpack.c.l.b16 %v1805
    %v2330 = vunpack.c.h.b16 %v1805
    %v2331 = vunpack.c.l.b16 %v1806
    %v2332 = vunpack.c.h.b16 %v1806
    %v2333 = vunpack.c.l.b16 %v1807
    %v2334 = vunpack.c.h.b16 %v1807
    %v2335 = vunpack.c.l.b16 %v1808
    %v2336 = vunpack.c.h.b16 %v1808
    %v2337 = vunpack.c.l.b16 %v1809
    %v2338 = vunpack.c.h.b16 %v1809
    %v2339 = vunpack.c.l.b16 %v1810
    %v2340 = vunpack.c.h.b16 %v1810
    %v2341 = vunpack.c.l.b16 %v1811
    %v2342 = vunpack.c.h.b16 %v1811
    %v2343 = vunpack.c.l.b16 %v1812
    %v2344 = vunpack.c.h.b16 %v1812
    %v2345 = vunpack.c.l.b16 %v1813
    %v2346 = vunpack.c.h.b16 %v1813
    %v2347 = vunpack.c.l.b16 %v1814
    %v2348 = vunpack.c.h.b16 %v1814
    %v2349 = vunpack.c.l.b16 %v1815
    %v2350 = vunpack.c.h.b16 %v1815
    %v2351 = vunpack.c.l.b16 %v1816
    %v2352 = vunpack.c.h.b16 %v1816
    %v2353 = vunpack.c.l.b16 %v1817
    %v2354 = vunpack.c.h.b16 %v1817
    %v2355 = vunpack.c.l.b16 %v1818
    %v2356 = vunpack.c.h.b16 %v1818
    %v2357 = vunpack.c.l.b16 %v1819
    %v2358 = vunpack.c.h.b16 %v1819
    %v2359 = vunpack.c.l.b16 %v1820
    %v2360 = vunpack.c.h.b16 %v1820
    %v2361 = vunpack.c.l.b16 %v1821
    %v2362 = vunpack.c.h.b16 %v1821
    %v2363 = vunpack.c.l.b16 %v1822
    %v2364 = vunpack.c.h.b16 %v1822
    %v2365 = vunpack.c.l.b16 %v1823
    %v2366 = vunpack.c.h.b16 %v1823
    %v2367 = vunpack.c.l.b16 %v1824
    %v2368 = vunpack.c.h.b16 %v1824
    %v2369 = vunpack.c.l.b16 %v1825
    %v2370 = vunpack.c.h.b16 %v1825
    %v2371 = vunpack.c.l.b16 %v1826
    %v2372 = vunpack.c.h.b16 %v1826
    %v2373 = vunpack.c.l.b16 %v1827
    %v2374 = vunpack.c.h.b16 %v1827
    %v2375 = vunpack.c.l.b16 %v1828
    %v2376 = vunpack.c.h.b16 %v1828
    %v2377 = vunpack.c.l.b16 %v1829
    %v2378 = vunpack.c.h.b16 %v1829
    %v2379 = vunpack.c.l.b16 %v1830
    %v2380 = vunpack.c.h.b16 %v1830
    %v2381 = vunpack.c.l.b16 %v1831
    %v2382 = vunpack.c.h.b16 %v1831
    %v2383 = vunpack.c.l.b16 %v1832
    %v2384 = vunpack.c.h.b16 %v1832
    %v2385 = vunpack.c.l.b16 %v1833
    %v2386 = vunpack.c.h.b16 %v1833
    %v2387 = vunpack.c.l.b16 %v1834
    %v2388 = vunpack.c.h.b16 %v1834
    %v2389 = vunpack.c.l.b16 %v1835
    %v2390 = vunpack.c.h.b16 %v1835
    %v2391 = vunpack.c.l.b16 %v1836
    %v2392 = vunpack.c.h.b16 %v1836
    %v2393 = vunpack.c.l.b16 %v1837
    %v2394 = vunpack.c.h.b16 %v1837
    %v2395 = vunpack.c.l.b16 %v1838
    %v2396 = vunpack.c.h.b16 %v1838
    %v2397 = vunpack.c.l.b16 %v1839
    %v2398 = vunpack.c.h.b16 %v1839
    %v2399 = vunpack.c.l.b16 %v1840
    %v2400 = vunpack.c.h.b16 %v1840
    %v2401 = vunpack.c.l.b16 %v1841
    %v2402 = vunpack.c.h.b16 %v1841
    %v2403 = vunpack.c.l.b16 %v1842
    %v2404 = vunpack.c.h.b16 %v1842
    %v2405 = vunpack.c.l.b16 %v1843
    %v2406 = vunpack.c.h.b16 %v1843
    %v2407 = vunpack.c.l.b16 %v1844
    %v2408 = vunpack.c.h.b16 %v1844
    %v2409 = vunpack.c.l.b16 %v1845
    %v2410 = vunpack.c.h.b16 %v1845
    %v2411 = vunpack.c.l.b16 %v1846
    %v2412 = vunpack.c.h.b16 %v1846
    %v2413 = vunpack.c.l.b16 %v1847
    %v2414 = vunpack.c.h.b16 %v1847
    %v2415 = vunpack.c.l.b16 %v1848
    %v2416 = vunpack.c.h.b16 %v1848
    %v2417 = vunpack.c.l.b16 %v1849
    %v2418 = vunpack.c.h.b16 %v1849
    %v2419 = vunpack.c.l.b16 %v1850
    %v2420 = vunpack.c.h.b16 %v1850
    %v2421 = vunpack.c.l.b16 %v1851
    %v2422 = vunpack.c.h.b16 %v1851
    %v2423 = vunpack.c.l.b16 %v1852
    %v2424 = vunpack.c.h.b16 %v1852
    %v2425 = vunpack.c.l.b16 %v1853
    %v2426 = vunpack.c.h.b16 %v1853
    %v2427 = vunpack.c.l.b16 %v1854
    %v2428 = vunpack.c.h.b16 %v1854
    %v2429 = vunpack.c.l.b16 %v1855
    %v2430 = vunpack.c.h.b16 %v1855
    %v2431 = vunpack.c.l.b16 %v1856
    %v2432 = vunpack.c.h.b16 %v1856
    %v2433 = vunpack.c.l.b16 %v1857
    %v2434 = vunpack.c.h.b16 %v1857
    %v2435 = vunpack.c.l.b16 %v1858
    %v2436 = vunpack.c.h.b16 %v1858
    %v2437 = vunpack.c.l.b16 %v1859
    %v2438 = vunpack.c.h.b16 %v1859
    %v2439 = vunpack.c.l.b16 %v1860
    %v2440 = vunpack.c.h.b16 %v1860
    %v2441 = vunpack.c.l.b16 %v1861
    %v2442 = vunpack.c.h.b16 %v1861
    %v2443 = vunpack.c.l.b16 %v1862
    %v2444 = vunpack.c.h.b16 %v1862
    %v2445 = vunpack.c.l.b16 %v1863
    %v2446 = vunpack.c.h.b16 %v1863
    %v2447 = vunpack.c.l.b16 %v1864
    %v2448 = vunpack.c.h.b16 %v1864
    %v2449 = vunpack.c.l.b16 %v1865
    %v2450 = vunpack.c.h.b16 %v1865
    %v2451 = vunpack.c.l.b16 %v1866
    %v2452 = vunpack.c.h.b16 %v1866
    %v2453 = vunpack.c.l.b16 %v1867
    %v2454 = vunpack.c.h.b16 %v1867
    %v2455 = vunpack.c.l.b16 %v1868
    %v2456 = vunpack.c.h.b16 %v1868
    %v2457 = vunpack.c.l.b16 %v1869
    %v2458 = vunpack.c.h.b16 %v1869
    %v2459 = vunpack.c.l.b16 %v1870
    %v2460 = vunpack.c.h.b16 %v1870
    %v2461 = vunpack.c.l.b16 %v1871
    %v2462 = vunpack.c.h.b16 %v1871
    %v2463 = vunpack.c.l.b16 %v1872
    %v2464 = vunpack.c.h.b16 %v1872
    %v2465 = vunpack.c.l.b16 %v1873
    %v2466 = vunpack.c.h.b16 %v1873
    %v2467 = vunpack.c.l.b16 %v1874
    %v2468 = vunpack.c.h.b16 %v1874
    %v2469 = vunpack.c.l.b16 %v1875
    %v2470 = vunpack.c.h.b16 %v1875
    %v2471 = vunpack.c.l.b16 %v1876
    %v2472 = vunpack.c.h.b16 %v1876
    %v2473 = vunpack.c.l.b16 %v1877
    %v2474 = vunpack.c.h.b16 %v1877
    %v2475 = vunpack.c.l.b16 %v1878
    %v2476 = vunpack.c.h.b16 %v1878
    %v2477 = vunpack.c.l.b16 %v1879
    %v2478 = vunpack.c.h.b16 %v1879
    %v2479 = vunpack.c.l.b16 %v1880
    %v2480 = vunpack.c.h.b16 %v1880
    %v2481 = vunpack.c.l.b16 %v1881
    %v2482 = vunpack.c.h.b16 %v1881
    %v2483 = vunpack.c.l.b16 %v1882
    %v2484 = vunpack.c.h.b16 %v1882
    %v2485 = vunpack.c.l.b16 %v1883
    %v2486 = vunpack.c.h.b16 %v1883
    %v2487 = vunpack.c.l.b16 %v1884
    %v2488 = vunpack.c.h.b16 %v1884
    %v2489 = vunpack.c.l.b16 %v1885
    %v2490 = vunpack.c.h.b16 %v1885
    %v2491 = vunpack.c.l.b16 %v1886
    %v2492 = vunpack.c.h.b16 %v1886
    %v2493 = vunpack.c.l.b16 %v1887
    %v2494 = vunpack.c.h.b16 %v1887
    %v2495 = vunpack.c.l.b16 %v1888
    %v2496 = vunpack.c.h.b16 %v1888
    %v2497 = vunpack.c.l.b16 %v1889
    %v2498 = vunpack.c.h.b16 %v1889
    %v2499 = vunpack.c.l.b16 %v1890
    %v2500 = vunpack.c.h.b16 %v1890
    %v2501 = vunpack.c.l.b16 %v1891
    %v2502 = vunpack.c.h.b16 %v1891
    %v2503 = vunpack.c.l.b16 %v1892
    %v2504 = vunpack.c.h.b16 %v1892
    %v2505 = vunpack.c.l.b16 %v1893
    %v2506 = vunpack.c.h.b16 %v1893
    %v2507 = vunpack.c.l.b16 %v1894
    %v2508 = vunpack.c.h.b16 %v1894
    %v2509 = vunpack.c.l.b16 %v1895
    %v2510 = vunpack.c.h.b16 %v1895
    %v2511 = vunpack.c.l.b16 %v1896
    %v2512 = vunpack.c.h.b16 %v1896
    %v2513 = vunpack.c.l.b16 %v1897
    %v2514 = vunpack.c.h.b16 %v1897
    %v2515 = vunpack.c.l.b16 %v1898
    %v2516 = vunpack.c.h.b16 %v1898
    %v2517 = vunpack.c.l.b16 %v1899
    %v2518 = vunpack.c.h.b16 %v1899
    %v2519 = vunpack.c.l.b16 %v1900
    %v2520 = vunpack.c.h.b16 %v1900
    %v2521 = vunpack.c.l.b16 %v1901
    %v2522 = vunpack.c.h.b16 %v1901
    %v2523 = vunpack.c.l.b16 %v1902
    %v2524 = vunpack.c.h.b16 %v1902
    %v2525 = vunpack.c.l.b16 %v1903
    %v2526 = vunpack.c.h.b16 %v1903
    %v2527 = vunpack.c.l.b16 %v1904
    %v2528 = vunpack.c.h.b16 %v1904
    %v2529 = vunpack.c.l.b16 %v1905
    %v2530 = vunpack.c.h.b16 %v1905
    %v2531 = vunpack.c.l.b16 %v1906
    %v2532 = vunpack.c.h.b16 %v1906
    %v2533 = vunpack.c.l.b16 %v1907
    %v2534 = vunpack.c.h.b16 %v1907
    %v2535 = vunpack.c.l.b16 %v1908
    %v2536 = vunpack.c.h.b16 %v1908
    %v2537 = vunpack.c.l.b16 %v1909
    %v2538 = vunpack.c.h.b16 %v1909
    %v2539 = vunpack.c.l.b16 %v1910
    %v2540 = vunpack.c.h.b16 %v1910
    %v2541 = vunpack.c.l.b16 %v1911
    %v2542 = vunpack.c.h.b16 %v1911
    %v2543 = vunpack.c.l.b16 %v1912
    %v2544 = vunpack.c.h.b16 %v1912
    %v2545 = vunpack.c.l.b16 %v1913
    %v2546 = vunpack.c.h.b16 %v1913
    %v2547 = vunpack.c.l.b16 %v1914
    %v2548 = vunpack.c.h.b16 %v1914
    %v2549 = vunpack.c.l.b16 %v1915
    %v2550 = vunpack.c.h.b16 %v1915
    %v2551 = vunpack.c.l.b16 %v1916
    %v2552 = vunpack.c.h.b16 %v1916
    %v2553 = vunpack.c.l.b16 %v1917
    %v2554 = vunpack.c.h.b16 %v1917
    %v2555 = vunpack.c.l.b16 %v1918
    %v2556 = vunpack.c.h.b16 %v1918
    %v2557 = vunpack.c.l.b16 %v1919
    %v2558 = vunpack.c.h.b16 %v1919
    %v2559 = vunpack.c.l.b16 %v1920
    %v2560 = vunpack.c.h.b16 %v1920
    %v2561 = vunpack.c.l.b16 %v1921
    %v2562 = vunpack.c.h.b16 %v1921
    %v2563 = vunpack.c.l.b16 %v1922
    %v2564 = vunpack.c.h.b16 %v1922
    %v2565 = vunpack.c.l.b16 %v1923
    %v2566 = vunpack.c.h.b16 %v1923
    %v2567 = vunpack.c.l.b16 %v1924
    %v2568 = vunpack.c.h.b16 %v1924
    %v2569 = vunpack.c.l.b16 %v1925
    %v2570 = vunpack.c.h.b16 %v1925
    %v2571 = vunpack.c.l.b16 %v1926
    %v2572 = vunpack.c.h.b16 %v1926
    %v2573 = vunpack.c.l.b16 %v1927
    %v2574 = vunpack.c.h.b16 %v1927
    %v2575 = vunpack.c.l.b16 %v1928
    %v2576 = vunpack.c.h.b16 %v1928
    %v2577 = vunpack.c.l.b16 %v1929
    %v2578 = vunpack.c.h.b16 %v1929
    %v2579 = vunpack.c.l.b16 %v1930
    %v2580 = vunpack.c.h.b16 %v1930
    %v2581 = vunpack.c.l.b16 %v1931
    %v2582 = vunpack.c.h.b16 %v1931
    %v2583 = vunpack.c.l.b16 %v1932
    %v2584 = vunpack.c.h.b16 %v1932
    %v2585 = vunpack.c.l.b16 %v1933
    %v2586 = vunpack.c.h.b16 %v1933
    %v2587 = vunpack.c.l.b16 %v1934
    %v2588 = vunpack.c.h.b16 %v1934
    %v2589 = vunpack.c.l.b16 %v1935
    %v2590 = vunpack.c.h.b16 %v1935
    %v2591 = vunpack.c.l.b16 %v1936
    %v2592 = vunpack.c.h.b16 %v1936
    %v2593 = vunpack.c.l.b16 %v1937
    %v2594 = vunpack.c.h.b16 %v1937
    %v2595 = vunpack.c.l.b16 %v1938
    %v2596 = vunpack.c.h.b16 %v1938
    %v2597 = vunpack.c.l.b16 %v1939
    %v2598 = vunpack.c.h.b16 %v1939
    %v2599 = vunpack.c.l.b16 %v1940
    %v2600 = vunpack.c.h.b16 %v1940
    %v2601 = vunpack.c.l.b16 %v1941
    %v2602 = vunpack.c.h.b16 %v1941
    %v2603 = vunpack.c.l.b16 %v1942
    %v2604 = vunpack.c.h.b16 %v1942
    %v2605 = vunpack.c.l.b16 %v1943
    %v2606 = vunpack.c.h.b16 %v1943
    %v2607 = vunpack.c.l.b16 %v1944
    %v2608 = vunpack.c.h.b16 %v1944
    %v2609 = vunpack.c.l.b16 %v1945
    %v2610 = vunpack.c.h.b16 %v1945
    %v2611 = vunpack.c.l.b16 %v1946
    %v2612 = vunpack.c.h.b16 %v1946
    %v2613 = vunpack.c.l.b16 %v1947
    %v2614 = vunpack.c.h.b16 %v1947
    %v2615 = vunpack.c.l.b16 %v1948
    %v2616 = vunpack.c.h.b16 %v1948
    %v2617 = vunpack.c.l.b16 %v1949
    %v2618 = vunpack.c.h.b16 %v1949
    %v2619 = vunpack.c.l.b16 %v1950
    %v2620 = vunpack.c.h.b16 %v1950
    %v2621 = vunpack.c.l.b16 %v1951
    %v2622 = vunpack.c.h.b16 %v1951
    %v2623 = vunpack.c.l.b16 %v1952
    %v2624 = vunpack.c.h.b16 %v1952
    %v2625 = vunpack.c.l.b16 %v1953
    %v2626 = vunpack.c.h.b16 %v1953
    %v2627 = vunpack.c.l.b16 %v1954
    %v2628 = vunpack.c.h.b16 %v1954
    %v2629 = vunpack.c.l.b16 %v1955
    %v2630 = vunpack.c.h.b16 %v1955
    %v2631 = vunpack.c.l.b16 %v1956
    %v2632 = vunpack.c.h.b16 %v1956
    %v2633 = vunpack.c.l.b16 %v1957
    %v2634 = vunpack.c.h.b16 %v1957
    %v2635 = vunpack.c.l.b16 %v1958
    %v2636 = vunpack.c.h.b16 %v1958
    %v2637 = vunpack.c.l.b16 %v1959
    %v2638 = vunpack.c.h.b16 %v1959
    %v2639 = vunpack.c.l.b16 %v1960
    %v2640 = vunpack.c.h.b16 %v1960
    %v2641 = vunpack.c.l.b16 %v1961
    %v2642 = vunpack.c.h.b16 %v1961
    %v2643 = vunpack.c.l.b16 %v1962
    %v2644 = vunpack.c.h.b16 %v1962
    %v2645 = vunpack.c.l.b16 %v1963
    %v2646 = vunpack.c.h.b16 %v1963
    %v2647 = vunpack.c.l.b16 %v1964
    %v2648 = vunpack.c.h.b16 %v1964
    %v2649 = vunpack.c.l.b16 %v1965
    %v2650 = vunpack.c.h.b16 %v1965
    %v2651 = vunpack.c.l.b16 %v1966
    %v2652 = vunpack.c.h.b16 %v1966
    %v2653 = vunpack.c.l.b16 %v1967
    %v2654 = vunpack.c.h.b16 %v1967
    %v2655 = vunpack.c.l.b16 %v1968
    %v2656 = vunpack.c.h.b16 %v1968
    %v2657 = vunpack.c.l.b16 %v1969
    %v2658 = vunpack.c.h.b16 %v1969
    %v2659 = vunpack.c.l.b16 %v1970
    %v2660 = vunpack.c.h.b16 %v1970
    %v2661 = vunpack.c.l.b16 %v1971
    %v2662 = vunpack.c.h.b16 %v1971
    %v2663 = vunpack.c.l.b16 %v1972
    %v2664 = vunpack.c.h.b16 %v1972
    %v2665 = vunpack.c.l.b16 %v1973
    %v2666 = vunpack.c.h.b16 %v1973
    %v2667 = vunpack.c.l.b16 %v1974
    %v2668 = vunpack.c.h.b16 %v1974
    %v2669 = vunpack.c.l.b16 %v1975
    %v2670 = vunpack.c.h.b16 %v1975
    %v2671 = vunpack.c.l.b16 %v1976
    %v2672 = vunpack.c.h.b16 %v1976
    %v2673 = vunpack.c.l.b16 %v1977
    %v2674 = vunpack.c.h.b16 %v1977
    %v2675 = vunpack.c.l.b16 %v1978
    %v2676 = vunpack.c.h.b16 %v1978
    %v2677 = vunpack.c.l.b16 %v1979
    %v2678 = vunpack.c.h.b16 %v1979
    %v2679 = vunpack.c.l.b16 %v1980
    %v2680 = vunpack.c.h.b16 %v1980
    %v2681 = vunpack.c.l.b16 %v1981
    %v2682 = vunpack.c.h.b16 %v1981
    %v2683 = vunpack.c.l.b16 %v1982
    %v2684 = vunpack.c.h.b16 %v1982
    %v2685 = vunpack.c.l.b16 %v1983
    %v2686 = vunpack.c.h.b16 %v1983
    %v2687 = vunpack.c.l.b16 %v1984
    %v2688 = vunpack.c.h.b16 %v1984
    %v2689 = vunpack.c.l.b16 %v1985
    %v2690 = vunpack.c.h.b16 %v1985
    %v2691 = vunpack.c.l.b16 %v1986
    %v2692 = vunpack.c.h.b16 %v1986
    %v2693 = vunpack.c.l.b16 %v1987
    %v2694 = vunpack.c.h.b16 %v1987
    %v2695 = vunpack.c.l.b16 %v1988
    %v2696 = vunpack.c.h.b16 %v1988
    %v2697 = vunpack.c.l.b16 %v1989
    %v2698 = vunpack.c.h.b16 %v1989
    %v2699 = vunpack.c.l.b16 %v1990
    %v2700 = vunpack.c.h.b16 %v1990
    %v2701 = vunpack.c.l.b16 %v1991
    %v2702 = vunpack.c.h.b16 %v1991
    %v2703 = vunpack.c.l.b16 %v1992
    %v2704 = vunpack.c.h.b16 %v1992
    %v2705 = vunpack.c.l.b16 %v1993
    %v2706 = vunpack.c.h.b16 %v1993
    %v2707 = vunpack.c.l.b16 %v1994
    %v2708 = vunpack.c.h.b16 %v1994
    %v2709 = vunpack.c.l.b16 %v1995
    %v2710 = vunpack.c.h.b16 %v1995
    %v2711 = vunpack.c.l.b16 %v1996
    %v2712 = vunpack.c.h.b16 %v1996
    %v2713 = vunpack.c.l.b16 %v1997
    %v2714 = vunpack.c.h.b16 %v1997
    %v2715 = vunpack.c.l.b16 %v1998
    %v2716 = vunpack.c.h.b16 %v1998
    %v2717 = vunpack.c.l.b16 %v1999
    %v2718 = vunpack.c.h.b16 %v1999
    %v2719 = vunpack.c.l.b16 %v2000
    %v2720 = vunpack.c.h.b16 %v2000
    %v2721 = vpack.c.b16 %v2243, %v2241
    %v2722 = vpack.c.b16 %v2244, %v2242
    %v2723 = vpack.c.b16 %v2247, %v2245
    %v2724 = vpack.c.b16 %v2248, %v2246
    %v2725 = vpack.c.b16 %v2251, %v2249
    %v2726 = vpack.c.b16 %v2252, %v2250
    %v2727 = vpack.c.b16 %v2255, %v2253
    %v2728 = vpack.c.b16 %v2256, %v2254
    %v2729 = vpack.c.b16 %v2259, %v2257
    %v2730 = vpack.c.b16 %v2260, %v2258
    %v2731 = vpack.c.b16 %v2263, %v2261
    %v2732 = vpack.c.b16 %v2264, %v2262
    %v2733 = vpack.c.b16 %v2267, %v2265
    %v2734 = vpack.c.b16 %v2268, %v2266
    %v2735 = vpack.c.b16 %v2271, %v2269
    %v2736 = vpack.c.b16 %v2272, %v2270
    %v2737 = vpack.c.b16 %v2275, %v2273
    %v2738 = vpack.c.b16 %v2276, %v2274
    %v2739 = vpack.c.b16 %v2279, %v2277
    %v2740 = vpack.c.b16 %v2280, %v2278
    %v2741 = vpack.c.b16 %v2283, %v2281
    %v2742 = vpack.c.b16 %v2284, %v2282
    %v2743 = vpack.c.b16 %v2287, %v2285
    %v2744 = vpack.c.b16 %v2288, %v2286
    %v2745 = vpack.c.b16 %v2291, %v2289
    %v2746 = vpack.c.b16 %v2292, %v2290
    %v2747 = vpack.c.b16 %v2295, %v2293
    %v2748 = vpack.c.b16 %v2296, %v2294
    %v2749 = vpack.c.b16 %v2299, %v2297
    %v2750 = vpack.c.b16 %v2300, %v2298
    %v2751 = vpack.c.b16 %v2303, %v2301
    %v2752 = vpack.c.b16 %v2304, %v2302
    %v2753 = vpack.c.b16 %v2307, %v2305
    %v2754 = vpack.c.b16 %v2308, %v2306
    %v2755 = vpack.c.b16 %v2311, %v2309
    %v2756 = vpack.c.b16 %v2312, %v2310
    %v2757 = vpack.c.b16 %v2315, %v2313
    %v2758 = vpack.c.b16 %v2316, %v2314
    %v2759 = vpack.c.b16 %v2319, %v2317
    %v2760 = vpack.c.b16 %v2320, %v2318
    %v2761 = vpack.c.b16 %v2323, %v2321
    %v2762 = vpack.c.b16 %v2324, %v2322
    %v2763 = vpack.c.b16 %v2327, %v2325
    %v2764 = vpack.c.b16 %v2328, %v2326
    %v2765 = vpack.c.b16 %v2331, %v2329
    %v2766 = vpack.c.b16 %v2332, %v2330
    %v2767 = vpack.c.b16 %v2335, %v2333
    %v2768 = vpack.c.b16 %v2336, %v2334
    %v2769 = vpack.c.b16 %v2339, %v2337
    %v2770 = vpack.c.b16 %v2340, %v2338
    %v2771 = vpack.c.b16 %v2343, %v2341
    %v2772 = vpack.c.b16 %v2344, %v2342
    %v2773 = vpack.c.b16 %v2347, %v2345
    %v2774 = vpack.c.b16 %v2348, %v2346
    %v2775 = vpack.c.b16 %v2351, %v2349
    %v2776 = vpack.c.b16 %v2352, %v2350
    %v2777 = vpack.c.b16 %v2355, %v2353
    %v2778 = vpack.c.b16 %v2356, %v2354
    %v2779 = vpack.c.b16 %v2359, %v2357
    %v2780 = vpack.c.b16 %v2360, %v2358
    %v2781 = vpack.c.b16 %v2363, %v2361
    %v2782 = vpack.c.b16 %v2364, %v2362
    %v2783 = vpack.c.b16 %v2367, %v2365
    %v2784 = vpack.c.b16 %v2368, %v2366
    %v2785 = vpack.c.b16 %v2371, %v2369
    %v2786 = vpack.c.b16 %v2372, %v2370
    %v2787 = vpack.c.b16 %v2375, %v2373
    %v2788 = vpack.c.b16 %v2376, %v2374
    %v2789 = vpack.c.b16 %v2379, %v2377
    %v2790 = vpack.c.b16 %v2380, %v2378
    %v2791 = vpack.c.b16 %v2383, %v2381
    %v2792 = vpack.c.b16 %v2384, %v2382
    %v2793 = vpack.c.b16 %v2387, %v2385
    %v2794 = vpack.c.b16 %v2388, %v2386
    %v2795 = vpack.c.b16 %v2391, %v2389
    %v2796 = vpack.c.b16 %v2392, %v2390
    %v2797 = vpack.c.b16 %v2395, %v2393
    %v2798 = vpack.c.b16 %v2396, %v2394
    %v2799 = vpack.c.b16 %v2399, %v2397
    %v2800 = vpack.c.b16 %v2400, %v2398
    %v2801 = vpack.c.b16 %v2403, %v2401
    %v2802 = vpack.c.b16 %v2404, %v2402
    %v2803 = vpack.c.b16 %v2407, %v2405
    %v2804 = vpack.c.b16 %v2408, %v2406
    %v2805 = vpack.c.b16 %v2411, %v2409
    %v2806 = vpack.c.b16 %v2412, %v2410
    %v2807 = vpack.c.b16 %v2415, %v2413
    %v2808 = vpack.c.b16 %v2416, %v2414
    %v2809 = vpack.c.b16 %v2419, %v2417
    %v2810 = vpack.c.b16 %v2420, %v2418
    %v2811 = vpack.c.b16 %v2423, %v2421
    %v2812 = vpack.c.b16 %v2424, %v2422
    %v2813 = vpack.c.b16 %v2427, %v2425
    %v2814 = vpack.c.b16 %v2428, %v2426
    %v2815 = vpack.c.b16 %v2431, %v2429
    %v2816 = vpack.c.b16 %v2432, %v2430
    %v2817 = vpack.c.b16 %v2435, %v2433
    %v2818 = vpack.c.b16 %v2436, %v2434
    %v2819 = vpack.c.b16 %v2439, %v2437
    %v2820 = vpack.c.b16 %v2440, %v2438
    %v2821 = vpack.c.b16 %v2443, %v2441
    %v2822 = vpack.c.b16 %v2444, %v2442
    %v2823 = vpack.c.b16 %v2447, %v2445
    %v2824 = vpack.c.b16 %v2448, %v2446
    %v2825 = vpack.c.b16 %v2451, %v2449
    %v2826 = vpack.c.b16 %v2452, %v2450
    %v2827 = vpack.c.b16 %v2455, %v2453
    %v2828 = vpack.c.b16 %v2456, %v2454
    %v2829 = vpack.c.b16 %v2459, %v2457
    %v2830 = vpack.c.b16 %v2460, %v2458
    %v2831 = vpack.c.b16 %v2463, %v2461
    %v2832 = vpack.c.b16 %v2464, %v2462
    %v2833 = vpack.c.b16 %v2467, %v2465
    %v2834 = vpack.c.b16 %v2468, %v2466
    %v2835 = vpack.c.b16 %v2471, %v2469
    %v2836 = vpack.c.b16 %v2472, %v2470
    %v2837 = vpack.c.b16 %v2475, %v2473
    %v2838 = vpack.c.b16 %v2476, %v2474
    %v2839 = vpack.c.b16 %v2479, %v2477
    %v2840 = vpack.c.b16 %v2480, %v2478
    %v2841 = vpack.c.b16 %v2483, %v2481
    %v2842 = vpack.c.b16 %v2484, %v2482
    %v2843 = vpack.c.b16 %v2487, %v2485
    %v2844 = vpack.c.b16 %v2488, %v2486
    %v2845 = vpack.c.b16 %v2491, %v2489
    %v2846 = vpack.c.b16 %v2492, %v2490
    %v2847 = vpack.c.b16 %v2495, %v2493
    %v2848 = vpack.c.b16 %v2496, %v2494
    %v2849 = vpack.c.b16 %v2499, %v2497
    %v2850 = vpack.c.b16 %v2500, %v2498
    %v2851 = vpack.c.b16 %v2503, %v2501
    %v2852 = vpack.c.b16 %v2504, %v2502
    %v2853 = vpack.c.b16 %v2507, %v2505
    %v2854 = vpack.c.b16 %v2508, %v2506
    %v2855 = vpack.c.b16 %v2511, %v2509
    %v2856 = vpack.c.b16 %v2512, %v2510
    %v2857 = vpack.c.b16 %v2515, %v2513
    %v2858 = vpack.c.b16 %v2516, %v2514
    %v2859 = vpack.c.b16 %v2519, %v2517
    %v2860 = vpack.c.b16 %v2520, %v2518
    %v2861 = vpack.c.b16 %v2523, %v2521
    %v2862 = vpack.c.b16 %v2524, %v2522
    %v2863 = vpack.c.b16 %v2527, %v2525
    %v2864 = vpack.c.b16 %v2528, %v2526
    %v2865 = vpack.c.b16 %v2531, %v2529
    %v2866 = vpack.c.b16 %v2532, %v2530
    %v2867 = vpack.c.b16 %v2535, %v2533
    %v2868 = vpack.c.b16 %v2536, %v2534
    %v2869 = vpack.c.b16 %v2539, %v2537
    %v2870 = vpack.c.b16 %v2540, %v2538
    %v2871 = vpack.c.b16 %v2543, %v2541
    %v2872 = vpack.c.b16 %v2544, %v2542
    %v2873 = vpack.c.b16 %v2547, %v2545
    %v2874 = vpack.c.b16 %v2548, %v2546
    %v2875 = vpack.c.b16 %v2551, %v2549
    %v2876 = vpack.c.b16 %v2552, %v2550
    %v2877 = vpack.c.b16 %v2555, %v2553
    %v2878 = vpack.c.b16 %v2556, %v2554
    %v2879 = vpack.c.b16 %v2559, %v2557
    %v2880 = vpack.c.b16 %v2560, %v2558
    %v2881 = vpack.c.b16 %v2563, %v2561
    %v2882 = vpack.c.b16 %v2564, %v2562
    %v2883 = vpack.c.b16 %v2567, %v2565
    %v2884 = vpack.c.b16 %v2568, %v2566
    %v2885 = vpack.c.b16 %v2571, %v2569
    %v2886 = vpack.c.b16 %v2572, %v2570
    %v2887 = vpack.c.b16 %v2575, %v2573
    %v2888 = vpack.c.b16 %v2576, %v2574
    %v2889 = vpack.c.b16 %v2579, %v2577
    %v2890 = vpack.c.b16 %v2580, %v2578
    %v2891 = vpack.c.b16 %v2583, %v2581
    %v2892 = vpack.c.b16 %v2584, %v2582
    %v2893 = vpack.c.b16 %v2587, %v2585
    %v2894 = vpack.c.b16 %v2588, %v2586
    %v2895 = vpack.c.b16 %v2591, %v2589
    %v2896 = vpack.c.b16 %v2592, %v2590
    %v2897 = vpack.c.b16 %v2595, %v2593
    %v2898 = vpack.c.b16 %v2596, %v2594
    %v2899 = vpack.c.b16 %v2599, %v2597
    %v2900 = vpack.c.b16 %v2600, %v2598
    %v2901 = vpack.c.b16 %v2603, %v2601
    %v2902 = vpack.c.b16 %v2604, %v2602
    %v2903 = vpack.c.b16 %v2607, %v2605
    %v2904 = vpack.c.b16 %v2608, %v2606
    %v2905 = vpack.c.b16 %v2611, %v2609
    %v2906 = vpack.c.b16 %v2612, %v2610
    %v2907 = vpack.c.b16 %v2615, %v2613
    %v2908 = vpack.c.b16 %v2616, %v2614
    %v2909 = vpack.c.b16 %v2619, %v2617
    %v2910 = vpack.c.b16 %v2620, %v2618
    %v2911 = vpack.c.b16 %v2623, %v2621
    %v2912 = vpack.c.b16 %v2624, %v2622
    %v2913 = vpack.c.b16 %v2627, %v2625
    %v2914 = vpack.c.b16 %v2628, %v2626
    %v2915 = vpack.c.b16 %v2631, %v2629
    %v2916 = vpack.c.b16 %v2632, %v2630
    %v2917 = vpack.c.b16 %v2635, %v2633
    %v2918 = vpack.c.b16 %v2636, %v2634
    %v2919 = vpack.c.b16 %v2639, %v2637
    %v2920 = vpack.c.b16 %v2640, %v2638
    %v2921 = vpack.c.b16 %v2643, %v2641
    %v2922 = vpack.c.b16 %v2644, %v2642
    %v2923 = vpack.c.b16 %v2647, %v2645
    %v2924 = vpack.c.b16 %v2648, %v2646
    %v2925 = vpack.c.b16 %v2651, %v2649
    %v2926 = vpack.c.b16 %v2652, %v2650
    %v2927 = vpack.c.b16 %v2655, %v2653
    %v2928 = vpack.c.b16 %v2656, %v2654
    %v2929 = vpack.c.b16 %v2659, %v2657
    %v2930 = vpack.c.b16 %v2660, %v2658
    %v2931 = vpack.c.b16 %v2663, %v2661
    %v2932 = vpack.c.b16 %v2664, %v2662
    %v2933 = vpack.c.b16 %v2667, %v2665
    %v2934 = vpack.c.b16 %v2668, %v2666
    %v2935 = vpack.c.b16 %v2671, %v2669
    %v2936 = vpack.c.b16 %v2672, %v2670
    %v2937 = vpack.c.b16 %v2675, %v2673
    %v2938 = vpack.c.b16 %v2676, %v2674
    %v2939 = vpack.c.b16 %v2679, %v2677
    %v2940 = vpack.c.b16 %v2680, %v2678
    %v2941 = vpack.c.b16 %v2683, %v2681
    %v2942 = vpack.c.b16 %v2684, %v2682
    %v2943 = vpack.c.b16 %v2687, %v2685
    %v2944 = vpack.c.b16 %v2688, %v2686
    %v2945 = vpack.c.b16 %v2691, %v2689
    %v2946 = vpack.c.b16 %v2692, %v2690
    %v2947 = vpack.c.b16 %v2695, %v2693
    %v2948 = vpack.c.b16 %v2696, %v2694
    %v2949 = vpack.c.b16 %v2699, %v2697
    %v2950 = vpack.c.b16 %v2700, %v2698
    %v2951 = vpack.c.b16 %v2703, %v2701
    %v2952 = vpack.c.b16 %v2704, %v2702
    %v2953 = vpack.c.b16 %v2707, %v2705
    %v2954 = vpack.c.b16 %v2708, %v2706
    %v2955 = vpack.c.b16 %v2711, %v2709
    %v2956 = vpack.c.b16 %v2712, %v2710
    %v2957 = vpack.c.b16 %v2715, %v2713
    %v2958 = vpack.c.b16 %v2716, %v2714
    %v2959 = vpack.c.b16 %v2719, %v2717
    %v2960 = vpack.c.b16 %v2720, %v2718
    %3201 = vmatprep.subr.bf16.mxu0 %v2722
    %3202 = vmatpush1.bf16.msra.mxu0 %v2721
    %3203 = vmatprep.subr.bf16.mxu0 %v2724
    %3204 = vmatpush1.bf16.msra.mxu0 %v2723
    %3205 = vmatprep.subr.bf16.mxu0 %v2726
    %3206 = vmatpush1.bf16.msra.mxu0 %v2725
    %3207 = vmatprep.subr.bf16.mxu0 %v2728
    %3208 = vmatpush1.bf16.msra.mxu0 %v2727
    %3209 = vmatprep.subr.bf16.mxu0 %v2730
    %3210 = vmatpush1.bf16.msra.mxu0 %v2729
    %3211 = vmatprep.subr.bf16.mxu0 %v2732
    %3212 = vmatpush1.bf16.msra.mxu0 %v2731
    %3213 = vmatprep.subr.bf16.mxu0 %v2734
    %3214 = vmatpush1.bf16.msra.mxu0 %v2733
    %3215 = vmatprep.subr.bf16.mxu0 %v2736
    %3216 = vmatpush1.bf16.msra.mxu0 %v2735
    %3217 = vmatprep.subr.bf16.mxu0 %v2738
    %3218 = vmatpush1.bf16.msra.mxu0 %v2737
    %3219 = vmatprep.subr.bf16.mxu0 %v2740
    %3220 = vmatpush1.bf16.msra.mxu0 %v2739
    %3221 = vmatprep.subr.bf16.mxu0 %v2742
    %3222 = vmatpush1.bf16.msra.mxu0 %v2741
    %3223 = vmatprep.subr.bf16.mxu0 %v2744
    %3224 = vmatpush1.bf16.msra.mxu0 %v2743
    %3225 = vmatprep.subr.bf16.mxu0 %v2746
    %3226 = vmatpush1.bf16.msra.mxu0 %v2745
    %3227 = vmatprep.subr.bf16.mxu0 %v2748
    %3228 = vmatpush1.bf16.msra.mxu0 %v2747
    %3229 = vmatprep.subr.bf16.mxu0 %v2750
    %3230 = vmatpush1.bf16.msra.mxu0 %v2749
    %3231 = vmatprep.subr.bf16.mxu0 %v2752
    %3232 = vmatpush1.bf16.msra.mxu0 %v2751
    %3233 = vmatprep.mubr.bf16.mxu0 %v1638
    %3234 = vmatmul.mubr.bf16.gmra.mrb[0].mxu0 %v1637
    %v3235 = vpop.f32.mrb[0].mxu0
    %v3236 = vadd.f32 0.0, %v3235
    %v3237 = vpop.f32.mrb[0].mxu0
    %v3238 = vadd.f32 0.0, %v3237
    %v3239 = vpop.f32.mrb[0].mxu0
    %v3240 = vadd.f32 0.0, %v3239
    %v3241 = vpop.f32.mrb[0].mxu0
    %v3242 = vadd.f32 0.0, %v3241
    %3243 = vmatprep.mubr.bf16.mxu0 %v1641
    %3244 = vmatmul.mubr.bf16.gmra.mrb[0].mxu0 %v1640
    %v3245 = vpop.f32.mrb[0].mxu0
    %v3246 = vadd.f32 0.0, %v3245
    %v3247 = vpop.f32.mrb[0].mxu0
    %v3248 = vadd.f32 0.0, %v3247
    %v3249 = vpop.f32.mrb[0].mxu0
    %v3250 = vadd.f32 0.0, %v3249
    %v3251 = vpop.f32.mrb[0].mxu0
    %v3252 = vadd.f32 0.0, %v3251
    %3253 = vmatprep.mubr.bf16.mxu0 %v1644
    %3254 = vmatmul.mubr.bf16.gmra.mrb[0].mxu0 %v1643
    %v3255 = vpop.f32.mrb[0].mxu0
    %v3256 = vadd.f32 0.0, %v3255
    %v3257 = vpop.f32.mrb[0].mxu0
    %v3258 = vadd.f32 0.0, %v3257
    %v3259 = vpop.f32.mrb[0].mxu0
    %v3260 = vadd.f32 0.0, %v3259
    %v3261 = vpop.f32.mrb[0].mxu0
    %v3262 = vadd.f32 0.0, %v3261
    %3263 = vmatprep.mubr.bf16.mxu0 %v1647
    %3264 = vmatmul.mubr.bf16.gmra.mrb[0].mxu0 %v1646
    %v3265 = vpop.f32.mrb[0].mxu0
    %v3266 = vadd.f32 0.0, %v3265
    %v3267 = vpop.f32.mrb[0].mxu0
    %v3268 = vadd.f32 0.0, %v3267
    %v3269 = vpop.f32.mrb[0].mxu0
    %v3270 = vadd.f32 0.0, %v3269
    %v3271 = vpop.f32.mrb[0].mxu0
    %v3272 = vadd.f32 0.0, %v3271
    %3273 = vmatprep.mubr.bf16.mxu0 %v1650
    %3274 = vmatmul.mubr.bf16.gmra.mrb[0].mxu0 %v1649
    %v3275 = vpop.f32.mrb[0].mxu0
    %v3276 = vadd.f32 0.0, %v3275
    %v3277 = vpop.f32.mrb[0].mxu0
    %v3278 = vadd.f32 0.0, %v3277
    %v3279 = vpop.f32.mrb[0].mxu0
    %v3280 = vadd.f32 0.0, %v3279
    %v3281 = vpop.f32.mrb[0].mxu0
    %v3282 = vadd.f32 0.0, %v3281
    %3283 = vmatprep.mubr.bf16.mxu0 %v1653
    %3284 = vmatmul.mubr.bf16.gmra.mrb[0].mxu0 %v1652
    %v3285 = vpop.f32.mrb[0].mxu0
    %v3286 = vadd.f32 0.0, %v3285
    %v3287 = vpop.f32.mrb[0].mxu0
    %v3288 = vadd.f32 0.0, %v3287
    %v3289 = vpop.f32.mrb[0].mxu0
    %v3290 = vadd.f32 0.0, %v3289
    %v3291 = vpop.f32.mrb[0].mxu0
    %v3292 = vadd.f32 0.0, %v3291
    %3293 = vmatprep.mubr.bf16.mxu0 %v1656
    %3294 = vmatmul.mubr.bf16.gmra.mrb[0].mxu0 %v1655
    %v3295 = vpop.f32.mrb[0].mxu0
    %v3296 = vadd.f32 0.0, %v3295
    %v3297 = vpop.f32.mrb[0].mxu0
    %v3298 = vadd.f32 0.0, %v3297
    %v3299 = vpop.f32.mrb[0].mxu0
    %v3300 = vadd.f32 0.0, %v3299
    %v3301 = vpop.f32.mrb[0].mxu0
    %v3302 = vadd.f32 0.0, %v3301
    %3303 = vmatprep.mubr.bf16.mxu0 %v1659
    %3304 = vmatmul.mubr.bf16.gmra.mrb[0].mxu0 %v1658
    %v3305 = vpop.f32.mrb[0].mxu0
    %v3306 = vadd.f32 0.0, %v3305
    %v3307 = vpop.f32.mrb[0].mxu0
    %v3308 = vadd.f32 0.0, %v3307
    %v3309 = vpop.f32.mrb[0].mxu0
    %v3310 = vadd.f32 0.0, %v3309
    %v3311 = vpop.f32.mrb[0].mxu0
    %v3312 = vadd.f32 0.0, %v3311
    %3313 = vdwg.mxu0
    %3314 = vmatprep.subr.bf16.mxu0 %v2754
    %3315 = vmatpush1.bf16.msra.mxu0 %v2753
    %3316 = vmatprep.subr.bf16.mxu0 %v2756
    %3317 = vmatpush1.bf16.msra.mxu0 %v2755
    %3318 = vmatprep.subr.bf16.mxu0 %v2758
    %3319 = vmatpush1.bf16.msra.mxu0 %v2757
    %3320 = vmatprep.subr.bf16.mxu0 %v2760
    %3321 = vmatpush1.bf16.msra.mxu0 %v2759
    %3322 = vmatprep.subr.bf16.mxu0 %v2762
    %3323 = vmatpush1.bf16.msra.mxu0 %v2761
    %3324 = vmatprep.subr.bf16.mxu0 %v2764
    %3325 = vmatpush1.bf16.msra.mxu0 %v2763
    %3326 = vmatprep.subr.bf16.mxu0 %v2766
    %3327 = vmatpush1.bf16.msra.mxu0 %v2765
    %3328 = vmatprep.subr.bf16.mxu0 %v2768
    %3329 = vmatpush1.bf16.msra.mxu0 %v2767
    %3330 = vmatprep.subr.bf16.mxu0 %v2770
    %3331 = vmatpush1.bf16.msra.mxu0 %v2769
    %3332 = vmatprep.subr.bf16.mxu0 %v2772
    %3333 = vmatpush1.bf16.msra.mxu0 %v2771
    %3334 = vmatprep.subr.bf16.mxu0 %v2774
    %3335 = vmatpush1.bf16.msra.mxu0 %v2773
    %3336 = vmatprep.subr.bf16.mxu0 %v2776
    %3337 = vmatpush1.bf16.msra.mxu0 %v2775
    %3338 = vmatprep.subr.bf16.mxu0 %v2778
    %3339 = vmatpush1.bf16.msra.mxu0 %v2777
    %3340 = vmatprep.subr.bf16.mxu0 %v2780
    %3341 = vmatpush1.bf16.msra.mxu0 %v2779
    %3342 = vmatprep.subr.bf16.mxu0 %v2782
    %3343 = vmatpush1.bf16.msra.mxu0 %v2781
    %3344 = vmatprep.subr.bf16.mxu0 %v2784
    %3345 = vmatpush1.bf16.msra.mxu0 %v2783
    %3346 = vmatprep.mubr.bf16.mxu0 %v1662
    %3347 = vmatmul.mubr.bf16.gmra.mrb[0].mxu0 %v1639
    %v3348 = vpop.f32.mrb[0].mxu0
    %v3349 = vadd.f32 %v3236, %v3348
    %v3350 = vpop.f32.mrb[0].mxu0
    %v3351 = vadd.f32 %v3238, %v3350
    %v3352 = vpop.f32.mrb[0].mxu0
    %v3353 = vadd.f32 %v3240, %v3352
    %v3354 = vpop.f32.mrb[0].mxu0
    %v3355 = vadd.f32 %v3242, %v3354
    %3356 = vmatprep.mubr.bf16.mxu0 %v1665
    %3357 = vmatmul.mubr.bf16.gmra.mrb[0].mxu0 %v1642
    %v3358 = vpop.f32.mrb[0].mxu0
    %v3359 = vadd.f32 %v3246, %v3358
    %v3360 = vpop.f32.mrb[0].mxu0
    %v3361 = vadd.f32 %v3248, %v3360
    %v3362 = vpop.f32.mrb[0].mxu0
    %v3363 = vadd.f32 %v3250, %v3362
    %v3364 = vpop.f32.mrb[0].mxu0
    %v3365 = vadd.f32 %v3252, %v3364
    %3366 = vmatprep.mubr.bf16.mxu0 %v1668
    %3367 = vmatmul.mubr.bf16.gmra.mrb[0].mxu0 %v1645
    %v3368 = vpop.f32.mrb[0].mxu0
    %v3369 = vadd.f32 %v3256, %v3368
    %v3370 = vpop.f32.mrb[0].mxu0
    %v3371 = vadd.f32 %v3258, %v3370
    %v3372 = vpop.f32.mrb[0].mxu0
    %v3373 = vadd.f32 %v3260, %v3372
    %v3374 = vpop.f32.mrb[0].mxu0
    %v3375 = vadd.f32 %v3262, %v3374
    %3376 = vmatprep.mubr.bf16.mxu0 %v1671
    %3377 = vmatmul.mubr.bf16.gmra.mrb[0].mxu0 %v1648
    %v3378 = vpop.f32.mrb[0].mxu0
    %v3379 = vadd.f32 %v3266, %v3378
    %v3380 = vpop.f32.mrb[0].mxu0
    %v3381 = vadd.f32 %v3268, %v3380
    %v3382 = vpop.f32.mrb[0].mxu0
    %v3383 = vadd.f32 %v3270, %v3382
    %v3384 = vpop.f32.mrb[0].mxu0
    %v3385 = vadd.f32 %v3272, %v3384
    %3386 = vmatprep.mubr.bf16.mxu0 %v1674
    %3387 = vmatmul.mubr.bf16.gmra.mrb[0].mxu0 %v1651
    %v3388 = vpop.f32.mrb[0].mxu0
    %v3389 = vadd.f32 %v3276, %v3388
    %v3390 = vpop.f32.mrb[0].mxu0
    %v3391 = vadd.f32 %v3278, %v3390
    %v3392 = vpop.f32.mrb[0].mxu0
    %v3393 = vadd.f32 %v3280, %v3392
    %v3394 = vpop.f32.mrb[0].mxu0
    %v3395 = vadd.f32 %v3282, %v3394
    %3396 = vmatprep.mubr.bf16.mxu0 %v1677
    %3397 = vmatmul.mubr.bf16.gmra.mrb[0].mxu0 %v1654
    %v3398 = vpop.f32.mrb[0].mxu0
    %v3399 = vadd.f32 %v3286, %v3398
    %v3400 = vpop.f32.mrb[0].mxu0
    %v3401 = vadd.f32 %v3288, %v3400
    %v3402 = vpop.f32.mrb[0].mxu0
    %v3403 = vadd.f32 %v3290, %v3402
    %v3404 = vpop.f32.mrb[0].mxu0
    %v3405 = vadd.f32 %v3292, %v3404
    %3406 = vmatprep.mubr.bf16.mxu0 %v1680
    %3407 = vmatmul.mubr.bf16.gmra.mrb[0].mxu0 %v1657
    %v3408 = vpop.f32.mrb[0].mxu0
    %v3409 = vadd.f32 %v3296, %v3408
    %v3410 = vpop.f32.mrb[0].mxu0
    %v3411 = vadd.f32 %v3298, %v3410
    %v3412 = vpop.f32.mrb[0].mxu0
    %v3413 = vadd.f32 %v3300, %v3412
    %v3414 = vpop.f32.mrb[0].mxu0
    %v3415 = vadd.f32 %v3302, %v3414
    %3416 = vmatprep.mubr.bf16.mxu0 %v1683
    %3417 = vmatmul.mubr.bf16.gmra.mrb[0].mxu0 %v1660
    %v3418 = vpop.f32.mrb[0].mxu0
    %v3419 = vadd.f32 %v3306, %v3418
    %v3420 = vpop.f32.mrb[0].mxu0
    %v3421 = vadd.f32 %v3308, %v3420
    %v3422 = vpop.f32.mrb[0].mxu0
    %v3423 = vadd.f32 %v3310, %v3422
    %v3424 = vpop.f32.mrb[0].mxu0
    %v3425 = vadd.f32 %v3312, %v3424
    %3426 = vdwg.mxu0
    %3427 = vmatprep.subr.bf16.mxu0 %v2786
    %3428 = vmatpush1.bf16.msra.mxu0 %v2785
    %3429 = vmatprep.subr.bf16.mxu0 %v2788
    %3430 = vmatpush1.bf16.msra.mxu0 %v2787
    %3431 = vmatprep.subr.bf16.mxu0 %v2790
    %3432 = vmatpush1.bf16.msra.mxu0 %v2789
    %3433 = vmatprep.subr.bf16.mxu0 %v2792
    %3434 = vmatpush1.bf16.msra.mxu0 %v2791
    %3435 = vmatprep.subr.bf16.mxu0 %v2794
    %3436 = vmatpush1.bf16.msra.mxu0 %v2793
    %3437 = vmatprep.subr.bf16.mxu0 %v2796
    %3438 = vmatpush1.bf16.msra.mxu0 %v2795
    %3439 = vmatprep.subr.bf16.mxu0 %v2798
    %3440 = vmatpush1.bf16.msra.mxu0 %v2797
    %3441 = vmatprep.subr.bf16.mxu0 %v2800
    %3442 = vmatpush1.bf16.msra.mxu0 %v2799
    %3443 = vmatprep.subr.bf16.mxu0 %v2802
    %3444 = vmatpush1.bf16.msra.mxu0 %v2801
    %3445 = vmatprep.subr.bf16.mxu0 %v2804
    %3446 = vmatpush1.bf16.msra.mxu0 %v2803
    %3447 = vmatprep.subr.bf16.mxu0 %v2806
    %3448 = vmatpush1.bf16.msra.mxu0 %v2805
    %3449 = vmatprep.subr.bf16.mxu0 %v2808
    %3450 = vmatpush1.bf16.msra.mxu0 %v2807
    %3451 = vmatprep.subr.bf16.mxu0 %v2810
    %3452 = vmatpush1.bf16.msra.mxu0 %v2809
    %3453 = vmatprep.subr.bf16.mxu0 %v2812
    %3454 = vmatpush1.bf16.msra.mxu0 %v2811
    %3455 = vmatprep.subr.bf16.mxu0 %v2814
    %3456 = vmatpush1.bf16.msra.mxu0 %v2813
    %3457 = vmatprep.subr.bf16.mxu0 %v2816
    %3458 = vmatpush1.bf16.msra.mxu0 %v2815
    %3459 = vmatprep.mubr.bf16.mxu0 %v1664
    %3460 = vmatmul.mubr.bf16.gmra.mrb[0].mxu0 %v1663
    %v3461 = vpop.f32.mrb[0].mxu0
    %v3462 = vadd.f32 %v3349, %v3461
    %v3463 = vpop.f32.mrb[0].mxu0
    %v3464 = vadd.f32 %v3351, %v3463
    %v3465 = vpop.f32.mrb[0].mxu0
    %v3466 = vadd.f32 %v3353, %v3465
    %v3467 = vpop.f32.mrb[0].mxu0
    %v3468 = vadd.f32 %v3355, %v3467
    %3469 = vmatprep.mubr.bf16.mxu0 %v1667
    %3470 = vmatmul.mubr.bf16.gmra.mrb[0].mxu0 %v1666
    %v3471 = vpop.f32.mrb[0].mxu0
    %v3472 = vadd.f32 %v3359, %v3471
    %v3473 = vpop.f32.mrb[0].mxu0
    %v3474 = vadd.f32 %v3361, %v3473
    %v3475 = vpop.f32.mrb[0].mxu0
    %v3476 = vadd.f32 %v3363, %v3475
    %v3477 = vpop.f32.mrb[0].mxu0
    %v3478 = vadd.f32 %v3365, %v3477
    %3479 = vmatprep.mubr.bf16.mxu0 %v1670
    %3480 = vmatmul.mubr.bf16.gmra.mrb[0].mxu0 %v1669
    %v3481 = vpop.f32.mrb[0].mxu0
    %v3482 = vadd.f32 %v3369, %v3481
    %v3483 = vpop.f32.mrb[0].mxu0
    %v3484 = vadd.f32 %v3371, %v3483
    %v3485 = vpop.f32.mrb[0].mxu0
    %v3486 = vadd.f32 %v3373, %v3485
    %v3487 = vpop.f32.mrb[0].mxu0
    %v3488 = vadd.f32 %v3375, %v3487
    %3489 = vmatprep.mubr.bf16.mxu0 %v1673
    %3490 = vmatmul.mubr.bf16.gmra.mrb[0].mxu0 %v1672
    %v3491 = vpop.f32.mrb[0].mxu0
    %v3492 = vadd.f32 %v3379, %v3491
    %v3493 = vpop.f32.mrb[0].mxu0
    %v3494 = vadd.f32 %v3381, %v3493
    %v3495 = vpop.f32.mrb[0].mxu0
    %v3496 = vadd.f32 %v3383, %v3495
    %v3497 = vpop.f32.mrb[0].mxu0
    %v3498 = vadd.f32 %v3385, %v3497
    %3499 = vmatprep.mubr.bf16.mxu0 %v1676
    %3500 = vmatmul.mubr.bf16.gmra.mrb[0].mxu0 %v1675
    %v3501 = vpop.f32.mrb[0].mxu0
    %v3502 = vadd.f32 %v3389, %v3501
    %v3503 = vpop.f32.mrb[0].mxu0
    %v3504 = vadd.f32 %v3391, %v3503
    %v3505 = vpop.f32.mrb[0].mxu0
    %v3506 = vadd.f32 %v3393, %v3505
    %v3507 = vpop.f32.mrb[0].mxu0
    %v3508 = vadd.f32 %v3395, %v3507
    %3509 = vmatprep.mubr.bf16.mxu0 %v1679
    %3510 = vmatmul.mubr.bf16.gmra.mrb[0].mxu0 %v1678
    %v3511 = vpop.f32.mrb[0].mxu0
    %v3512 = vadd.f32 %v3399, %v3511
    %v3513 = vpop.f32.mrb[0].mxu0
    %v3514 = vadd.f32 %v3401, %v3513
    %v3515 = vpop.f32.mrb[0].mxu0
    %v3516 = vadd.f32 %v3403, %v3515
    %v3517 = vpop.f32.mrb[0].mxu0
    %v3518 = vadd.f32 %v3405, %v3517
    %3519 = vmatprep.mubr.bf16.mxu0 %v1682
    %3520 = vmatmul.mubr.bf16.gmra.mrb[0].mxu0 %v1681
    %v3521 = vpop.f32.mrb[0].mxu0
    %v3522 = vadd.f32 %v3409, %v3521
    %v3523 = vpop.f32.mrb[0].mxu0
    %v3524 = vadd.f32 %v3411, %v3523
    %v3525 = vpop.f32.mrb[0].mxu0
    %v3526 = vadd.f32 %v3413, %v3525
    %v3527 = vpop.f32.mrb[0].mxu0
    %v3528 = vadd.f32 %v3415, %v3527
    %3529 = vmatprep.mubr.bf16.mxu0 %v1685
    %3530 = vmatmul.mubr.bf16.gmra.mrb[0].mxu0 %v1684
    %v3531 = vpop.f32.mrb[0].mxu0
    %v3532 = vadd.f32 %v3419, %v3531
    %v3533 = vpop.f32.mrb[0].mxu0
    %v3534 = vadd.f32 %v3421, %v3533
    %v3535 = vpop.f32.mrb[0].mxu0
    %v3536 = vadd.f32 %v3423, %v3535
    %v3537 = vpop.f32.mrb[0].mxu0
    %v3538 = vadd.f32 %v3425, %v3537
    %3539 = vdwg.mxu0
    %3540 = vmatprep.subr.bf16.mxu0 %v2818
    %3541 = vmatpush1.bf16.msra.mxu0 %v2817
    %3542 = vmatprep.subr.bf16.mxu0 %v2820
    %3543 = vmatpush1.bf16.msra.mxu0 %v2819
    %3544 = vmatprep.subr.bf16.mxu0 %v2822
    %3545 = vmatpush1.bf16.msra.mxu0 %v2821
    %3546 = vmatprep.subr.bf16.mxu0 %v2824
    %3547 = vmatpush1.bf16.msra.mxu0 %v2823
    %3548 = vmatprep.subr.bf16.mxu0 %v2826
    %3549 = vmatpush1.bf16.msra.mxu0 %v2825
    %3550 = vmatprep.subr.bf16.mxu0 %v2828
    %3551 = vmatpush1.bf16.msra.mxu0 %v2827
    %3552 = vmatprep.subr.bf16.mxu0 %v2830
    %3553 = vmatpush1.bf16.msra.mxu0 %v2829
    %3554 = vmatprep.subr.bf16.mxu0 %v2832
    %3555 = vmatpush1.bf16.msra.mxu0 %v2831
    %3556 = vmatprep.subr.bf16.mxu0 %v2834
    %3557 = vmatpush1.bf16.msra.mxu0 %v2833
    %3558 = vmatprep.subr.bf16.mxu0 %v2836
    %3559 = vmatpush1.bf16.msra.mxu0 %v2835
    %3560 = vmatprep.subr.bf16.mxu0 %v2838
    %3561 = vmatpush1.bf16.msra.mxu0 %v2837
    %3562 = vmatprep.subr.bf16.mxu0 %v2840
    %3563 = vmatpush1.bf16.msra.mxu0 %v2839
    %3564 = vmatprep.subr.bf16.mxu0 %v2842
    %3565 = vmatpush1.bf16.msra.mxu0 %v2841
    %3566 = vmatprep.subr.bf16.mxu0 %v2844
    %3567 = vmatpush1.bf16.msra.mxu0 %v2843
    %3568 = vmatprep.subr.bf16.mxu0 %v2846
    %3569 = vmatpush1.bf16.msra.mxu0 %v2845
    %3570 = vmatprep.subr.bf16.mxu0 %v2848
    %3571 = vmatpush1.bf16.msra.mxu0 %v2847
    %3572 = vmatprep.mubr.bf16.mxu0 %v1688
    %3573 = vmatmul.mubr.bf16.gmra.mrb[0].mxu0 %v1687
    %v3574 = vpop.f32.mrb[0].mxu0
    %v3575 = vadd.f32 %v3462, %v3574
    %v3576 = vpop.f32.mrb[0].mxu0
    %v3577 = vadd.f32 %v3464, %v3576
    %v3578 = vpop.f32.mrb[0].mxu0
    %v3579 = vadd.f32 %v3466, %v3578
    %v3580 = vpop.f32.mrb[0].mxu0
    %v3581 = vadd.f32 %v3468, %v3580
    %3582 = vmatprep.mubr.bf16.mxu0 %v1691
    %3583 = vmatmul.mubr.bf16.gmra.mrb[0].mxu0 %v1690
    %v3584 = vpop.f32.mrb[0].mxu0
    %v3585 = vadd.f32 %v3472, %v3584
    %v3586 = vpop.f32.mrb[0].mxu0
    %v3587 = vadd.f32 %v3474, %v3586
    %v3588 = vpop.f32.mrb[0].mxu0
    %v3589 = vadd.f32 %v3476, %v3588
    %v3590 = vpop.f32.mrb[0].mxu0
    %v3591 = vadd.f32 %v3478, %v3590
    %3592 = vmatprep.mubr.bf16.mxu0 %v1694
    %3593 = vmatmul.mubr.bf16.gmra.mrb[0].mxu0 %v1693
    %v3594 = vpop.f32.mrb[0].mxu0
    %v3595 = vadd.f32 %v3482, %v3594
    %v3596 = vpop.f32.mrb[0].mxu0
    %v3597 = vadd.f32 %v3484, %v3596
    %v3598 = vpop.f32.mrb[0].mxu0
    %v3599 = vadd.f32 %v3486, %v3598
    %v3600 = vpop.f32.mrb[0].mxu0
    %v3601 = vadd.f32 %v3488, %v3600
    %3602 = vmatprep.mubr.bf16.mxu0 %v1697
    %3603 = vmatmul.mubr.bf16.gmra.mrb[0].mxu0 %v1696
    %v3604 = vpop.f32.mrb[0].mxu0
    %v3605 = vadd.f32 %v3492, %v3604
    %v3606 = vpop.f32.mrb[0].mxu0
    %v3607 = vadd.f32 %v3494, %v3606
    %v3608 = vpop.f32.mrb[0].mxu0
    %v3609 = vadd.f32 %v3496, %v3608
    %v3610 = vpop.f32.mrb[0].mxu0
    %v3611 = vadd.f32 %v3498, %v3610
    %3612 = vmatprep.mubr.bf16.mxu0 %v1700
    %3613 = vmatmul.mubr.bf16.gmra.mrb[0].mxu0 %v1699
    %v3614 = vpop.f32.mrb[0].mxu0
    %v3615 = vadd.f32 %v3502, %v3614
    %v3616 = vpop.f32.mrb[0].mxu0
    %v3617 = vadd.f32 %v3504, %v3616
    %v3618 = vpop.f32.mrb[0].mxu0
    %v3619 = vadd.f32 %v3506, %v3618
    %v3620 = vpop.f32.mrb[0].mxu0
    %v3621 = vadd.f32 %v3508, %v3620
    %3622 = vmatprep.mubr.bf16.mxu0 %v1703
    %3623 = vmatmul.mubr.bf16.gmra.mrb[0].mxu0 %v1702
    %v3624 = vpop.f32.mrb[0].mxu0
    %v3625 = vadd.f32 %v3512, %v3624
    %v3626 = vpop.f32.mrb[0].mxu0
    %v3627 = vadd.f32 %v3514, %v3626
    %v3628 = vpop.f32.mrb[0].mxu0
    %v3629 = vadd.f32 %v3516, %v3628
    %v3630 = vpop.f32.mrb[0].mxu0
    %v3631 = vadd.f32 %v3518, %v3630
    %3632 = vmatprep.mubr.bf16.mxu0 %v1706
    %3633 = vmatmul.mubr.bf16.gmra.mrb[0].mxu0 %v1705
    %v3634 = vpop.f32.mrb[0].mxu0
    %v3635 = vadd.f32 %v3522, %v3634
    %v3636 = vpop.f32.mrb[0].mxu0
    %v3637 = vadd.f32 %v3524, %v3636
    %v3638 = vpop.f32.mrb[0].mxu0
    %v3639 = vadd.f32 %v3526, %v3638
    %v3640 = vpop.f32.mrb[0].mxu0
    %v3641 = vadd.f32 %v3528, %v3640
    %3642 = vmatprep.mubr.bf16.mxu0 %v1709
    %3643 = vmatmul.mubr.bf16.gmra.mrb[0].mxu0 %v1708
    %v3644 = vpop.f32.mrb[0].mxu0
    %v3645 = vadd.f32 %v3532, %v3644
    %v3646 = vpop.f32.mrb[0].mxu0
    %v3647 = vadd.f32 %v3534, %v3646
    %v3648 = vpop.f32.mrb[0].mxu0
    %v3649 = vadd.f32 %v3536, %v3648
    %v3650 = vpop.f32.mrb[0].mxu0
    %v3651 = vadd.f32 %v3538, %v3650
    %3652 = vdwg.mxu0
    %3653 = vmatprep.subr.bf16.mxu0 %v2850
    %3654 = vmatpush1.bf16.msra.mxu0 %v2849
    %3655 = vmatprep.subr.bf16.mxu0 %v2852
    %3656 = vmatpush1.bf16.msra.mxu0 %v2851
    %3657 = vmatprep.subr.bf16.mxu0 %v2854
    %3658 = vmatpush1.bf16.msra.mxu0 %v2853
    %3659 = vmatprep.subr.bf16.mxu0 %v2856
    %3660 = vmatpush1.bf16.msra.mxu0 %v2855
    %3661 = vmatprep.subr.bf16.mxu0 %v2858
    %3662 = vmatpush1.bf16.msra.mxu0 %v2857
    %3663 = vmatprep.subr.bf16.mxu0 %v2860
    %3664 = vmatpush1.bf16.msra.mxu0 %v2859
    %3665 = vmatprep.subr.bf16.mxu0 %v2862
    %3666 = vmatpush1.bf16.msra.mxu0 %v2861
    %3667 = vmatprep.subr.bf16.mxu0 %v2864
    %3668 = vmatpush1.bf16.msra.mxu0 %v2863
    %3669 = vmatprep.subr.bf16.mxu0 %v2866
    %3670 = vmatpush1.bf16.msra.mxu0 %v2865
    %3671 = vmatprep.subr.bf16.mxu0 %v2868
    %3672 = vmatpush1.bf16.msra.mxu0 %v2867
    %3673 = vmatprep.subr.bf16.mxu0 %v2870
    %3674 = vmatpush1.bf16.msra.mxu0 %v2869
    %3675 = vmatprep.subr.bf16.mxu0 %v2872
    %3676 = vmatpush1.bf16.msra.mxu0 %v2871
    %3677 = vmatprep.subr.bf16.mxu0 %v2874
    %3678 = vmatpush1.bf16.msra.mxu0 %v2873
    %3679 = vmatprep.subr.bf16.mxu0 %v2876
    %3680 = vmatpush1.bf16.msra.mxu0 %v2875
    %3681 = vmatprep.subr.bf16.mxu0 %v2878
    %3682 = vmatpush1.bf16.msra.mxu0 %v2877
    %3683 = vmatprep.subr.bf16.mxu0 %v2880
    %3684 = vmatpush1.bf16.msra.mxu0 %v2879
    %3685 = vmatprep.mubr.bf16.mxu0 %v1712
    %3686 = vmatmul.mubr.bf16.gmra.mrb[0].mxu0 %v1689
    %v3687 = vpop.f32.mrb[0].mxu0
    %v3688 = vadd.f32 %v3575, %v3687
    %v3689 = vpop.f32.mrb[0].mxu0
    %v3690 = vadd.f32 %v3577, %v3689
    %v3691 = vpop.f32.mrb[0].mxu0
    %v3692 = vadd.f32 %v3579, %v3691
    %v3693 = vpop.f32.mrb[0].mxu0
    %v3694 = vadd.f32 %v3581, %v3693
    %3695 = vmatprep.mubr.bf16.mxu0 %v1715
    %3696 = vmatmul.mubr.bf16.gmra.mrb[0].mxu0 %v1692
    %v3697 = vpop.f32.mrb[0].mxu0
    %v3698 = vadd.f32 %v3585, %v3697
    %v3699 = vpop.f32.mrb[0].mxu0
    %v3700 = vadd.f32 %v3587, %v3699
    %v3701 = vpop.f32.mrb[0].mxu0
    %v3702 = vadd.f32 %v3589, %v3701
    %v3703 = vpop.f32.mrb[0].mxu0
    %v3704 = vadd.f32 %v3591, %v3703
    %3705 = vmatprep.mubr.bf16.mxu0 %v1718
    %3706 = vmatmul.mubr.bf16.gmra.mrb[0].mxu0 %v1695
    %v3707 = vpop.f32.mrb[0].mxu0
    %v3708 = vadd.f32 %v3595, %v3707
    %v3709 = vpop.f32.mrb[0].mxu0
    %v3710 = vadd.f32 %v3597, %v3709
    %v3711 = vpop.f32.mrb[0].mxu0
    %v3712 = vadd.f32 %v3599, %v3711
    %v3713 = vpop.f32.mrb[0].mxu0
    %v3714 = vadd.f32 %v3601, %v3713
    %3715 = vmatprep.mubr.bf16.mxu0 %v1721
    %3716 = vmatmul.mubr.bf16.gmra.mrb[0].mxu0 %v1698
    %v3717 = vpop.f32.mrb[0].mxu0
    %v3718 = vadd.f32 %v3605, %v3717
    %v3719 = vpop.f32.mrb[0].mxu0
    %v3720 = vadd.f32 %v3607, %v3719
    %v3721 = vpop.f32.mrb[0].mxu0
    %v3722 = vadd.f32 %v3609, %v3721
    %v3723 = vpop.f32.mrb[0].mxu0
    %v3724 = vadd.f32 %v3611, %v3723
    %3725 = vmatprep.mubr.bf16.mxu0 %v1724
    %3726 = vmatmul.mubr.bf16.gmra.mrb[0].mxu0 %v1701
    %v3727 = vpop.f32.mrb[0].mxu0
    %v3728 = vadd.f32 %v3615, %v3727
    %v3729 = vpop.f32.mrb[0].mxu0
    %v3730 = vadd.f32 %v3617, %v3729
    %v3731 = vpop.f32.mrb[0].mxu0
    %v3732 = vadd.f32 %v3619, %v3731
    %v3733 = vpop.f32.mrb[0].mxu0
    %v3734 = vadd.f32 %v3621, %v3733
    %3735 = vmatprep.mubr.bf16.mxu0 %v1727
    %3736 = vmatmul.mubr.bf16.gmra.mrb[0].mxu0 %v1704
    %v3737 = vpop.f32.mrb[0].mxu0
    %v3738 = vadd.f32 %v3625, %v3737
    %v3739 = vpop.f32.mrb[0].mxu0
    %v3740 = vadd.f32 %v3627, %v3739
    %v3741 = vpop.f32.mrb[0].mxu0
    %v3742 = vadd.f32 %v3629, %v3741
    %v3743 = vpop.f32.mrb[0].mxu0
    %v3744 = vadd.f32 %v3631, %v3743
    %3745 = vmatprep.mubr.bf16.mxu0 %v1730
    %3746 = vmatmul.mubr.bf16.gmra.mrb[0].mxu0 %v1707
    %v3747 = vpop.f32.mrb[0].mxu0
    %v3748 = vadd.f32 %v3635, %v3747
    %v3749 = vpop.f32.mrb[0].mxu0
    %v3750 = vadd.f32 %v3637, %v3749
    %v3751 = vpop.f32.mrb[0].mxu0
    %v3752 = vadd.f32 %v3639, %v3751
    %v3753 = vpop.f32.mrb[0].mxu0
    %v3754 = vadd.f32 %v3641, %v3753
    %3755 = vmatprep.mubr.bf16.mxu0 %v1733
    %3756 = vmatmul.mubr.bf16.gmra.mrb[0].mxu0 %v1710
    %v3757 = vpop.f32.mrb[0].mxu0
    %v3758 = vadd.f32 %v3645, %v3757
    %v3759 = vpop.f32.mrb[0].mxu0
    %v3760 = vadd.f32 %v3647, %v3759
    %v3761 = vpop.f32.mrb[0].mxu0
    %v3762 = vadd.f32 %v3649, %v3761
    %v3763 = vpop.f32.mrb[0].mxu0
    %v3764 = vadd.f32 %v3651, %v3763
    %3765 = vdwg.mxu0
    %3766 = vmatprep.subr.bf16.mxu0 %v2882
    %3767 = vmatpush1.bf16.msra.mxu0 %v2881
    %3768 = vmatprep.subr.bf16.mxu0 %v2884
    %3769 = vmatpush1.bf16.msra.mxu0 %v2883
    %3770 = vmatprep.subr.bf16.mxu0 %v2886
    %3771 = vmatpush1.bf16.msra.mxu0 %v2885
    %3772 = vmatprep.subr.bf16.mxu0 %v2888
    %3773 = vmatpush1.bf16.msra.mxu0 %v2887
    %3774 = vmatprep.subr.bf16.mxu0 %v2890
    %3775 = vmatpush1.bf16.msra.mxu0 %v2889
    %3776 = vmatprep.subr.bf16.mxu0 %v2892
    %3777 = vmatpush1.bf16.msra.mxu0 %v2891
    %3778 = vmatprep.subr.bf16.mxu0 %v2894
    %3779 = vmatpush1.bf16.msra.mxu0 %v2893
    %3780 = vmatprep.subr.bf16.mxu0 %v2896
    %3781 = vmatpush1.bf16.msra.mxu0 %v2895
    %3782 = vmatprep.subr.bf16.mxu0 %v2898
    %3783 = vmatpush1.bf16.msra.mxu0 %v2897
    %3784 = vmatprep.subr.bf16.mxu0 %v2900
    %3785 = vmatpush1.bf16.msra.mxu0 %v2899
    %3786 = vmatprep.subr.bf16.mxu0 %v2902
    %3787 = vmatpush1.bf16.msra.mxu0 %v2901
    %3788 = vmatprep.subr.bf16.mxu0 %v2904
    %3789 = vmatpush1.bf16.msra.mxu0 %v2903
    %3790 = vmatprep.subr.bf16.mxu0 %v2906
    %3791 = vmatpush1.bf16.msra.mxu0 %v2905
    %3792 = vmatprep.subr.bf16.mxu0 %v2908
    %3793 = vmatpush1.bf16.msra.mxu0 %v2907
    %3794 = vmatprep.subr.bf16.mxu0 %v2910
    %3795 = vmatpush1.bf16.msra.mxu0 %v2909
    %3796 = vmatprep.subr.bf16.mxu0 %v2912
    %3797 = vmatpush1.bf16.msra.mxu0 %v2911
    %3798 = vmatprep.mubr.bf16.mxu0 %v1714
    %3799 = vmatmul.mubr.bf16.gmra.mrb[0].mxu0 %v1713
    %v3800 = vpop.f32.mrb[0].mxu0
    %v3801 = vadd.f32 %v3688, %v3800
    %v3802 = vpop.f32.mrb[0].mxu0
    %v3803 = vadd.f32 %v3690, %v3802
    %v3804 = vpop.f32.mrb[0].mxu0
    %v3805 = vadd.f32 %v3692, %v3804
    %v3806 = vpop.f32.mrb[0].mxu0
    %v3807 = vadd.f32 %v3694, %v3806
    %3808 = vmatprep.mubr.bf16.mxu0 %v1717
    %3809 = vmatmul.mubr.bf16.gmra.mrb[0].mxu0 %v1716
    %v3810 = vpop.f32.mrb[0].mxu0
    %v3811 = vadd.f32 %v3698, %v3810
    %v3812 = vpop.f32.mrb[0].mxu0
    %v3813 = vadd.f32 %v3700, %v3812
    %v3814 = vpop.f32.mrb[0].mxu0
    %v3815 = vadd.f32 %v3702, %v3814
    %v3816 = vpop.f32.mrb[0].mxu0
    %v3817 = vadd.f32 %v3704, %v3816
    %3818 = vmatprep.mubr.bf16.mxu0 %v1720
    %3819 = vmatmul.mubr.bf16.gmra.mrb[0].mxu0 %v1719
    %v3820 = vpop.f32.mrb[0].mxu0
    %v3821 = vadd.f32 %v3708, %v3820
    %v3822 = vpop.f32.mrb[0].mxu0
    %v3823 = vadd.f32 %v3710, %v3822
    %v3824 = vpop.f32.mrb[0].mxu0
    %v3825 = vadd.f32 %v3712, %v3824
    %v3826 = vpop.f32.mrb[0].mxu0
    %v3827 = vadd.f32 %v3714, %v3826
    %3828 = vmatprep.mubr.bf16.mxu0 %v1723
    %3829 = vmatmul.mubr.bf16.gmra.mrb[0].mxu0 %v1722
    %v3830 = vpop.f32.mrb[0].mxu0
    %v3831 = vadd.f32 %v3718, %v3830
    %v3832 = vpop.f32.mrb[0].mxu0
    %v3833 = vadd.f32 %v3720, %v3832
    %v3834 = vpop.f32.mrb[0].mxu0
    %v3835 = vadd.f32 %v3722, %v3834
    %v3836 = vpop.f32.mrb[0].mxu0
    %v3837 = vadd.f32 %v3724, %v3836
    %3838 = vmatprep.mubr.bf16.mxu0 %v1726
    %3839 = vmatmul.mubr.bf16.gmra.mrb[0].mxu0 %v1725
    %v3840 = vpop.f32.mrb[0].mxu0
    %v3841 = vadd.f32 %v3728, %v3840
    %v3842 = vpop.f32.mrb[0].mxu0
    %v3843 = vadd.f32 %v3730, %v3842
    %v3844 = vpop.f32.mrb[0].mxu0
    %v3845 = vadd.f32 %v3732, %v3844
    %v3846 = vpop.f32.mrb[0].mxu0
    %v3847 = vadd.f32 %v3734, %v3846
    %3848 = vmatprep.mubr.bf16.mxu0 %v1729
    %3849 = vmatmul.mubr.bf16.gmra.mrb[0].mxu0 %v1728
    %v3850 = vpop.f32.mrb[0].mxu0
    %v3851 = vadd.f32 %v3738, %v3850
    %v3852 = vpop.f32.mrb[0].mxu0
    %v3853 = vadd.f32 %v3740, %v3852
    %v3854 = vpop.f32.mrb[0].mxu0
    %v3855 = vadd.f32 %v3742, %v3854
    %v3856 = vpop.f32.mrb[0].mxu0
    %v3857 = vadd.f32 %v3744, %v3856
    %3858 = vmatprep.mubr.bf16.mxu0 %v1732
    %3859 = vmatmul.mubr.bf16.gmra.mrb[0].mxu0 %v1731
    %v3860 = vpop.f32.mrb[0].mxu0
    %v3861 = vadd.f32 %v3748, %v3860
    %v3862 = vpop.f32.mrb[0].mxu0
    %v3863 = vadd.f32 %v3750, %v3862
    %v3864 = vpop.f32.mrb[0].mxu0
    %v3865 = vadd.f32 %v3752, %v3864
    %v3866 = vpop.f32.mrb[0].mxu0
    %v3867 = vadd.f32 %v3754, %v3866
    %3868 = vmatprep.mubr.bf16.mxu0 %v1735
    %3869 = vmatmul.mubr.bf16.gmra.mrb[0].mxu0 %v1734
    %v3870 = vpop.f32.mrb[0].mxu0
    %v3871 = vadd.f32 %v3758, %v3870
    %v3872 = vpop.f32.mrb[0].mxu0
    %v3873 = vadd.f32 %v3760, %v3872
    %v3874 = vpop.f32.mrb[0].mxu0
    %v3875 = vadd.f32 %v3762, %v3874
    %v3876 = vpop.f32.mrb[0].mxu0
    %v3877 = vadd.f32 %v3764, %v3876
    %3878 = vdwg.mxu0
    %3879 = vmatprep.subr.bf16.mxu0 %v2914
    %3880 = vmatpush1.bf16.msra.mxu0 %v2913
    %3881 = vmatprep.subr.bf16.mxu0 %v2916
    %3882 = vmatpush1.bf16.msra.mxu0 %v2915
    %3883 = vmatprep.subr.bf16.mxu0 %v2918
    %3884 = vmatpush1.bf16.msra.mxu0 %v2917
    %3885 = vmatprep.subr.bf16.mxu0 %v2920
    %3886 = vmatpush1.bf16.msra.mxu0 %v2919
    %3887 = vmatprep.subr.bf16.mxu0 %v2922
    %3888 = vmatpush1.bf16.msra.mxu0 %v2921
    %3889 = vmatprep.subr.bf16.mxu0 %v2924
    %3890 = vmatpush1.bf16.msra.mxu0 %v2923
    %3891 = vmatprep.subr.bf16.mxu0 %v2926
    %3892 = vmatpush1.bf16.msra.mxu0 %v2925
    %3893 = vmatprep.subr.bf16.mxu0 %v2928
    %3894 = vmatpush1.bf16.msra.mxu0 %v2927
    %3895 = vmatprep.subr.bf16.mxu0 %v2930
    %3896 = vmatpush1.bf16.msra.mxu0 %v2929
    %3897 = vmatprep.subr.bf16.mxu0 %v2932
    %3898 = vmatpush1.bf16.msra.mxu0 %v2931
    %3899 = vmatprep.subr.bf16.mxu0 %v2934
    %3900 = vmatpush1.bf16.msra.mxu0 %v2933
    %3901 = vmatprep.subr.bf16.mxu0 %v2936
    %3902 = vmatpush1.bf16.msra.mxu0 %v2935
    %3903 = vmatprep.subr.bf16.mxu0 %v2938
    %3904 = vmatpush1.bf16.msra.mxu0 %v2937
    %3905 = vmatprep.subr.bf16.mxu0 %v2940
    %3906 = vmatpush1.bf16.msra.mxu0 %v2939
    %3907 = vmatprep.subr.bf16.mxu0 %v2942
    %3908 = vmatpush1.bf16.msra.mxu0 %v2941
    %3909 = vmatprep.subr.bf16.mxu0 %v2944
    %3910 = vmatpush1.bf16.msra.mxu0 %v2943
    %3911 = vmatprep.mubr.bf16.mxu0 %v1738
    %3912 = vmatmul.mubr.bf16.gmra.mrb[0].mxu0 %v1737
    %v3913 = vpop.f32.mrb[0].mxu0
    %v3914 = vadd.f32 %v3801, %v3913
    %v3915 = vpop.f32.mrb[0].mxu0
    %v3916 = vadd.f32 %v3803, %v3915
    %v3917 = vpop.f32.mrb[0].mxu0
    %v3918 = vadd.f32 %v3805, %v3917
    %v3919 = vpop.f32.mrb[0].mxu0
    %v3920 = vadd.f32 %v3807, %v3919
    %3921 = vmatprep.mubr.bf16.mxu0 %v1741
    %3922 = vmatmul.mubr.bf16.gmra.mrb[0].mxu0 %v1740
    %v3923 = vpop.f32.mrb[0].mxu0
    %v3924 = vadd.f32 %v3811, %v3923
    %v3925 = vpop.f32.mrb[0].mxu0
    %v3926 = vadd.f32 %v3813, %v3925
    %v3927 = vpop.f32.mrb[0].mxu0
    %v3928 = vadd.f32 %v3815, %v3927
    %v3929 = vpop.f32.mrb[0].mxu0
    %v3930 = vadd.f32 %v3817, %v3929
    %3931 = vmatprep.mubr.bf16.mxu0 %v1744
    %3932 = vmatmul.mubr.bf16.gmra.mrb[0].mxu0 %v1743
    %v3933 = vpop.f32.mrb[0].mxu0
    %v3934 = vadd.f32 %v3821, %v3933
    %v3935 = vpop.f32.mrb[0].mxu0
    %v3936 = vadd.f32 %v3823, %v3935
    %v3937 = vpop.f32.mrb[0].mxu0
    %v3938 = vadd.f32 %v3825, %v3937
    %v3939 = vpop.f32.mrb[0].mxu0
    %v3940 = vadd.f32 %v3827, %v3939
    %3941 = vmatprep.mubr.bf16.mxu0 %v1747
    %3942 = vmatmul.mubr.bf16.gmra.mrb[0].mxu0 %v1746
    %v3943 = vpop.f32.mrb[0].mxu0
    %v3944 = vadd.f32 %v3831, %v3943
    %v3945 = vpop.f32.mrb[0].mxu0
    %v3946 = vadd.f32 %v3833, %v3945
    %v3947 = vpop.f32.mrb[0].mxu0
    %v3948 = vadd.f32 %v3835, %v3947
    %v3949 = vpop.f32.mrb[0].mxu0
    %v3950 = vadd.f32 %v3837, %v3949
    %3951 = vmatprep.mubr.bf16.mxu0 %v1750
    %3952 = vmatmul.mubr.bf16.gmra.mrb[0].mxu0 %v1749
    %v3953 = vpop.f32.mrb[0].mxu0
    %v3954 = vadd.f32 %v3841, %v3953
    %v3955 = vpop.f32.mrb[0].mxu0
    %v3956 = vadd.f32 %v3843, %v3955
    %v3957 = vpop.f32.mrb[0].mxu0
    %v3958 = vadd.f32 %v3845, %v3957
    %v3959 = vpop.f32.mrb[0].mxu0
    %v3960 = vadd.f32 %v3847, %v3959
    %3961 = vmatprep.mubr.bf16.mxu0 %v1753
    %3962 = vmatmul.mubr.bf16.gmra.mrb[0].mxu0 %v1752
    %v3963 = vpop.f32.mrb[0].mxu0
    %v3964 = vadd.f32 %v3851, %v3963
    %v3965 = vpop.f32.mrb[0].mxu0
    %v3966 = vadd.f32 %v3853, %v3965
    %v3967 = vpop.f32.mrb[0].mxu0
    %v3968 = vadd.f32 %v3855, %v3967
    %v3969 = vpop.f32.mrb[0].mxu0
    %v3970 = vadd.f32 %v3857, %v3969
    %3971 = vmatprep.mubr.bf16.mxu0 %v1756
    %3972 = vmatmul.mubr.bf16.gmra.mrb[0].mxu0 %v1755
    %v3973 = vpop.f32.mrb[0].mxu0
    %v3974 = vadd.f32 %v3861, %v3973
    %v3975 = vpop.f32.mrb[0].mxu0
    %v3976 = vadd.f32 %v3863, %v3975
    %v3977 = vpop.f32.mrb[0].mxu0
    %v3978 = vadd.f32 %v3865, %v3977
    %v3979 = vpop.f32.mrb[0].mxu0
    %v3980 = vadd.f32 %v3867, %v3979
    %3981 = vmatprep.mubr.bf16.mxu0 %v1759
    %3982 = vmatmul.mubr.bf16.gmra.mrb[0].mxu0 %v1758
    %v3983 = vpop.f32.mrb[0].mxu0
    %v3984 = vadd.f32 %v3871, %v3983
    %v3985 = vpop.f32.mrb[0].mxu0
    %v3986 = vadd.f32 %v3873, %v3985
    %v3987 = vpop.f32.mrb[0].mxu0
    %v3988 = vadd.f32 %v3875, %v3987
    %v3989 = vpop.f32.mrb[0].mxu0
    %v3990 = vadd.f32 %v3877, %v3989
    %3991 = vdwg.mxu0
    %3992 = vmatprep.subr.bf16.mxu0 %v2946
    %3993 = vmatpush1.bf16.msra.mxu0 %v2945
    %3994 = vmatprep.subr.bf16.mxu0 %v2948
    %3995 = vmatpush1.bf16.msra.mxu0 %v2947
    %3996 = vmatprep.subr.bf16.mxu0 %v2950
    %3997 = vmatpush1.bf16.msra.mxu0 %v2949
    %3998 = vmatprep.subr.bf16.mxu0 %v2952
    %3999 = vmatpush1.bf16.msra.mxu0 %v2951
    %4000 = vmatprep.subr.bf16.mxu0 %v2954
    %4001 = vmatpush1.bf16.msra.mxu0 %v2953
    %4002 = vmatprep.subr.bf16.mxu0 %v2956
    %4003 = vmatpush1.bf16.msra.mxu0 %v2955
    %4004 = vmatprep.subr.bf16.mxu0 %v2958
    %4005 = vmatpush1.bf16.msra.mxu0 %v2957
    %4006 = vmatprep.subr.bf16.mxu0 %v2960
    %4007 = vmatpush1.bf16.msra.mxu0 %v2959
    %4008 = vmatprep.subr.bf16.mxu0 0
    %4009 = vmatpush1.bf16.msra.mxu0 0
    %4010 = vmatprep.subr.bf16.mxu0 0
    %4011 = vmatpush1.bf16.msra.mxu0 0
    %4012 = vmatprep.subr.bf16.mxu0 0
    %4013 = vmatpush1.bf16.msra.mxu0 0
    %4014 = vmatprep.subr.bf16.mxu0 0
    %4015 = vmatpush1.bf16.msra.mxu0 0
    %4016 = vmatprep.subr.bf16.mxu0 0
    %4017 = vmatpush1.bf16.msra.mxu0 0
    %4018 = vmatprep.subr.bf16.mxu0 0
    %4019 = vmatpush1.bf16.msra.mxu0 0
    %4020 = vmatprep.subr.bf16.mxu0 0
    %4021 = vmatpush1.bf16.msra.mxu0 0
    %4022 = vmatprep.subr.bf16.mxu0 0
    %4023 = vmatpush1.bf16.msra.mxu0 0
    %4024 = vmatprep.mubr.bf16.mxu0 0
    %4025 = vmatmul.mubr.bf16.gmra.mrb[0].mxu0 %v1739
    %v4026 = vpop.f32.mrb[0].mxu0
    %v4027 = vadd.f32 %v3914, %v4026
    %v4028 = vpop.f32.mrb[0].mxu0
    %v4029 = vadd.f32 %v3916, %v4028
    %v4030 = vpop.f32.mrb[0].mxu0
    %v4031 = vadd.f32 %v3918, %v4030
    %v4032 = vpop.f32.mrb[0].mxu0
    %v4033 = vadd.f32 %v3920, %v4032
    %4034 = vmatprep.mubr.bf16.mxu0 0
    %4035 = vmatmul.mubr.bf16.gmra.mrb[0].mxu0 %v1742
    %v4036 = vpop.f32.mrb[0].mxu0
    %v4037 = vadd.f32 %v3924, %v4036
    %v4038 = vpop.f32.mrb[0].mxu0
    %v4039 = vadd.f32 %v3926, %v4038
    %v4040 = vpop.f32.mrb[0].mxu0
    %v4041 = vadd.f32 %v3928, %v4040
    %v4042 = vpop.f32.mrb[0].mxu0
    %v4043 = vadd.f32 %v3930, %v4042
    %4044 = vmatprep.mubr.bf16.mxu0 0
    %4045 = vmatmul.mubr.bf16.gmra.mrb[0].mxu0 %v1745
    %v4046 = vpop.f32.mrb[0].mxu0
    %v4047 = vadd.f32 %v3934, %v4046
    %v4048 = vpop.f32.mrb[0].mxu0
    %v4049 = vadd.f32 %v3936, %v4048
    %v4050 = vpop.f32.mrb[0].mxu0
    %v4051 = vadd.f32 %v3938, %v4050
    %v4052 = vpop.f32.mrb[0].mxu0
    %v4053 = vadd.f32 %v3940, %v4052
    %4054 = vmatprep.mubr.bf16.mxu0 0
    %4055 = vmatmul.mubr.bf16.gmra.mrb[0].mxu0 %v1748
    %v4056 = vpop.f32.mrb[0].mxu0
    %v4057 = vadd.f32 %v3944, %v4056
    %v4058 = vpop.f32.mrb[0].mxu0
    %v4059 = vadd.f32 %v3946, %v4058
    %v4060 = vpop.f32.mrb[0].mxu0
    %v4061 = vadd.f32 %v3948, %v4060
    %v4062 = vpop.f32.mrb[0].mxu0
    %v4063 = vadd.f32 %v3950, %v4062
    %4064 = vmatprep.mubr.bf16.mxu0 0
    %4065 = vmatmul.mubr.bf16.gmra.mrb[0].mxu0 %v1751
    %v4066 = vpop.f32.mrb[0].mxu0
    %v4067 = vadd.f32 %v3954, %v4066
    %v4068 = vpop.f32.mrb[0].mxu0
    %v4069 = vadd.f32 %v3956, %v4068
    %v4070 = vpop.f32.mrb[0].mxu0
    %v4071 = vadd.f32 %v3958, %v4070
    %v4072 = vpop.f32.mrb[0].mxu0
    %v4073 = vadd.f32 %v3960, %v4072
    %4074 = vmatprep.mubr.bf16.mxu0 0
    %4075 = vmatmul.mubr.bf16.gmra.mrb[0].mxu0 %v1754
    %v4076 = vpop.f32.mrb[0].mxu0
    %v4077 = vadd.f32 %v3964, %v4076
    %v4078 = vpop.f32.mrb[0].mxu0
    %v4079 = vadd.f32 %v3966, %v4078
    %v4080 = vpop.f32.mrb[0].mxu0
    %v4081 = vadd.f32 %v3968, %v4080
    %v4082 = vpop.f32.mrb[0].mxu0
    %v4083 = vadd.f32 %v3970, %v4082
    %4084 = vmatprep.mubr.bf16.mxu0 0
    %4085 = vmatmul.mubr.bf16.gmra.mrb[0].mxu0 %v1757
    %v4086 = vpop.f32.mrb[0].mxu0
    %v4087 = vadd.f32 %v3974, %v4086
    %v4088 = vpop.f32.mrb[0].mxu0
    %v4089 = vadd.f32 %v3976, %v4088
    %v4090 = vpop.f32.mrb[0].mxu0
    %v4091 = vadd.f32 %v3978, %v4090
    %v4092 = vpop.f32.mrb[0].mxu0
    %v4093 = vadd.f32 %v3980, %v4092
    %4094 = vmatprep.mubr.bf16.mxu0 0
    %4095 = vmatmul.mubr.bf16.gmra.mrb[0].mxu0 %v1760
    %v4096 = vpop.f32.mrb[0].mxu0
    %v4097 = vadd.f32 %v3984, %v4096
    %v4098 = vpop.f32.mrb[0].mxu0
    %v4099 = vadd.f32 %v3986, %v4098
    %v4100 = vpop.f32.mrb[0].mxu0
    %v4101 = vadd.f32 %v3988, %v4100
    %v4102 = vpop.f32.mrb[0].mxu0
    %v4103 = vadd.f32 %v3990, %v4102
    %4104 = vdwg.mxu0
    %v4105 = vld [vmem:[%s4] sm:$0xf]
    %v4108 = vunpack.c.l.s4 1966171168
    %v4109 = vunpack.c.0.s8 %v4108
    %v4110 = vlaneseq
    %v4111 = vshrl.u32 %v4110, 7
    %v4112 = vsub.s32 %v4109, %v4111
    %v4113 = vrot.slane %v4105, %v4112
    %v4114 = vcombine.high %v4113, %v4113
    %v4115 = vlaneseq
    %v4116 = vshrl.u32 %v4115, 7
    %v4117 = vsub.s32 0, %v4116
    %v4118 = vrot.slane %v4113, %v4117
    %v4119 = vlaneseq
    %v4120 = vshrl.u32 %v4119, 7
    %v4121 = vsub.s32 1, %v4120
    %v4122 = vrot.slane %v4113, %v4121
    %v4123 = vlaneseq
    %v4124 = vshrl.u32 %v4123, 7
    %v4125 = vsub.s32 0, %v4124
    %v4126 = vrot.slane %v4114, %v4125
    %v4127 = vlaneseq
    %v4128 = vshrl.u32 %v4127, 7
    %v4129 = vsub.s32 1, %v4128
    %v4130 = vrot.slane %v4114, %v4129
    %v4135 = vadd.f32 %v4027, %v4118
    %v4136 = vadd.f32 %v4029, %v4122
    %v4137 = vadd.f32 %v4031, %v4126
    %v4138 = vadd.f32 %v4033, %v4130
    %v4139 = vadd.f32 %v4037, %v4118
    %v4140 = vadd.f32 %v4039, %v4122
    %v4141 = vadd.f32 %v4041, %v4126
    %v4142 = vadd.f32 %v4043, %v4130
    %v4143 = vadd.f32 %v4047, %v4118
    %v4144 = vadd.f32 %v4049, %v4122
    %v4145 = vadd.f32 %v4051, %v4126
    %v4146 = vadd.f32 %v4053, %v4130
    %v4147 = vadd.f32 %v4057, %v4118
    %v4148 = vadd.f32 %v4059, %v4122
    %v4149 = vadd.f32 %v4061, %v4126
    %v4150 = vadd.f32 %v4063, %v4130
    %v4151 = vadd.f32 %v4067, %v4118
    %v4152 = vadd.f32 %v4069, %v4122
    %v4153 = vadd.f32 %v4071, %v4126
    %v4154 = vadd.f32 %v4073, %v4130
    %v4155 = vadd.f32 %v4077, %v4118
    %v4156 = vadd.f32 %v4079, %v4122
    %v4157 = vadd.f32 %v4081, %v4126
    %v4158 = vadd.f32 %v4083, %v4130
    %v4159 = vadd.f32 %v4087, %v4118
    %v4160 = vadd.f32 %v4089, %v4122
    %v4161 = vadd.f32 %v4091, %v4126
    %v4162 = vadd.f32 %v4093, %v4130
    %v4163 = vadd.f32 %v4097, %v4118
    %v4164 = vadd.f32 %v4099, %v4122
    %v4165 = vadd.f32 %v4101, %v4126
    %v4166 = vadd.f32 %v4103, %v4130
    %v4167 = vmax.f32 %v4135, 0.0
    %v4168 = vmax.f32 %v4136, 0.0
    %v4169 = vmax.f32 %v4137, 0.0
    %v4170 = vmax.f32 %v4138, 0.0
    %v4171 = vmax.f32 %v4139, 0.0
    %v4172 = vmax.f32 %v4140, 0.0
    %v4173 = vmax.f32 %v4141, 0.0
    %v4174 = vmax.f32 %v4142, 0.0
    %v4175 = vmax.f32 %v4143, 0.0
    %v4176 = vmax.f32 %v4144, 0.0
    %v4177 = vmax.f32 %v4145, 0.0
    %v4178 = vmax.f32 %v4146, 0.0
    %v4179 = vmax.f32 %v4147, 0.0
    %v4180 = vmax.f32 %v4148, 0.0
    %v4181 = vmax.f32 %v4149, 0.0
    %v4182 = vmax.f32 %v4150, 0.0
    %v4183 = vmax.f32 %v4151, 0.0
    %v4184 = vmax.f32 %v4152, 0.0
    %v4185 = vmax.f32 %v4153, 0.0
    %v4186 = vmax.f32 %v4154, 0.0
    %v4187 = vmax.f32 %v4155, 0.0
    %v4188 = vmax.f32 %v4156, 0.0
    %v4189 = vmax.f32 %v4157, 0.0
    %v4190 = vmax.f32 %v4158, 0.0
    %v4191 = vmax.f32 %v4159, 0.0
    %v4192 = vmax.f32 %v4160, 0.0
    %v4193 = vmax.f32 %v4161, 0.0
    %v4194 = vmax.f32 %v4162, 0.0
    %v4195 = vmax.f32 %v4163, 0.0
    %v4196 = vmax.f32 %v4164, 0.0
    %v4197 = vmax.f32 %v4165, 0.0
    %v4198 = vmax.f32 %v4166, 0.0
    %v4199 = vmax.f32 %v4167, %v4168
    %v4200 = vmax.f32 %v4169, %v4170
    %v4201 = vmax.f32 %v4171, %v4172
    %v4202 = vmax.f32 %v4173, %v4174
    %v4203 = vmax.f32 %v4175, %v4176
    %v4204 = vmax.f32 %v4177, %v4178
    %v4205 = vmax.f32 %v4179, %v4180
    %v4206 = vmax.f32 %v4181, %v4182
    %v4207 = vmax.f32 %v4183, %v4184
    %v4208 = vmax.f32 %v4185, %v4186
    %v4209 = vmax.f32 %v4187, %v4188
    %v4210 = vmax.f32 %v4189, %v4190
    %v4211 = vmax.f32 %v4191, %v4192
    %v4212 = vmax.f32 %v4193, %v4194
    %v4213 = vmax.f32 %v4195, %v4196
    %v4214 = vmax.f32 %v4197, %v4198
    %v4215 = vmax.f32 %v4199, %v4201
    %v4216 = vmax.f32 %v4200, %v4202
    %v4217 = vmax.f32 %v4203, %v4205
    %v4218 = vmax.f32 %v4204, %v4206
    %v4219 = vmax.f32 %v4207, %v4209
    %v4220 = vmax.f32 %v4208, %v4210
    %v4221 = vmax.f32 %v4211, %v4213
    %v4222 = vmax.f32 %v4212, %v4214
    %v4223 = vpack.c.bf16 %v4216, %v4215
    %v4224 = vpack.c.bf16 %v4218, %v4217
    %v4225 = vpack.c.bf16 %v4220, %v4219
    %v4226 = vpack.c.bf16 %v4222, %v4221
    %v4227 = vld [vmem:[%s5] sm:$0xf]
    %v4228 = vld [vmem:[%s5 + $0x4] sm:$0xf]
    %v4229 = vld [vmem:[%s5 + $0x8] sm:$0xf]
    %v4230 = vld [vmem:[%s5 + $0xc] sm:$0xf]
    %v4231 = vld [vmem:[%s5 + $0x10] sm:$0xf]
    %v4232 = vld [vmem:[%s5 + $0x14] sm:$0xf]
    %v4233 = vld [vmem:[%s5 + $0x18] sm:$0xf]
    %v4234 = vld [vmem:[%s5 + $0x1c] sm:$0xf]
    %v4235 = vld [vmem:[%s5 + $0x20] sm:$0xf]
    %v4236 = vld [vmem:[%s5 + $0x24] sm:$0xf]
    %v4237 = vld [vmem:[%s5 + $0x28] sm:$0xf]
    %v4238 = vld [vmem:[%s5 + $0x2c] sm:$0xf]
    %v4239 = vld [vmem:[%s5 + $0x30] sm:$0xf]
    %v4240 = vld [vmem:[%s5 + $0x34] sm:$0xf]
    %v4241 = vld [vmem:[%s5 + $0x38] sm:$0xf]
    %v4242 = vld [vmem:[%s5 + $0x3c] sm:$0xf]
    %v4243 = vld [vmem:[%s5 + $0x40] sm:$0xf]
    %v4244 = vld [vmem:[%s5 + $0x44] sm:$0xf]
    %v4245 = vld [vmem:[%s5 + $0x48] sm:$0xf]
    %v4246 = vld [vmem:[%s5 + $0x4c] sm:$0xf]
    %v4247 = vld [vmem:[%s5 + $0x50] sm:$0xf]
    %v4248 = vld [vmem:[%s5 + $0x54] sm:$0xf]
    %v4249 = vld [vmem:[%s5 + $0x58] sm:$0xf]
    %v4250 = vld [vmem:[%s5 + $0x5c] sm:$0xf]
    %v4251 = vld [vmem:[%s5 + $0x60] sm:$0xf]
    %v4252 = vld [vmem:[%s5 + $0x64] sm:$0xf]
    %v4253 = vld [vmem:[%s5 + $0x68] sm:$0xf]
    %v4254 = vld [vmem:[%s5 + $0x6c] sm:$0xf]
    %v4255 = vld [vmem:[%s5 + $0x70] sm:$0xf]
    %v4256 = vld [vmem:[%s5 + $0x74] sm:$0xf]
    %v4257 = vld [vmem:[%s5 + $0x78] sm:$0xf]
    %v4258 = vld [vmem:[%s5 + $0x7c] sm:$0xf]
    %v4259 = vld [vmem:[%s5 + $0x80] sm:$0xf]
    %v4260 = vld [vmem:[%s5 + $0x84] sm:$0xf]
    %v4261 = vld [vmem:[%s5 + $0x88] sm:$0xf]
    %v4262 = vld [vmem:[%s5 + $0x8c] sm:$0xf]
    %v4263 = vld [vmem:[%s5 + $0x90] sm:$0xf]
    %v4264 = vld [vmem:[%s5 + $0x94] sm:$0xf]
    %v4265 = vld [vmem:[%s5 + $0x98] sm:$0xf]
    %v4266 = vld [vmem:[%s5 + $0x9c] sm:$0xf]
    %v4267 = vld [vmem:[%s5 + $0xa0] sm:$0xf]
    %v4268 = vld [vmem:[%s5 + $0xa4] sm:$0xf]
    %v4269 = vld [vmem:[%s5 + $0xa8] sm:$0xf]
    %v4270 = vld [vmem:[%s5 + $0xac] sm:$0xf]
    %v4271 = vld [vmem:[%s5 + $0xb0] sm:$0xf]
    %v4272 = vld [vmem:[%s5 + $0xb4] sm:$0xf]
    %v4273 = vld [vmem:[%s5 + $0xb8] sm:$0xf]
    %v4274 = vld [vmem:[%s5 + $0xbc] sm:$0xf]
    %v4275 = vld [vmem:[%s5 + $0xc0] sm:$0xf]
    %v4276 = vld [vmem:[%s5 + $0xc4] sm:$0xf]
    %v4277 = vld [vmem:[%s5 + $0xc8] sm:$0xf]
    %v4278 = vld [vmem:[%s5 + $0xcc] sm:$0xf]
    %v4279 = vld [vmem:[%s5 + $0xd0] sm:$0xf]
    %v4280 = vld [vmem:[%s5 + $0xd4] sm:$0xf]
    %v4281 = vld [vmem:[%s5 + $0xd8] sm:$0xf]
    %v4282 = vld [vmem:[%s5 + $0xdc] sm:$0xf]
    %v4283 = vld [vmem:[%s5 + $0xe0] sm:$0xf]
    %v4284 = vld [vmem:[%s5 + $0xe4] sm:$0xf]
    %v4285 = vld [vmem:[%s5 + $0xe8] sm:$0xf]
    %v4286 = vld [vmem:[%s5 + $0xec] sm:$0xf]
    %v4287 = vld [vmem:[%s5 + $0xf0] sm:$0xf]
    %v4288 = vld [vmem:[%s5 + $0xf4] sm:$0xf]
    %v4289 = vld [vmem:[%s5 + $0xf8] sm:$0xf]
    %v4290 = vld [vmem:[%s5 + $0xfc] sm:$0xf]
    %v4355 = vunpack.c.l.b16 %v4227
    %v4356 = vunpack.c.l.b16 %v4228
    %v4357 = vunpack.c.l.b16 %v4229
    %v4358 = vunpack.c.l.b16 %v4230
    %v4359 = vunpack.c.l.b16 %v4231
    %v4360 = vunpack.c.l.b16 %v4232
    %v4361 = vunpack.c.l.b16 %v4233
    %v4362 = vunpack.c.l.b16 %v4234
    %v4363 = vunpack.c.l.b16 %v4235
    %v4364 = vunpack.c.l.b16 %v4236
    %v4365 = vunpack.c.l.b16 %v4237
    %v4366 = vunpack.c.l.b16 %v4238
    %v4367 = vunpack.c.l.b16 %v4239
    %v4368 = vunpack.c.l.b16 %v4240
    %v4369 = vunpack.c.l.b16 %v4241
    %v4370 = vunpack.c.l.b16 %v4242
    %v4371 = vunpack.c.l.b16 %v4243
    %v4372 = vunpack.c.l.b16 %v4244
    %v4373 = vunpack.c.l.b16 %v4245
    %v4374 = vunpack.c.l.b16 %v4246
    %v4375 = vunpack.c.l.b16 %v4247
    %v4376 = vunpack.c.l.b16 %v4248
    %v4377 = vunpack.c.l.b16 %v4249
    %v4378 = vunpack.c.l.b16 %v4250
    %v4379 = vunpack.c.l.b16 %v4251
    %v4380 = vunpack.c.l.b16 %v4252
    %v4381 = vunpack.c.l.b16 %v4253
    %v4382 = vunpack.c.l.b16 %v4254
    %v4383 = vunpack.c.l.b16 %v4255
    %v4384 = vunpack.c.l.b16 %v4256
    %v4385 = vunpack.c.l.b16 %v4257
    %v4386 = vunpack.c.l.b16 %v4258
    %v4387 = vunpack.c.l.b16 %v4259
    %v4388 = vunpack.c.l.b16 %v4260
    %v4389 = vunpack.c.l.b16 %v4261
    %v4390 = vunpack.c.l.b16 %v4262
    %v4391 = vunpack.c.l.b16 %v4263
    %v4392 = vunpack.c.l.b16 %v4264
    %v4393 = vunpack.c.l.b16 %v4265
    %v4394 = vunpack.c.l.b16 %v4266
    %v4395 = vunpack.c.l.b16 %v4267
    %v4396 = vunpack.c.l.b16 %v4268
    %v4397 = vunpack.c.l.b16 %v4269
    %v4398 = vunpack.c.l.b16 %v4270
    %v4399 = vunpack.c.l.b16 %v4271
    %v4400 = vunpack.c.l.b16 %v4272
    %v4401 = vunpack.c.l.b16 %v4273
    %v4402 = vunpack.c.l.b16 %v4274
    %v4403 = vunpack.c.l.b16 %v4275
    %v4404 = vunpack.c.l.b16 %v4276
    %v4405 = vunpack.c.l.b16 %v4277
    %v4406 = vunpack.c.l.b16 %v4278
    %v4407 = vunpack.c.l.b16 %v4279
    %v4408 = vunpack.c.l.b16 %v4280
    %v4409 = vunpack.c.l.b16 %v4281
    %v4410 = vunpack.c.l.b16 %v4282
    %v4411 = vunpack.c.l.b16 %v4283
    %v4412 = vunpack.c.l.b16 %v4284
    %v4413 = vunpack.c.l.b16 %v4285
    %v4414 = vunpack.c.l.b16 %v4286
    %v4415 = vunpack.c.l.b16 %v4287
    %v4416 = vunpack.c.l.b16 %v4288
    %v4417 = vunpack.c.l.b16 %v4289
    %v4418 = vunpack.c.l.b16 %v4290
    %v4419 = vpack.c.b16 %v4356, %v4355
    %v4420 = vpack.c.b16 %v4358, %v4357
    %v4421 = vpack.c.b16 %v4360, %v4359
    %v4422 = vpack.c.b16 %v4362, %v4361
    %v4423 = vpack.c.b16 %v4364, %v4363
    %v4424 = vpack.c.b16 %v4366, %v4365
    %v4425 = vpack.c.b16 %v4368, %v4367
    %v4426 = vpack.c.b16 %v4370, %v4369
    %v4427 = vpack.c.b16 %v4372, %v4371
    %v4428 = vpack.c.b16 %v4374, %v4373
    %v4429 = vpack.c.b16 %v4376, %v4375
    %v4430 = vpack.c.b16 %v4378, %v4377
    %v4431 = vpack.c.b16 %v4380, %v4379
    %v4432 = vpack.c.b16 %v4382, %v4381
    %v4433 = vpack.c.b16 %v4384, %v4383
    %v4434 = vpack.c.b16 %v4386, %v4385
    %v4435 = vpack.c.b16 %v4388, %v4387
    %v4436 = vpack.c.b16 %v4390, %v4389
    %v4437 = vpack.c.b16 %v4392, %v4391
    %v4438 = vpack.c.b16 %v4394, %v4393
    %v4439 = vpack.c.b16 %v4396, %v4395
    %v4440 = vpack.c.b16 %v4398, %v4397
    %v4441 = vpack.c.b16 %v4400, %v4399
    %v4442 = vpack.c.b16 %v4402, %v4401
    %v4443 = vpack.c.b16 %v4404, %v4403
    %v4444 = vpack.c.b16 %v4406, %v4405
    %v4445 = vpack.c.b16 %v4408, %v4407
    %v4446 = vpack.c.b16 %v4410, %v4409
    %v4447 = vpack.c.b16 %v4412, %v4411
    %v4448 = vpack.c.b16 %v4414, %v4413
    %v4449 = vpack.c.b16 %v4416, %v4415
    %v4450 = vpack.c.b16 %v4418, %v4417
    %4483 = vmatprep.subr.bf16.mxu0 0
    %4484 = vmatpush1.bf16.msra.mxu0 %v4419
    %4485 = vmatprep.subr.bf16.mxu0 0
    %4486 = vmatpush1.bf16.msra.mxu0 %v4420
    %4487 = vmatprep.subr.bf16.mxu0 0
    %4488 = vmatpush1.bf16.msra.mxu0 %v4421
    %4489 = vmatprep.subr.bf16.mxu0 0
    %4490 = vmatpush1.bf16.msra.mxu0 %v4422
    %4491 = vmatprep.subr.bf16.mxu0 0
    %4492 = vmatpush1.bf16.msra.mxu0 %v4423
    %4493 = vmatprep.subr.bf16.mxu0 0
    %4494 = vmatpush1.bf16.msra.mxu0 %v4424
    %4495 = vmatprep.subr.bf16.mxu0 0
    %4496 = vmatpush1.bf16.msra.mxu0 %v4425
    %4497 = vmatprep.subr.bf16.mxu0 0
    %4498 = vmatpush1.bf16.msra.mxu0 %v4426
    %4499 = vmatprep.subr.bf16.mxu0 0
    %4500 = vmatpush1.bf16.msra.mxu0 %v4427
    %4501 = vmatprep.subr.bf16.mxu0 0
    %4502 = vmatpush1.bf16.msra.mxu0 %v4428
    %4503 = vmatprep.subr.bf16.mxu0 0
    %4504 = vmatpush1.bf16.msra.mxu0 %v4429
    %4505 = vmatprep.subr.bf16.mxu0 0
    %4506 = vmatpush1.bf16.msra.mxu0 %v4430
    %4507 = vmatprep.subr.bf16.mxu0 0
    %4508 = vmatpush1.bf16.msra.mxu0 %v4431
    %4509 = vmatprep.subr.bf16.mxu0 0
    %4510 = vmatpush1.bf16.msra.mxu0 %v4432
    %4511 = vmatprep.subr.bf16.mxu0 0
    %4512 = vmatpush1.bf16.msra.mxu0 %v4433
    %4513 = vmatprep.subr.bf16.mxu0 0
    %4514 = vmatpush1.bf16.msra.mxu0 %v4434
    %4515 = vmatprep.mubr.bf16.mxu0 %v4224
    %4516 = vmatmul.mubr.bf16.gmra.mrb[0].mxu0 %v4223
    %v4517 = vpop.f32.mrb[0].mxu0
    %v4518 = vadd.f32 0.0, %v4517
    %v4519 = vpop.f32.mrb[0].mxu0
    %v4520 = vpop.f32.mrb[0].mxu0
    %v4521 = vadd.f32 0.0, %v4520
    %v4522 = vpop.f32.mrb[0].mxu0
    %4523 = vdwg.mxu0
    %4524 = vmatprep.subr.bf16.mxu0 0
    %4525 = vmatpush1.bf16.msra.mxu0 %v4435
    %4526 = vmatprep.subr.bf16.mxu0 0
    %4527 = vmatpush1.bf16.msra.mxu0 %v4436
    %4528 = vmatprep.subr.bf16.mxu0 0
    %4529 = vmatpush1.bf16.msra.mxu0 %v4437
    %4530 = vmatprep.subr.bf16.mxu0 0
    %4531 = vmatpush1.bf16.msra.mxu0 %v4438
    %4532 = vmatprep.subr.bf16.mxu0 0
    %4533 = vmatpush1.bf16.msra.mxu0 %v4439
    %4534 = vmatprep.subr.bf16.mxu0 0
    %4535 = vmatpush1.bf16.msra.mxu0 %v4440
    %4536 = vmatprep.subr.bf16.mxu0 0
    %4537 = vmatpush1.bf16.msra.mxu0 %v4441
    %4538 = vmatprep.subr.bf16.mxu0 0
    %4539 = vmatpush1.bf16.msra.mxu0 %v4442
    %4540 = vmatprep.subr.bf16.mxu0 0
    %4541 = vmatpush1.bf16.msra.mxu0 %v4443
    %4542 = vmatprep.subr.bf16.mxu0 0
    %4543 = vmatpush1.bf16.msra.mxu0 %v4444
    %4544 = vmatprep.subr.bf16.mxu0 0
    %4545 = vmatpush1.bf16.msra.mxu0 %v4445
    %4546 = vmatprep.subr.bf16.mxu0 0
    %4547 = vmatpush1.bf16.msra.mxu0 %v4446
    %4548 = vmatprep.subr.bf16.mxu0 0
    %4549 = vmatpush1.bf16.msra.mxu0 %v4447
    %4550 = vmatprep.subr.bf16.mxu0 0
    %4551 = vmatpush1.bf16.msra.mxu0 %v4448
    %4552 = vmatprep.subr.bf16.mxu0 0
    %4553 = vmatpush1.bf16.msra.mxu0 %v4449
    %4554 = vmatprep.subr.bf16.mxu0 0
    %4555 = vmatpush1.bf16.msra.mxu0 %v4450
    %4556 = vmatprep.mubr.bf16.mxu0 %v4226
    %4557 = vmatmul.mubr.bf16.gmra.mrb[0].mxu0 %v4225
    %v4558 = vpop.f32.mrb[0].mxu0
    %v4559 = vadd.f32 %v4518, %v4558
    %v4560 = vpop.f32.mrb[0].mxu0
    %v4561 = vpop.f32.mrb[0].mxu0
    %v4562 = vadd.f32 %v4521, %v4561
    %v4563 = vpop.f32.mrb[0].mxu0
    %4564 = vdwg.mxu0
    %4566 = vrot.lane.b32.xlu0 %v4562, 78
    %v4567 = vpop.permute.xlu0 %4566
    %v4569 = vadd.f32 %v4559, %v4567
    %v4570 = vld [vmem:[%s6] sm:$0x1]
    %v4572 = vlaneseq
    %v4573 = vshrl.u32 %v4572, 7
    %v4574 = vsub.s32 0, %v4573
    %v4575 = vrot.slane %v4570, %v4574
    %v4577 = vadd.f32 %v4569, %v4575
    %v4578 = vsub.f32 0.0, %v4577
    %v4579 = vmul.f32 %v4578, 1.442695
    %v4580 = vpow.pop %v4579
    %v4581 = vadd.f32 %v4580, 1.0
    %v4582 = vrcp.pop %v4581
    %v4583 = vmul.f32 1.0, %v4582
    %v4584 = vld [vmem:[%s7] sm:$0xff]
    %v4585 = vld [vmem:[%s7 + $0x8] sm:$0xff]
    %v4586 = vld [vmem:[%s7 + $0x10] sm:$0xff]
    %v4587 = vld [vmem:[%s7 + $0x18] sm:$0xff]
    %v4588 = vld [vmem:[%s7 + $0x20] sm:$0xff]
    %v4589 = vld [vmem:[%s7 + $0x28] sm:$0xff]
    %v4590 = vld [vmem:[%s7 + $0x30] sm:$0x3]
    %v4591 = vld [vmem:[%s8] sm:$0x1]
    %v4593 = vlaneseq
    %v4594 = vshrl.u32 %v4593, 7
    %v4595 = vsub.s32 0, %v4594
    %v4596 = vrot.slane %v4591, %v4595
    %vm4598 = vcmask 408576
    %v4600 = vsel %vm4598, %v4583, 0
    %vm4602 = vcmask 1041408
    %v4604 = vsel %vm4602, %v4590, 0
    %4606 = vmatprep.subr.mxu0 0.0
    %4607 = vmatpush1.msra.mxu0 %v4584
    %4608 = vmatprep.subr.mxu0 0.0
    %4609 = vmatpush1.msra.mxu0 %v4585
    %4610 = vmatprep.subr.mxu0 0.0
    %4611 = vmatpush1.msra.mxu0 %v4586
    %4612 = vmatprep.subr.mxu0 0.0
    %4613 = vmatpush1.msra.mxu0 %v4587
    %4614 = vmatprep.subr.mxu0 0.0
    %4615 = vmatpush1.msra.mxu0 %v4588
    %4616 = vmatprep.subr.mxu0 0.0
    %4617 = vmatpush1.msra.mxu0 %v4589
    %4618 = vmatprep.subr.mxu0 0.0
    %4619 = vmatpush1.msra.mxu0 %v4604
    %4620 = vmatprep.subr.mxu0 0.0
    %4621 = vmatpush1.msra.mxu0 0.0
    %4622 = vmatprep.subr.mxu0 0.0
    %4623 = vmatpush1.msra.mxu0 0.0
    %4624 = vmatprep.subr.mxu0 0.0
    %4625 = vmatpush1.msra.mxu0 0.0
    %4626 = vmatprep.subr.mxu0 0.0
    %4627 = vmatpush1.msra.mxu0 0.0
    %4628 = vmatprep.subr.mxu0 0.0
    %4629 = vmatpush1.msra.mxu0 0.0
    %4630 = vmatprep.subr.mxu0 0.0
    %4631 = vmatpush1.msra.mxu0 0.0
    %4632 = vmatprep.subr.mxu0 0.0
    %4633 = vmatpush1.msra.mxu0 0.0
    %4634 = vmatprep.subr.mxu0 0.0
    %4635 = vmatpush1.msra.mxu0 0.0
    %4636 = vmatprep.subr.mxu0 0.0
    %4637 = vmatpush1.msra.mxu0 0.0
    %4638 = vmatprep.subr.mxu0 0.0
    %4639 = vmatpush1.msra.mxu0 0.0
    %4640 = vmatprep.subr.mxu0 0.0
    %4641 = vmatpush1.msra.mxu0 0.0
    %4642 = vmatprep.subr.mxu0 0.0
    %4643 = vmatpush1.msra.mxu0 0.0
    %4644 = vmatprep.subr.mxu0 0.0
    %4645 = vmatpush1.msra.mxu0 0.0
    %4646 = vmatprep.subr.mxu0 0.0
    %4647 = vmatpush1.msra.mxu0 0.0
    %4648 = vmatprep.subr.mxu0 0.0
    %4649 = vmatpush1.msra.mxu0 0.0
    %4650 = vmatprep.subr.mxu0 0.0
    %4651 = vmatpush1.msra.mxu0 0.0
    %4652 = vmatprep.subr.mxu0 0.0
    %4653 = vmatpush1.msra.mxu0 0.0
    %4654 = vmatprep.subr.mxu0 0.0
    %4655 = vmatpush1.msra.mxu0 0.0
    %4656 = vmatprep.subr.mxu0 0.0
    %4657 = vmatpush1.msra.mxu0 0.0
    %4658 = vmatprep.subr.mxu0 0.0
    %4659 = vmatpush1.msra.mxu0 0.0
    %4660 = vmatprep.subr.mxu0 0.0
    %4661 = vmatpush1.msra.mxu0 0.0
    %4662 = vmatprep.subr.mxu0 0.0
    %4663 = vmatpush1.msra.mxu0 0.0
    %4664 = vmatprep.subr.mxu0 0.0
    %4665 = vmatpush1.msra.mxu0 0.0
    %4666 = vmatprep.subr.mxu0 0.0
    %4667 = vmatpush1.msra.mxu0 0.0
    %4668 = vmatprep.subr.mxu0 0.0
    %4669 = vmatpush1.msra.mxu0 0.0
    %4670 = vmatprep.mubr.f32.mxu0 0.0
    %4671 = vmatmul.mubr.f32.gmra.mrb[0].mxu0 %v4600
    %v4672 = vpop.f32.mrb[0].mxu0
    %v4673 = vadd.f32 %v4596, %v4672
    %v4674 = vpop.f32.mrb[0].mxu0
    %4675 = vdwg.mxu0
    %vm4676 = vcmask 15360
    %4677 = vst.msk [vmem:[%s9] sm:$0xff] %vm4676, %v4673
    // Predicated region
    $region42: #{convnet2_ws_forward.1} parent=1 // pred_check
      _
    $region43: #{convnet2_ws_forward.1} parent=1 // pred_check_branch
      %4679 = sbr.rel (0) target = $region45
    $region44: #{convnet2_ws_forward.1} parent=1 // pred_region
      _
    $region45: #{convnet2_ws_forward.1} parent=1 // pred_fallthru
      _
    // Predicated region
    $region46: #{convnet2_ws_forward.1} parent=1 // pred_check
      _
    $region47: #{convnet2_ws_forward.1} parent=1 // pred_check_branch
      %4681 = sbr.rel (0) target = $region49
    $region48: #{convnet2_ws_forward.1} parent=1 // pred_region
      _
    $region49: #{convnet2_ws_forward.1} parent=1 // pred_fallthru
      _
    %4682 = vsyncpa [#allocation4], 1

</llo_original>
